<compile_context>
chip_gen: v6e
topology: v6e:2x2x1
jax: 0.10.0
libtpu: 0.0.40
codegen_flags: <defaults>
</compile_context>

<pallas_src>
import functools

import numpy as np
import jax
import jax.numpy as jnp
from jax.experimental import pallas as pl
from jax.experimental.pallas import tpu as pltpu


# ----------------------------------------------------------------------------
# Pallas kernel
# ----------------------------------------------------------------------------
def _window_attn_kernel(x_ref, wqkv_ref, bqkv_ref, wp_ref, bp_ref, bias_ref,
                        out_ref, qkv_scr, head_scr,
                        *, num_heads, bw, n, d, approx_recip):
    """One grid step processes `bw` windows (m = bw*n token rows).

    x_ref    : (m, C)           bf16  window tokens, rows = (window, token)
    wqkv_ref : (C, 3C)          bf16  fused qkv weights, scale folded into q cols
    bqkv_ref : (1, 3C)          f32   fused qkv bias (scale folded into q part)
    wp_ref   : (C, C)           bf16  output projection (input-major)
    bp_ref   : (1, C)           f32
    bias_ref : (H, bw|1, N, N)  f32   rel-pos bias (+ shift mask if any)
    out_ref  : (m, C)           out dtype
    qkv_scr  : (m, 3C)          f32   VMEM scratch
    head_scr : (m, C)           f32   VMEM scratch (head-major lanes)
    """
    c = num_heads * d
    m = bw * n

    # One lane-dense fused QKV projection on the MXU, f32 accumulation.
    qkv_scr[...] = (
        jnp.dot(x_ref[...], wqkv_ref[...], preferred_element_type=jnp.float32)
        + bqkv_ref[...])

    for h in range(num_heads):                       # small static unroll (H)
        lo = h * d
        # Per-head q/k/v: static lane slices of the VMEM scratch (no re-matmul).
        q_h = qkv_scr[:, lo:lo + d].reshape(bw, n, d).astype(jnp.bfloat16)
        k_h = qkv_scr[:, c + lo:c + lo + d].reshape(bw, n, d).astype(jnp.bfloat16)
        v_h = qkv_scr[:, 2 * c + lo:2 * c + lo + d].reshape(bw, n, d).astype(jnp.bfloat16)

        # Batched attention over the window axis.
        logits = jnp.einsum("bnd,bmd->bnm", q_h, k_h,
                            preferred_element_type=jnp.float32)      # (bw, n, n)
        logits = logits + bias_ref[h]                 # (bw|1, n, n) broadcasts

        lmax = jnp.max(logits, axis=-1, keepdims=True)
        e = jnp.exp(logits - lmax)
        s = jnp.sum(e, axis=-1, keepdims=True)
        if approx_recip:
            attn = e * pl.reciprocal(s, approx=True)  # EUP, off the VALU path
        else:
            attn = e / s

        o_h = jnp.einsum("bnm,bmd->bnd", attn.astype(jnp.bfloat16), v_h,
                         preferred_element_type=jnp.float32)          # (bw, n, d)
        # Drop this head's output straight into its lane slot of the slab.
        head_scr[:, lo:lo + d] = o_h.reshape(m, d)

    # Single K=C output projection + bias (instead of H accumulating K=d dots).
    out = (jnp.dot(head_scr[...].astype(jnp.bfloat16), wp_ref[...],
                   preferred_element_type=jnp.float32) + bp_ref[...])
    out_ref[...] = out.astype(out_ref.dtype)


# ----------------------------------------------------------------------------
# Host-side helpers (identical math to the PyTorch module)
# ----------------------------------------------------------------------------
@functools.lru_cache(maxsize=None)
def _relative_position_index(window_size):
    """Cached (N*N,) numpy index into the relative-position bias table."""
    wh, ww = window_size
    coords = np.stack(np.meshgrid(np.arange(wh), np.arange(ww), indexing="ij"))
    cf = coords.reshape(2, -1)                                        # (2, N)
    rel = (cf[:, :, None] - cf[:, None, :]).transpose(1, 2, 0).copy() # (N, N, 2)
    rel[:, :, 0] += wh - 1
    rel[:, :, 1] += ww - 1
    rel[:, :, 0] *= 2 * ww - 1
    return rel.sum(-1).reshape(-1)


def _relative_position_bias(table, window_size, num_heads):
    """(H, N, N) bias from the (2Wh-1)(2Ww-1) x H table, as in WindowAttention."""
    n = window_size[0] * window_size[1]
    idx = _relative_position_index(tuple(int(w) for w in window_size))
    bias = jnp.asarray(table)[idx].reshape(n, n, num_heads)
    return jnp.transpose(bias, (2, 0, 1)).astype(jnp.float32)         # (H, N, N)


def _swin_shift_mask(x_size, window_size, shift_size):
    """SwinAttnBlock.calculate_mask -> (nW, N, N) additive 0/-100 mask."""
    H, W = x_size
    img_mask = np.zeros((1, H, W, 1), np.float32)
    h_slices = (slice(0, -window_size), slice(-window_size, -shift_size),
                slice(-shift_size, None))
    w_slices = (slice(0, -window_size), slice(-window_size, -shift_size),
                slice(-shift_size, None))
    cnt = 0
    for hs in h_slices:
        for ws_ in w_slices:
            img_mask[:, hs, ws_, :] = cnt
            cnt += 1
    mw = img_mask.reshape(1, H // window_size, window_size,
                          W // window_size, window_size, 1)
    mw = mw.transpose(0, 1, 3, 2, 4, 5).reshape(-1, window_size * window_size)
    diff = mw[:, None, :] - mw[:, :, None]                            # (nW, N, N)
    attn_mask = np.where(diff != 0, -100.0, 0.0).astype(np.float32)
    return jnp.asarray(attn_mask)


def _pick_block_windows(b, n, c, h, nw_mask, vmem_budget_bytes):
    """Largest windows-per-step under a per-step VMEM estimate, preferring a
    grid that is even and >= 8 (keeps both v7x TensorCores busy with enough
    pipeline trip count) and, when a shift mask is present, bw | nW so the
    un-expanded mask can be indexed modularly."""
    lane = 128

    def step_bytes(w):                       # lane-padded, double-buffered est.
        m = w * n
        x_b = 2 * m * max(c, lane) * 2                 # bf16 x
        qkv_b = m * max(3 * c, lane) * 4               # f32 scratch
        hd_b = m * max(c, lane) * 4                    # f32 scratch
        out_b = 2 * m * max(c, lane) * 4               # f32 out
        bias_b = 2 * h * w * n * max(n, lane) * 4      # f32 bias(+mask) block
        return x_b + qkv_b + hd_b + out_b + bias_b

    def legal(w):
        return b % w == 0 and ((w * n) % 8 == 0 or w == b)

    cands = [w for w in range(1, b + 1)
             if legal(w) and step_bytes(w) <= vmem_budget_bytes]
    if not cands:
        cands = [w for w in range(1, b + 1) if legal(w)]
    if nw_mask is not None:
        pref = [w for w in cands if nw_mask % w == 0]
        cands = pref or cands

    def score(w):
        g = b // w
        return (g % 2 == 0 and g >= 8, g >= 2, w)

    return max(cands, key=score)


# ----------------------------------------------------------------------------
# Wrapper: WindowAttention.forward
# ----------------------------------------------------------------------------
def window_attention(x, params, window_size, num_heads, mask=None, *,
                     vmem_budget_bytes=8 << 20, out_dtype=None,
                     approx_softmax_recip=True):
    """Pallas implementation of WindowAttention.forward.

    x    : (B_, N, C), B_ = num_windows * batch with windows ordered
           window-fastest within each batch element (standard window_partition
           output — required for the modular shift-mask indexing), N = Wh*Ww.
    mask : None or (nW, N, N) additive (0 / -100) mask, B_ % nW == 0.
    Returns (B_, N, C) (attention probabilities are not returned, matching the
    PyTorch module).
    """
    b, n, c = x.shape
    h = num_heads
    assert c % h == 0
    d = c // h
    scale = float(d) ** -0.5
    assert n == window_size[0] * window_size[1]
    out_dtype = x.dtype if out_dtype is None else out_dtype

    nw = None if mask is None else int(mask.shape[0])
    if nw is not None:
        assert b % nw == 0, "B_ must be a multiple of num_windows"

    bw = _pick_block_windows(b, n, c, h, nw, vmem_budget_bytes)
    grid = b // bw
    m = bw * n

    # --- fused QKV weights (C, 3C); softmax scale folded into the q columns ---
    wqkv_t = jnp.transpose(params["qkv_weight"]).astype(jnp.float32)   # (C, 3C)
    col_scale = jnp.concatenate(
        [jnp.full((c,), scale, jnp.float32), jnp.ones((2 * c,), jnp.float32)])
    wqkv_t = (wqkv_t * col_scale[None, :]).astype(jnp.bfloat16)
    bqkv = (params["qkv_bias"].astype(jnp.float32) * col_scale
            ).reshape(1, 3 * c).astype(jnp.float32)

    wp_t = jnp.transpose(params["proj_weight"]).astype(jnp.bfloat16)   # (C, C)
    bp = params["proj_bias"].reshape(1, c).astype(jnp.float32)

    # --- relative-position bias (+ shift mask) combined once in the wrapper ---
    rel_bias = _relative_position_bias(params["rel_bias_table"], window_size, h)
    if mask is None:
        bias_all = rel_bias[:, None]                                   # (H,1,N,N)
        bias_spec = pl.BlockSpec((h, 1, n, n), lambda i: (0, 0, 0, 0))
    else:
        bias_all = rel_bias[:, None] + mask[None].astype(jnp.float32)  # (H,nW,N,N)
        if nw % bw == 0:
            nwb = nw // bw
            bias_spec = pl.BlockSpec((h, bw, n, n),
                                     lambda i, _nwb=nwb: (0, i % _nwb, 0, 0))
        else:
            # fallback: tile the combined bias over the batch dimension
            bias_all = jnp.tile(bias_all, (1, b // nw, 1, 1))          # (H,B_,N,N)
            bias_spec = pl.BlockSpec((h, bw, n, n), lambda i: (0, i, 0, 0))

    # --- activations: flatten windows onto rows, bf16 for the MXU -------------
    x_flat = x.reshape(b * n, c).astype(jnp.bfloat16)

    in_specs = [
        pl.BlockSpec((m, c), lambda i: (i, 0)),          # x row slab
        pl.BlockSpec((c, 3 * c), lambda i: (0, 0)),      # fused Wqkv
        pl.BlockSpec((1, 3 * c), lambda i: (0, 0)),      # fused bqkv
        pl.BlockSpec((c, c), lambda i: (0, 0)),          # Wproj
        pl.BlockSpec((1, c), lambda i: (0, 0)),          # bproj
        bias_spec,                                       # rel-pos bias (+mask)
    ]
    args = [x_flat, wqkv_t, bqkv, wp_t, bp, bias_all]

    kernel = functools.partial(_window_attn_kernel, num_heads=h, bw=bw, n=n, d=d,
                               approx_recip=approx_softmax_recip)

    out = pl.pallas_call(
        kernel,
        out_shape=jax.ShapeDtypeStruct((b * n, c), out_dtype),
        grid_spec=pltpu.PrefetchScalarGridSpec(
            num_scalar_prefetch=0,
            grid=(grid,),
            in_specs=in_specs,
            out_specs=pl.BlockSpec((m, c), lambda i: (i, 0)),
            scratch_shapes=[pltpu.VMEM((m, 3 * c), jnp.float32),
                            pltpu.VMEM((m, c), jnp.float32)],
        ),
        compiler_params=pltpu.CompilerParams(
            dimension_semantics=("parallel",),
            vmem_limit_bytes=32 * 1024 * 1024),
    )(*args)
    return out.reshape(b, n, c)          # proj_drop(p=0.0) is identity


# ----------------------------------------------------------------------------
# Pure-JAX f32 reference (mirrors WindowAttention.forward) for correctness
# ----------------------------------------------------------------------------
def _reference(x, params, window_size, num_heads, mask=None):
    b, n, c = x.shape
    h = num_heads
    d = c // h
    scale = float(d) ** -0.5

    qkv = x @ params["qkv_weight"].T + params["qkv_bias"]
    qkv = qkv.reshape(b, n, 3, h, d).transpose(2, 0, 3, 1, 4)
    q, k, v = qkv[0] * scale, qkv[1], qkv[2]
    attn = jnp.einsum("bhnd,bhmd->bhnm", q, k)

    bias = _relative_position_bias(params["rel_bias_table"], window_size, h)
    attn = attn + bias[None]
    if mask is not None:
        nw = mask.shape[0]
        attn = attn.reshape(b // nw, nw, h, n, n) + mask[None, :, None]
        attn = attn.reshape(b, h, n, n)
    attn = jax.nn.softmax(attn, axis=-1)
    o = jnp.einsum("bhnm,bhmd->bhnd", attn, v).transpose(0, 2, 1, 3).reshape(b, n, c)
    return o @ params["proj_weight"].T + params["proj_bias"]


if __name__ == "__main__":
    # Small shapes consistent with the module: 16x16 feature map, 4x4 windows.
    window_size = (4, 4)                 # Wh, Ww -> N = 16 tokens per window
    num_heads = 4
    dim = 32                             # C ; head_dim = 8
    H_img = W_img = 16
    batch = 4
    nW = (H_img // window_size[0]) * (W_img // window_size[1])   # 16
    b = batch * nW                                               # 64 windows
    n = window_size[0] * window_size[1]

    key = jax.random.PRNGKey(0)
    ks = jax.random.split(key, 8)

    params = {
        "rel_bias_table": 0.02 * jax.random.truncated_normal(
            ks[0], -2.0, 2.0,
            ((2 * window_size[0] - 1) * (2 * window_size[1] - 1), num_heads),
            dtype=jnp.float32),
        "qkv_weight": 0.1 * jax.random.normal(ks[1], (3 * dim, dim), jnp.float32),
        "qkv_bias": 0.1 * jax.random.normal(ks[2], (3 * dim,), jnp.float32),
        "proj_weight": 0.1 * jax.random.normal(ks[3], (dim, dim), jnp.float32),
        "proj_bias": 0.1 * jax.random.normal(ks[4], (dim,), jnp.float32),
    }
    x = jax.random.normal(ks[5], (b, n, dim), jnp.float32)

    # shifted-window mask as used by SwinAttnBlock with shift_size = ws // 2
    mask = _swin_shift_mask((H_img, W_img), window_size[0], window_size[0] // 2)

    out_plain = window_attention(x, params, window_size, num_heads, mask=None)
    out_shift = window_attention(x, params, window_size, num_heads, mask=mask)
    jax.block_until_ready((out_plain, out_shift))

    ref_plain = _reference(x, params, window_size, num_heads, None)
    ref_shift = _reference(x, params, window_size, num_heads, mask)

    # bf16 MXU inputs -> compare against the f32 reference at loosened tolerance
    assert out_plain.shape == (b, n, dim)
    assert jnp.allclose(out_plain, ref_plain, atol=2e-2, rtol=2e-2), "mismatch (no mask)"
    assert jnp.allclose(out_shift, ref_shift, atol=2e-2, rtol=2e-2), "mismatch (mask)"

    print("KERNEL_OK")
</pallas_src>

<mosaic_0001>
module attributes {stable_mosaic.version = 11 : i64} {
  func.func @_window_attn_kernel(%arg0: i32, %arg1: memref<128x32xbf16, #tpu.memory_space<vmem>>, %arg2: memref<32x96xbf16, #tpu.memory_space<vmem>>, %arg3: memref<1x96xf32, #tpu.memory_space<vmem>>, %arg4: memref<32x32xbf16, #tpu.memory_space<vmem>>, %arg5: memref<1x32xf32, #tpu.memory_space<vmem>>, %arg6: memref<4x1x16x16xf32, #tpu.memory_space<vmem>>, %arg7: memref<128x32xf32, #tpu.memory_space<vmem>>, %arg8: memref<128x96xf32, #tpu.memory_space<vmem>>, %arg9: memref<128x32xf32, #tpu.memory_space<vmem>>) attributes {dimension_semantics = [#tpu.dimension_semantics<parallel>], iteration_bounds = array<i64: 8>, scalar_prefetch = 0 : i64, scratch_operands = 2 : i64, tpu.core_type = #tpu.core_type<tc>, window_params = [{transform_indices = @transform_0, window_bounds = array<i64: 128, 32>}, {pipeline_mode = #tpu.pipeline_mode<synchronous>, transform_indices = @transform_1, window_bounds = array<i64: 32, 96>}, {pipeline_mode = #tpu.pipeline_mode<synchronous>, transform_indices = @transform_2, window_bounds = array<i64: 1, 96>}, {pipeline_mode = #tpu.pipeline_mode<synchronous>, transform_indices = @transform_3, window_bounds = array<i64: 32, 32>}, {pipeline_mode = #tpu.pipeline_mode<synchronous>, transform_indices = @transform_4, window_bounds = array<i64: 1, 32>}, {pipeline_mode = #tpu.pipeline_mode<synchronous>, transform_indices = @transform_5, window_bounds = array<i64: 4, 1, 16, 16>}, {transform_indices = @transform_6, window_bounds = array<i64: 128, 32>}]} {
    %c0 = arith.constant 0 : index
    %c0_0 = arith.constant 0 : index
    %0 = vector.load %arg1[%c0, %c0_0] : memref<128x32xbf16, #tpu.memory_space<vmem>>, vector<128x32xbf16>
    %c0_1 = arith.constant 0 : index
    %c0_2 = arith.constant 0 : index
    %1 = vector.load %arg2[%c0_1, %c0_2] : memref<32x96xbf16, #tpu.memory_space<vmem>>, vector<32x96xbf16>
    %cst = arith.constant dense<0.000000e+00> : vector<128x96xf32>
    %2 = tpu.matmul %0, %1, %cst {dimension_numbers = #tpu.dot_dimension_numbers<[1], [0], [0], [1], [0, 0, 1, 1], [], []>} : vector<128x32xbf16>, vector<32x96xbf16>, vector<128x96xf32> -> vector<128x96xf32>
    %c0_3 = arith.constant 0 : index
    %c0_4 = arith.constant 0 : index
    %3 = vector.load %arg3[%c0_3, %c0_4] : memref<1x96xf32, #tpu.memory_space<vmem>>, vector<1x96xf32>
    %4 = vector.broadcast %3 : vector<1x96xf32> to vector<128x96xf32>
    %5 = arith.addf %2, %4 : vector<128x96xf32>
    %c0_5 = arith.constant 0 : index
    %c0_6 = arith.constant 0 : index
    %6 = vector.load %arg8[%c0_5, %c0_6] : memref<128x96xf32, #tpu.memory_space<vmem>>, vector<128x96xf32>
    tpu.vector_store %arg8[%c0_5, %c0_6], %5 {strides = array<i32>} : memref<128x96xf32, #tpu.memory_space<vmem>>, vector<128x96xf32>,
    %c0_7 = arith.constant 0 : index
    %c0_8 = arith.constant 0 : index
    %7 = vector.load %arg8[%c0_7, %c0_8] : memref<128x96xf32, #tpu.memory_space<vmem>>, vector<128x8xf32>
    %8 = vector.shape_cast %7 : vector<128x8xf32> to vector<8x16x8xf32>
    %9 = arith.truncf %8 : vector<8x16x8xf32> to vector<8x16x8xbf16>
    %c0_9 = arith.constant 0 : index
    %c32 = arith.constant 32 : index
    %10 = vector.load %arg8[%c0_9, %c32] : memref<128x96xf32, #tpu.memory_space<vmem>>, vector<128x8xf32>
    %11 = vector.shape_cast %10 : vector<128x8xf32> to vector<8x16x8xf32>
    %12 = arith.truncf %11 : vector<8x16x8xf32> to vector<8x16x8xbf16>
    %c0_10 = arith.constant 0 : index
    %c64 = arith.constant 64 : index
    %13 = vector.load %arg8[%c0_10, %c64] : memref<128x96xf32, #tpu.memory_space<vmem>>, vector<128x8xf32>
    %14 = vector.shape_cast %13 : vector<128x8xf32> to vector<8x16x8xf32>
    %15 = arith.truncf %14 : vector<8x16x8xf32> to vector<8x16x8xbf16>
    "tpu.trace_start"() <{level = 10 : i32, message = "bnd,bmd->bnm"}> : () -> ()
    %cst_11 = arith.constant dense<0.000000e+00> : vector<8x16x16xf32>
    %16 = tpu.matmul %9, %12, %cst_11 {dimension_numbers = #tpu.dot_dimension_numbers<[2], [2], [1], [1], [0, 0, 0, 1, 1, 1], [0], [0]>} : vector<8x16x8xbf16>, vector<8x16x8xbf16>, vector<8x16x16xf32> -> vector<8x16x16xf32>
    "tpu.trace_stop"() : () -> ()
    %c0_12 = arith.constant 0 : index
    %c0_13 = arith.constant 0 : index
    %c0_14 = arith.constant 0 : index
    %c0_15 = arith.constant 0 : index
    %17 = vector.load %arg6[%c0_12, %c0_13, %c0_14, %c0_15] : memref<4x1x16x16xf32, #tpu.memory_space<vmem>>, vector<1x1x16x16xf32>
    %18 = vector.shape_cast %17 : vector<1x1x16x16xf32> to vector<1x16x16xf32>
    %19 = vector.broadcast %18 : vector<1x16x16xf32> to vector<8x16x16xf32>
    %20 = arith.addf %16, %19 : vector<8x16x16xf32>
    %cst_16 = arith.constant dense<0xFF800000> : vector<8x16xf32>
    %21 = vector.multi_reduction <maximumf>, %20, %cst_16 [2] : vector<8x16x16xf32> to vector<8x16xf32>
    %22 = vector.shape_cast %21 : vector<8x16xf32> to vector<8x16x1xf32>
    %23 = vector.broadcast %22 : vector<8x16x1xf32> to vector<8x16x16xf32>
    %24 = arith.subf %20, %23 : vector<8x16x16xf32>
    %25 = math.exp %24 : vector<8x16x16xf32>
    %cst_17 = arith.constant dense<0.000000e+00> : vector<8x16xf32>
    %26 = vector.multi_reduction <add>, %25, %cst_17 [2] : vector<8x16x16xf32> to vector<8x16xf32>
    %27 = vector.shape_cast %26 : vector<8x16xf32> to vector<8x16x1xf32>
    %28 = tpu.reciprocal %27 {approx = true} : vector<8x16x1xf32> -> vector<8x16x1xf32>
    %29 = vector.broadcast %28 : vector<8x16x1xf32> to vector<8x16x16xf32>
    %30 = arith.mulf %25, %29 : vector<8x16x16xf32>
    %31 = arith.truncf %30 : vector<8x16x16xf32> to vector<8x16x16xbf16>
    "tpu.trace_start"() <{level = 10 : i32, message = "bnm,bmd->bnd"}> : () -> ()
    %cst_18 = arith.constant dense<0.000000e+00> : vector<8x16x8xf32>
    %32 = tpu.matmul %31, %15, %cst_18 {dimension_numbers = #tpu.dot_dimension_numbers<[2], [1], [1], [2], [0, 0, 0, 1, 1, 2], [0], [0]>} : vector<8x16x16xbf16>, vector<8x16x8xbf16>, vector<8x16x8xf32> -> vector<8x16x8xf32>
    "tpu.trace_stop"() : () -> ()
    %33 = vector.shape_cast %32 : vector<8x16x8xf32> to vector<128x8xf32>
    %c0_19 = arith.constant 0 : index
    %c0_20 = arith.constant 0 : index
    %34 = vector.load %arg9[%c0_19, %c0_20] : memref<128x32xf32, #tpu.memory_space<vmem>>, vector<128x8xf32>
    tpu.vector_store %arg9[%c0_19, %c0_20], %33 {strides = array<i32>} : memref<128x32xf32, #tpu.memory_space<vmem>>, vector<128x8xf32>,
    %c0_21 = arith.constant 0 : index
    %c8 = arith.constant 8 : index
    %35 = vector.load %arg8[%c0_21, %c8] : memref<128x96xf32, #tpu.memory_space<vmem>>, vector<128x8xf32>
    %36 = vector.shape_cast %35 : vector<128x8xf32> to vector<8x16x8xf32>
    %37 = arith.truncf %36 : vector<8x16x8xf32> to vector<8x16x8xbf16>
    %c0_22 = arith.constant 0 : index
    %c40 = arith.constant 40 : index
    %38 = vector.load %arg8[%c0_22, %c40] : memref<128x96xf32, #tpu.memory_space<vmem>>, vector<128x8xf32>
    %39 = vector.shape_cast %38 : vector<128x8xf32> to vector<8x16x8xf32>
    %40 = arith.truncf %39 : vector<8x16x8xf32> to vector<8x16x8xbf16>
    %c0_23 = arith.constant 0 : index
    %c72 = arith.constant 72 : index
    %41 = vector.load %arg8[%c0_23, %c72] : memref<128x96xf32, #tpu.memory_space<vmem>>, vector<128x8xf32>
    %42 = vector.shape_cast %41 : vector<128x8xf32> to vector<8x16x8xf32>
    %43 = arith.truncf %42 : vector<8x16x8xf32> to vector<8x16x8xbf16>
    "tpu.trace_start"() <{level = 10 : i32, message = "bnd,bmd->bnm"}> : () -> ()
    %cst_24 = arith.constant dense<0.000000e+00> : vector<8x16x16xf32>
    %44 = tpu.matmul %37, %40, %cst_24 {dimension_numbers = #tpu.dot_dimension_numbers<[2], [2], [1], [1], [0, 0, 0, 1, 1, 1], [0], [0]>} : vector<8x16x8xbf16>, vector<8x16x8xbf16>, vector<8x16x16xf32> -> vector<8x16x16xf32>
    "tpu.trace_stop"() : () -> ()
    %c1 = arith.constant 1 : index
    %c0_25 = arith.constant 0 : index
    %c0_26 = arith.constant 0 : index
    %c0_27 = arith.constant 0 : index
    %45 = vector.load %arg6[%c1, %c0_25, %c0_26, %c0_27] : memref<4x1x16x16xf32, #tpu.memory_space<vmem>>, vector<1x1x16x16xf32>
    %46 = vector.shape_cast %45 : vector<1x1x16x16xf32> to vector<1x16x16xf32>
    %47 = vector.broadcast %46 : vector<1x16x16xf32> to vector<8x16x16xf32>
    %48 = arith.addf %44, %47 : vector<8x16x16xf32>
    %cst_28 = arith.constant dense<0xFF800000> : vector<8x16xf32>
    %49 = vector.multi_reduction <maximumf>, %48, %cst_28 [2] : vector<8x16x16xf32> to vector<8x16xf32>
    %50 = vector.shape_cast %49 : vector<8x16xf32> to vector<8x16x1xf32>
    %51 = vector.broadcast %50 : vector<8x16x1xf32> to vector<8x16x16xf32>
    %52 = arith.subf %48, %51 : vector<8x16x16xf32>
    %53 = math.exp %52 : vector<8x16x16xf32>
    %cst_29 = arith.constant dense<0.000000e+00> : vector<8x16xf32>
    %54 = vector.multi_reduction <add>, %53, %cst_29 [2] : vector<8x16x16xf32> to vector<8x16xf32>
    %55 = vector.shape_cast %54 : vector<8x16xf32> to vector<8x16x1xf32>
    %56 = tpu.reciprocal %55 {approx = true} : vector<8x16x1xf32> -> vector<8x16x1xf32>
    %57 = vector.broadcast %56 : vector<8x16x1xf32> to vector<8x16x16xf32>
    %58 = arith.mulf %53, %57 : vector<8x16x16xf32>
    %59 = arith.truncf %58 : vector<8x16x16xf32> to vector<8x16x16xbf16>
    "tpu.trace_start"() <{level = 10 : i32, message = "bnm,bmd->bnd"}> : () -> ()
    %cst_30 = arith.constant dense<0.000000e+00> : vector<8x16x8xf32>
    %60 = tpu.matmul %59, %43, %cst_30 {dimension_numbers = #tpu.dot_dimension_numbers<[2], [1], [1], [2], [0, 0, 0, 1, 1, 2], [0], [0]>} : vector<8x16x16xbf16>, vector<8x16x8xbf16>, vector<8x16x8xf32> -> vector<8x16x8xf32>
    "tpu.trace_stop"() : () -> ()
    %61 = vector.shape_cast %60 : vector<8x16x8xf32> to vector<128x8xf32>
    %c0_31 = arith.constant 0 : index
    %c8_32 = arith.constant 8 : index
    %62 = vector.load %arg9[%c0_31, %c8_32] : memref<128x32xf32, #tpu.memory_space<vmem>>, vector<128x8xf32>
    tpu.vector_store %arg9[%c0_31, %c8_32], %61 {strides = array<i32>} : memref<128x32xf32, #tpu.memory_space<vmem>>, vector<128x8xf32>,
    %c0_33 = arith.constant 0 : index
    %c16 = arith.constant 16 : index
    %63 = vector.load %arg8[%c0_33, %c16] : memref<128x96xf32, #tpu.memory_space<vmem>>, vector<128x8xf32>
    %64 = vector.shape_cast %63 : vector<128x8xf32> to vector<8x16x8xf32>
    %65 = arith.truncf %64 : vector<8x16x8xf32> to vector<8x16x8xbf16>
    %c0_34 = arith.constant 0 : index
    %c48 = arith.constant 48 : index
    %66 = vector.load %arg8[%c0_34, %c48] : memref<128x96xf32, #tpu.memory_space<vmem>>, vector<128x8xf32>
    %67 = vector.shape_cast %66 : vector<128x8xf32> to vector<8x16x8xf32>
    %68 = arith.truncf %67 : vector<8x16x8xf32> to vector<8x16x8xbf16>
    %c0_35 = arith.constant 0 : index
    %c80 = arith.constant 80 : index
    %69 = vector.load %arg8[%c0_35, %c80] : memref<128x96xf32, #tpu.memory_space<vmem>>, vector<128x8xf32>
    %70 = vector.shape_cast %69 : vector<128x8xf32> to vector<8x16x8xf32>
    %71 = arith.truncf %70 : vector<8x16x8xf32> to vector<8x16x8xbf16>
    "tpu.trace_start"() <{level = 10 : i32, message = "bnd,bmd->bnm"}> : () -> ()
    %cst_36 = arith.constant dense<0.000000e+00> : vector<8x16x16xf32>
    %72 = tpu.matmul %65, %68, %cst_36 {dimension_numbers = #tpu.dot_dimension_numbers<[2], [2], [1], [1], [0, 0, 0, 1, 1, 1], [0], [0]>} : vector<8x16x8xbf16>, vector<8x16x8xbf16>, vector<8x16x16xf32> -> vector<8x16x16xf32>
    "tpu.trace_stop"() : () -> ()
    %c2 = arith.constant 2 : index
    %c0_37 = arith.constant 0 : index
    %c0_38 = arith.constant 0 : index
    %c0_39 = arith.constant 0 : index
    %73 = vector.load %arg6[%c2, %c0_37, %c0_38, %c0_39] : memref<4x1x16x16xf32, #tpu.memory_space<vmem>>, vector<1x1x16x16xf32>
    %74 = vector.shape_cast %73 : vector<1x1x16x16xf32> to vector<1x16x16xf32>
    %75 = vector.broadcast %74 : vector<1x16x16xf32> to vector<8x16x16xf32>
    %76 = arith.addf %72, %75 : vector<8x16x16xf32>
    %cst_40 = arith.constant dense<0xFF800000> : vector<8x16xf32>
    %77 = vector.multi_reduction <maximumf>, %76, %cst_40 [2] : vector<8x16x16xf32> to vector<8x16xf32>
    %78 = vector.shape_cast %77 : vector<8x16xf32> to vector<8x16x1xf32>
    %79 = vector.broadcast %78 : vector<8x16x1xf32> to vector<8x16x16xf32>
    %80 = arith.subf %76, %79 : vector<8x16x16xf32>
    %81 = math.exp %80 : vector<8x16x16xf32>
    %cst_41 = arith.constant dense<0.000000e+00> : vector<8x16xf32>
    %82 = vector.multi_reduction <add>, %81, %cst_41 [2] : vector<8x16x16xf32> to vector<8x16xf32>
    %83 = vector.shape_cast %82 : vector<8x16xf32> to vector<8x16x1xf32>
    %84 = tpu.reciprocal %83 {approx = true} : vector<8x16x1xf32> -> vector<8x16x1xf32>
    %85 = vector.broadcast %84 : vector<8x16x1xf32> to vector<8x16x16xf32>
    %86 = arith.mulf %81, %85 : vector<8x16x16xf32>
    %87 = arith.truncf %86 : vector<8x16x16xf32> to vector<8x16x16xbf16>
    "tpu.trace_start"() <{level = 10 : i32, message = "bnm,bmd->bnd"}> : () -> ()
    %cst_42 = arith.constant dense<0.000000e+00> : vector<8x16x8xf32>
    %88 = tpu.matmul %87, %71, %cst_42 {dimension_numbers = #tpu.dot_dimension_numbers<[2], [1], [1], [2], [0, 0, 0, 1, 1, 2], [0], [0]>} : vector<8x16x16xbf16>, vector<8x16x8xbf16>, vector<8x16x8xf32> -> vector<8x16x8xf32>
    "tpu.trace_stop"() : () -> ()
    %89 = vector.shape_cast %88 : vector<8x16x8xf32> to vector<128x8xf32>
    %c0_43 = arith.constant 0 : index
    %c16_44 = arith.constant 16 : index
    %90 = vector.load %arg9[%c0_43, %c16_44] : memref<128x32xf32, #tpu.memory_space<vmem>>, vector<128x8xf32>
    tpu.vector_store %arg9[%c0_43, %c16_44], %89 {strides = array<i32>} : memref<128x32xf32, #tpu.memory_space<vmem>>, vector<128x8xf32>,
    %c0_45 = arith.constant 0 : index
    %c24 = arith.constant 24 : index
    %91 = vector.load %arg8[%c0_45, %c24] : memref<128x96xf32, #tpu.memory_space<vmem>>, vector<128x8xf32>
    %92 = vector.shape_cast %91 : vector<128x8xf32> to vector<8x16x8xf32>
    %93 = arith.truncf %92 : vector<8x16x8xf32> to vector<8x16x8xbf16>
    %c0_46 = arith.constant 0 : index
    %c56 = arith.constant 56 : index
    %94 = vector.load %arg8[%c0_46, %c56] : memref<128x96xf32, #tpu.memory_space<vmem>>, vector<128x8xf32>
    %95 = vector.shape_cast %94 : vector<128x8xf32> to vector<8x16x8xf32>
    %96 = arith.truncf %95 : vector<8x16x8xf32> to vector<8x16x8xbf16>
    %c0_47 = arith.constant 0 : index
    %c88 = arith.constant 88 : index
    %97 = vector.load %arg8[%c0_47, %c88] : memref<128x96xf32, #tpu.memory_space<vmem>>, vector<128x8xf32>
    %98 = vector.shape_cast %97 : vector<128x8xf32> to vector<8x16x8xf32>
    %99 = arith.truncf %98 : vector<8x16x8xf32> to vector<8x16x8xbf16>
    "tpu.trace_start"() <{level = 10 : i32, message = "bnd,bmd->bnm"}> : () -> ()
    %cst_48 = arith.constant dense<0.000000e+00> : vector<8x16x16xf32>
    %100 = tpu.matmul %93, %96, %cst_48 {dimension_numbers = #tpu.dot_dimension_numbers<[2], [2], [1], [1], [0, 0, 0, 1, 1, 1], [0], [0]>} : vector<8x16x8xbf16>, vector<8x16x8xbf16>, vector<8x16x16xf32> -> vector<8x16x16xf32>
    "tpu.trace_stop"() : () -> ()
    %c3 = arith.constant 3 : index
    %c0_49 = arith.constant 0 : index
    %c0_50 = arith.constant 0 : index
    %c0_51 = arith.constant 0 : index
    %101 = vector.load %arg6[%c3, %c0_49, %c0_50, %c0_51] : memref<4x1x16x16xf32, #tpu.memory_space<vmem>>, vector<1x1x16x16xf32>
    %102 = vector.shape_cast %101 : vector<1x1x16x16xf32> to vector<1x16x16xf32>
    %103 = vector.broadcast %102 : vector<1x16x16xf32> to vector<8x16x16xf32>
    %104 = arith.addf %100, %103 : vector<8x16x16xf32>
    %cst_52 = arith.constant dense<0xFF800000> : vector<8x16xf32>
    %105 = vector.multi_reduction <maximumf>, %104, %cst_52 [2] : vector<8x16x16xf32> to vector<8x16xf32>
    %106 = vector.shape_cast %105 : vector<8x16xf32> to vector<8x16x1xf32>
    %107 = vector.broadcast %106 : vector<8x16x1xf32> to vector<8x16x16xf32>
    %108 = arith.subf %104, %107 : vector<8x16x16xf32>
    %109 = math.exp %108 : vector<8x16x16xf32>
    %cst_53 = arith.constant dense<0.000000e+00> : vector<8x16xf32>
    %110 = vector.multi_reduction <add>, %109, %cst_53 [2] : vector<8x16x16xf32> to vector<8x16xf32>
    %111 = vector.shape_cast %110 : vector<8x16xf32> to vector<8x16x1xf32>
    %112 = tpu.reciprocal %111 {approx = true} : vector<8x16x1xf32> -> vector<8x16x1xf32>
    %113 = vector.broadcast %112 : vector<8x16x1xf32> to vector<8x16x16xf32>
    %114 = arith.mulf %109, %113 : vector<8x16x16xf32>
    %115 = arith.truncf %114 : vector<8x16x16xf32> to vector<8x16x16xbf16>
    "tpu.trace_start"() <{level = 10 : i32, message = "bnm,bmd->bnd"}> : () -> ()
    %cst_54 = arith.constant dense<0.000000e+00> : vector<8x16x8xf32>
    %116 = tpu.matmul %115, %99, %cst_54 {dimension_numbers = #tpu.dot_dimension_numbers<[2], [1], [1], [2], [0, 0, 0, 1, 1, 2], [0], [0]>} : vector<8x16x16xbf16>, vector<8x16x8xbf16>, vector<8x16x8xf32> -> vector<8x16x8xf32>
    "tpu.trace_stop"() : () -> ()
    %117 = vector.shape_cast %116 : vector<8x16x8xf32> to vector<128x8xf32>
    %c0_55 = arith.constant 0 : index
    %c24_56 = arith.constant 24 : index
    %118 = vector.load %arg9[%c0_55, %c24_56] : memref<128x32xf32, #tpu.memory_space<vmem>>, vector<128x8xf32>
    tpu.vector_store %arg9[%c0_55, %c24_56], %117 {strides = array<i32>} : memref<128x32xf32, #tpu.memory_space<vmem>>, vector<128x8xf32>,
    %c0_57 = arith.constant 0 : index
    %c0_58 = arith.constant 0 : index
    %119 = vector.load %arg9[%c0_57, %c0_58] : memref<128x32xf32, #tpu.memory_space<vmem>>, vector<128x32xf32>
    %120 = arith.truncf %119 : vector<128x32xf32> to vector<128x32xbf16>
    %c0_59 = arith.constant 0 : index
    %c0_60 = arith.constant 0 : index
    %121 = vector.load %arg4[%c0_59, %c0_60] : memref<32x32xbf16, #tpu.memory_space<vmem>>, vector<32x32xbf16>
    %cst_61 = arith.constant dense<0.000000e+00> : vector<128x32xf32>
    %122 = tpu.matmul %120, %121, %cst_61 {dimension_numbers = #tpu.dot_dimension_numbers<[1], [0], [0], [1], [0, 0, 1, 1], [], []>} : vector<128x32xbf16>, vector<32x32xbf16>, vector<128x32xf32> -> vector<128x32xf32>
    %c0_62 = arith.constant 0 : index
    %c0_63 = arith.constant 0 : index
    %123 = vector.load %arg5[%c0_62, %c0_63] : memref<1x32xf32, #tpu.memory_space<vmem>>, vector<1x32xf32>
    %124 = vector.broadcast %123 : vector<1x32xf32> to vector<128x32xf32>
    %125 = arith.addf %122, %124 : vector<128x32xf32>
    %c0_64 = arith.constant 0 : index
    %c0_65 = arith.constant 0 : index
    %126 = vector.load %arg7[%c0_64, %c0_65] : memref<128x32xf32, #tpu.memory_space<vmem>>, vector<128x32xf32>
    tpu.vector_store %arg7[%c0_64, %c0_65], %125 {strides = array<i32>} : memref<128x32xf32, #tpu.memory_space<vmem>>, vector<128x32xf32>,
    return
  }
  func.func @transform_0(%arg0: i32) -> (i32, i32) {
    %c0_i32 = arith.constant 0 : i32
    %c0_i32_0 = arith.constant 0 : i32
    return %arg0, %c0_i32 : i32, i32
  }
  func.func @transform_1(%arg0: i32) -> (i32, i32) {
    %c0_i32 = arith.constant 0 : i32
    %c0_i32_0 = arith.constant 0 : i32
    %c0_i32_1 = arith.constant 0 : i32
    return %c0_i32, %c0_i32_0 : i32, i32
  }
  func.func @transform_2(%arg0: i32) -> (i32, i32) {
    %c0_i32 = arith.constant 0 : i32
    %c0_i32_0 = arith.constant 0 : i32
    %c0_i32_1 = arith.constant 0 : i32
    return %c0_i32, %c0_i32_0 : i32, i32
  }
  func.func @transform_3(%arg0: i32) -> (i32, i32) {
    %c0_i32 = arith.constant 0 : i32
    %c0_i32_0 = arith.constant 0 : i32
    %c0_i32_1 = arith.constant 0 : i32
    return %c0_i32, %c0_i32_0 : i32, i32
  }
  func.func @transform_4(%arg0: i32) -> (i32, i32) {
    %c0_i32 = arith.constant 0 : i32
    %c0_i32_0 = arith.constant 0 : i32
    %c0_i32_1 = arith.constant 0 : i32
    return %c0_i32, %c0_i32_0 : i32, i32
  }
  func.func @transform_5(%arg0: i32) -> (i32, i32, i32, i32) {
    %c0_i32 = arith.constant 0 : i32
    %c0_i32_0 = arith.constant 0 : i32
    %c0_i32_1 = arith.constant 0 : i32
    %c0_i32_2 = arith.constant 0 : i32
    %c0_i32_3 = arith.constant 0 : i32
    return %c0_i32, %c0_i32_0, %c0_i32_1, %c0_i32_2 : i32, i32, i32, i32
  }
  func.func @transform_6(%arg0: i32) -> (i32, i32) {
    %c0_i32 = arith.constant 0 : i32
    %c0_i32_0 = arith.constant 0 : i32
    return %arg0, %c0_i32 : i32, i32
  }
}

</mosaic_0001>

<llo_original>
// kernel: tpu_custom_call.1
$region0: #{tpu_custom_call.1}
  #allocation0 [shape = 'u32[]', space=smem, size = 0x4, offset = 0x4, fixed_abs, tag = 'smem constant byte address 0x4 - core index']
  #allocation1 [shape = 'u32[144,128]{1,0:T(1,128)}', space=vmem, size = 0x12000, scoped, tag = 'internal scratch']
  #allocation2 [shape = 'f32[128,96]{1,0:T(8,128)}', space=vmem, size = 0x10000, scoped, tag = 'scratch operand']
  #allocation3 [shape = 'f32[128,32]{1,0:T(8,128)}', space=vmem, size = 0x10000, scoped, tag = 'scratch operand']
  %s0 = inlined_call_operand.vmem [shape: bf16[1024,32], index: 0, kind: input, shape index: {}]
  %s1 = inlined_call_operand.vmem [shape: bf16[32,96], index: 1, kind: input, shape index: {}]
  %s2 = inlined_call_operand.vmem [shape: f32[1,96], index: 2, kind: input, shape index: {}]
  %s3 = inlined_call_operand.vmem [shape: bf16[32,32], index: 3, kind: input, shape index: {}]
  %s4 = inlined_call_operand.vmem [shape: f32[1,32], index: 4, kind: input, shape index: {}]
  %s5 = inlined_call_operand.vmem [shape: f32[4,1,16,16], index: 5, kind: input, shape index: {}]
  %s6 = inlined_call_operand.vmem [shape: f32[1024,32], index: 6, kind: output, shape index: {}]
  %s7 = sld [smem:[#allocation0]]
  $region57: #{tpu_custom_call.1} parent=0
    _
  %s9 = ssub.s32 1, %s7
  %s10 = scalar_select 0, %s9, %s7
  loop: start=0, step=1, limit=10
  $region2: #{tpu_custom_call.1} parent=0 // loop_pre_header
    _
  $region3: #{tpu_custom_call.1} parent=0 // loop_header
    %s12 = sphi 0, %s16
    %p13 = scmp.ge.s32.totalorder %s12, 10
    %s22 = sphi 0, %s24
    %s25 = sphi 0, %s22
    %s26 = sphi 0, %s25
    %s42 = sphi 0, %s26
    %s46 = sphi 0, %s46
    %s48 = sphi 0, %s46
    %s49 = sphi 0, %s48
    %s63 = sphi 0, %s49
    %s67 = sphi 0, %s67
    %s69 = sphi 0, %s67
    %s70 = sphi 0, %s69
    %s84 = sphi 0, %s70
    %s88 = sphi 0, %s88
    %s90 = sphi 0, %s88
    %s91 = sphi 0, %s90
    %s105 = sphi 0, %s91
    %s109 = sphi 0, %s109
    %s111 = sphi 0, %s109
    %s112 = sphi 0, %s111
    %s126 = sphi 0, %s112
    %s130 = sphi 0, %s130
    %s132 = sphi 0, %s130
    %s133 = sphi 0, %s132
    %s147 = sphi 0, %s133
    %s153 = sphi 0, %s155
    %s156 = sphi 0, %s153
    %s157 = sphi 0, %s156
    %s173 = sphi 0, %s157
  $region4: #{tpu_custom_call.1} parent=0 // loop_header_branch
    %15 = sbr.rel (%p13) target = $region8
  $region5: #{tpu_custom_call.1} parent=0 // loop_body
    %s17 = ssub.s32 %s12, 1
    %s18 = ssub.s32 %s12, 2
    %s19 = sadd.s32 %s12, 1
    %s20 = ssub.s32 %s12, %s19
    %p21 = scmp.eq.s32.totalorder %s20, 0
    %s23 = sadd.s32 %s22, 1
    %s24 = scalar_select %p21, %s22, %s23
    %p27 = pneg %p21
    %p28 = scmp.eq.s32.totalorder %s12, 7
    %p29 = por %p27, %p28
    %p30 = scmp.ne.s32.totalorder %s22, %s25
    %p31 = scmp.eq.s32.totalorder %s12, 0
    %p32 = por %p30, %p31
    %p33 = scmp.ne.s32.totalorder %s22, %s25
    %p34 = scmp.eq.s32.totalorder %s17, 7
    %p35 = por %p33, %p34
    %p36 = scmp.ne.s32.totalorder %s25, %s26
    %p37 = scmp.eq.s32.totalorder %s17, 0
    %p38 = por %p36, %p37
    %p39 = scmp.ne.s32.totalorder %s25, %s26
    %p40 = scmp.eq.s32.totalorder %s18, 7
    %p41 = por %p39, %p40
    %p43 = scmp.ne.s32.totalorder %s26, %s42
    %p44 = scmp.eq.s32.totalorder %s18, 0
    %p45 = por %p43, %p44
    %s47 = sadd.s32 %s46, 1
    %p50 = scmp.eq.s32.totalorder %s12, 7
    %p51 = scmp.ne.s32.totalorder %s46, %s48
    %p52 = scmp.eq.s32.totalorder %s12, 0
    %p53 = por %p51, %p52
    %p54 = scmp.ne.s32.totalorder %s46, %s48
    %p55 = scmp.eq.s32.totalorder %s17, 7
    %p56 = por %p54, %p55
    %p57 = scmp.ne.s32.totalorder %s48, %s49
    %p58 = scmp.eq.s32.totalorder %s17, 0
    %p59 = por %p57, %p58
    %p60 = scmp.ne.s32.totalorder %s48, %s49
    %p61 = scmp.eq.s32.totalorder %s18, 7
    %p62 = por %p60, %p61
    %p64 = scmp.ne.s32.totalorder %s49, %s63
    %p65 = scmp.eq.s32.totalorder %s18, 0
    %p66 = por %p64, %p65
    %s68 = sadd.s32 %s67, 1
    %p71 = scmp.eq.s32.totalorder %s12, 7
    %p72 = scmp.ne.s32.totalorder %s67, %s69
    %p73 = scmp.eq.s32.totalorder %s12, 0
    %p74 = por %p72, %p73
    %p75 = scmp.ne.s32.totalorder %s67, %s69
    %p76 = scmp.eq.s32.totalorder %s17, 7
    %p77 = por %p75, %p76
    %p78 = scmp.ne.s32.totalorder %s69, %s70
    %p79 = scmp.eq.s32.totalorder %s17, 0
    %p80 = por %p78, %p79
    %p81 = scmp.ne.s32.totalorder %s69, %s70
    %p82 = scmp.eq.s32.totalorder %s18, 7
    %p83 = por %p81, %p82
    %p85 = scmp.ne.s32.totalorder %s70, %s84
    %p86 = scmp.eq.s32.totalorder %s18, 0
    %p87 = por %p85, %p86
    %s89 = sadd.s32 %s88, 1
    %p92 = scmp.eq.s32.totalorder %s12, 7
    %p93 = scmp.ne.s32.totalorder %s88, %s90
    %p94 = scmp.eq.s32.totalorder %s12, 0
    %p95 = por %p93, %p94
    %p96 = scmp.ne.s32.totalorder %s88, %s90
    %p97 = scmp.eq.s32.totalorder %s17, 7
    %p98 = por %p96, %p97
    %p99 = scmp.ne.s32.totalorder %s90, %s91
    %p100 = scmp.eq.s32.totalorder %s17, 0
    %p101 = por %p99, %p100
    %p102 = scmp.ne.s32.totalorder %s90, %s91
    %p103 = scmp.eq.s32.totalorder %s18, 7
    %p104 = por %p102, %p103
    %p106 = scmp.ne.s32.totalorder %s91, %s105
    %p107 = scmp.eq.s32.totalorder %s18, 0
    %p108 = por %p106, %p107
    %s110 = sadd.s32 %s109, 1
    %p113 = scmp.eq.s32.totalorder %s12, 7
    %p114 = scmp.ne.s32.totalorder %s109, %s111
    %p115 = scmp.eq.s32.totalorder %s12, 0
    %p116 = por %p114, %p115
    %p117 = scmp.ne.s32.totalorder %s109, %s111
    %p118 = scmp.eq.s32.totalorder %s17, 7
    %p119 = por %p117, %p118
    %p120 = scmp.ne.s32.totalorder %s111, %s112
    %p121 = scmp.eq.s32.totalorder %s17, 0
    %p122 = por %p120, %p121
    %p123 = scmp.ne.s32.totalorder %s111, %s112
    %p124 = scmp.eq.s32.totalorder %s18, 7
    %p125 = por %p123, %p124
    %p127 = scmp.ne.s32.totalorder %s112, %s126
    %p128 = scmp.eq.s32.totalorder %s18, 0
    %p129 = por %p127, %p128
    %s131 = sadd.s32 %s130, 1
    %p134 = scmp.eq.s32.totalorder %s12, 7
    %p135 = scmp.ne.s32.totalorder %s130, %s132
    %p136 = scmp.eq.s32.totalorder %s12, 0
    %p137 = por %p135, %p136
    %p138 = scmp.ne.s32.totalorder %s130, %s132
    %p139 = scmp.eq.s32.totalorder %s17, 7
    %p140 = por %p138, %p139
    %p141 = scmp.ne.s32.totalorder %s132, %s133
    %p142 = scmp.eq.s32.totalorder %s17, 0
    %p143 = por %p141, %p142
    %p144 = scmp.ne.s32.totalorder %s132, %s133
    %p145 = scmp.eq.s32.totalorder %s18, 7
    %p146 = por %p144, %p145
    %p148 = scmp.ne.s32.totalorder %s133, %s147
    %p149 = scmp.eq.s32.totalorder %s18, 0
    %p150 = por %p148, %p149
    %s151 = ssub.s32 %s12, %s19
    %p152 = scmp.eq.s32.totalorder %s151, 0
    %s154 = sadd.s32 %s153, 1
    %s155 = scalar_select %p152, %s153, %s154
    %p158 = pneg %p152
    %p159 = scmp.eq.s32.totalorder %s12, 7
    %p160 = por %p158, %p159
    %p161 = scmp.ne.s32.totalorder %s153, %s156
    %p162 = scmp.eq.s32.totalorder %s12, 0
    %p163 = por %p161, %p162
    %p164 = scmp.ne.s32.totalorder %s153, %s156
    %p165 = scmp.eq.s32.totalorder %s17, 7
    %p166 = por %p164, %p165
    %p167 = scmp.ne.s32.totalorder %s156, %s157
    %p168 = scmp.eq.s32.totalorder %s17, 0
    %p169 = por %p167, %p168
    %p170 = scmp.ne.s32.totalorder %s156, %s157
    %p171 = scmp.eq.s32.totalorder %s18, 7
    %p172 = por %p170, %p171
    %p174 = scmp.ne.s32.totalorder %s157, %s173
    %p175 = scmp.eq.s32.totalorder %s18, 0
    %p176 = por %p174, %p175
    %p177 = scmp.le.s32.totalorder 1, %s12
    %p178 = scmp.lt.s32.totalorder %s12, 9
    %p179 = pnand %p177, %p178
    %p180 = pneg %p179
    // Predicated region
    $region9: #{tpu_custom_call.1} parent=5 // pred_check
      _
    $region10: #{tpu_custom_call.1} parent=5 // pred_check_branch
      %182 = sbr.rel (%p179) target = $region12
    $region11: #{tpu_custom_call.1} parent=5 // pred_region
      %s183 = ssub.s32 %s12, 1
      // Predicated region
      $region13: #{tpu_custom_call.1} parent=11 // pred_check
        %p184 = pneg %p59
      $region14: #{tpu_custom_call.1} parent=11 // pred_check_branch
        %186 = sbr.rel (%p184) target = $region16
      $region15: #{tpu_custom_call.1} parent=11 // pred_region
        _
      $region16: #{tpu_custom_call.1} parent=11 // pred_fallthru
        _
      // Predicated region
      $region17: #{tpu_custom_call.1} parent=11 // pred_check
        %p187 = pneg %p80
      $region18: #{tpu_custom_call.1} parent=11 // pred_check_branch
        %189 = sbr.rel (%p187) target = $region20
      $region19: #{tpu_custom_call.1} parent=11 // pred_region
        _
      $region20: #{tpu_custom_call.1} parent=11 // pred_fallthru
        _
      // Predicated region
      $region21: #{tpu_custom_call.1} parent=11 // pred_check
        %p190 = pneg %p101
      $region22: #{tpu_custom_call.1} parent=11 // pred_check_branch
        %192 = sbr.rel (%p190) target = $region24
      $region23: #{tpu_custom_call.1} parent=11 // pred_region
        _
      $region24: #{tpu_custom_call.1} parent=11 // pred_fallthru
        _
      // Predicated region
      $region25: #{tpu_custom_call.1} parent=11 // pred_check
        %p193 = pneg %p122
      $region26: #{tpu_custom_call.1} parent=11 // pred_check_branch
        %195 = sbr.rel (%p193) target = $region28
      $region27: #{tpu_custom_call.1} parent=11 // pred_region
        _
      $region28: #{tpu_custom_call.1} parent=11 // pred_fallthru
        _
      // Predicated region
      $region29: #{tpu_custom_call.1} parent=11 // pred_check
        %p196 = pneg %p143
      $region30: #{tpu_custom_call.1} parent=11 // pred_check_branch
        %198 = sbr.rel (%p196) target = $region32
      $region31: #{tpu_custom_call.1} parent=11 // pred_region
        _
      $region32: #{tpu_custom_call.1} parent=11 // pred_fallthru
        _
    $region12: #{tpu_custom_call.1} parent=5 // pred_fallthru
      _
    %p199 = scmp.lt.s32.totalorder %s12, 8
    // Predicated region
    $region33: #{tpu_custom_call.1} parent=5 // pred_check
      %p200 = pneg %p199
    $region34: #{tpu_custom_call.1} parent=5 // pred_check_branch
      %202 = sbr.rel (%p200) target = $region36
    $region35: #{tpu_custom_call.1} parent=5 // pred_region
      // Predicated region
      $region37: #{tpu_custom_call.1} parent=35 // pred_check
        %p203 = pneg %p32
      $region38: #{tpu_custom_call.1} parent=35 // pred_check_branch
        %205 = sbr.rel (%p203) target = $region40
      $region39: #{tpu_custom_call.1} parent=35 // pred_region
        %s206 = smul.u32 16, %s12
        %p207 = scmp.lt.s32.totalorder %s206, 127
        %s208 = scalar_select %p207, %s206, 127
        %s209 = smul.addr %s208, 4
        %s210 = scalar_lea.vmem %s0, %s209
        %s211 = smul.u32 16, %s12
      $region40: #{tpu_custom_call.1} parent=35 // pred_fallthru
        _
    $region36: #{tpu_custom_call.1} parent=5 // pred_fallthru
      _
    %p212 = scmp.le.s32.totalorder 1, %s12
    %p213 = scmp.lt.s32.totalorder %s12, 9
    %p214 = pnand %p212, %p213
    %p215 = pneg %p214
    // Predicated region
    $region41: #{tpu_custom_call.1} parent=5 // pred_check
      _
    $region42: #{tpu_custom_call.1} parent=5 // pred_check_branch
      %217 = sbr.rel (%p214) target = $region44
    $region43: #{tpu_custom_call.1} parent=5 // pred_region
      %s218 = ssub.s32 %s12, 1
      %s219 = smul.u32 16, %s17
      %p220 = scmp.lt.s32.totalorder %s219, 127
      %s221 = scalar_select %p220, %s219, 127
      %s222 = smul.addr %s221, 4
      %s223 = scalar_lea.vmem %s0, %s222
      %p224 = pneg %p38
      %p225 = pneg %p35
      %p226 = pneg %p59
      %p227 = pneg %p56
      %p228 = pneg %p80
      %p229 = pneg %p77
      %p230 = pneg %p101
      %p231 = pneg %p98
      %p232 = pneg %p122
      %p233 = pneg %p119
      %p234 = pneg %p143
      %p235 = pneg %p140
      %p236 = pneg %p169
      %p237 = pneg %p166
      %s238 = smul.u32 16, %s17
      %p239 = scmp.lt.s32.totalorder %s238, 127
      %s240 = scalar_select %p239, %s238, 127
      %s241 = smul.addr %s240, 8
      %s242 = scalar_lea.vmem %s6, %s241
      %s243 = smul.u32 16, %s17
      %p244 = scmp.lt.s32.totalorder %s243, 127
      %s245 = scalar_select %p244, %s243, 127
      %s246 = smul.addr %s245, 4
      %s247 = scalar_lea.vmem %s0, %s246
      %s248 = smul.u32 16, %s17
      %s249 = smul.u32 16, %s17
      %p250 = scmp.lt.s32.totalorder %s249, 127
      %s251 = scalar_select %p250, %s249, 127
      %s252 = smul.addr %s251, 8
      %s253 = scalar_lea.vmem %s6, %s252
      %s254 = smul.u32 16, %s17
      %v256 = vld [vmem:[%s247] sm:$0xf]
      %v257 = vld [vmem:[%s247 + $0x4] sm:$0xf]
      %v258 = vld [vmem:[%s247 + $0x8] sm:$0xf]
      %v259 = vld [vmem:[%s247 + $0xc] sm:$0xf]
      %v260 = vld [vmem:[%s247 + $0x10] sm:$0xf]
      %v261 = vld [vmem:[%s247 + $0x14] sm:$0xf]
      %v262 = vld [vmem:[%s247 + $0x18] sm:$0xf]
      %v263 = vld [vmem:[%s247 + $0x1c] sm:$0xf]
      %v264 = vld [vmem:[%s247 + $0x20] sm:$0xf]
      %v265 = vld [vmem:[%s247 + $0x24] sm:$0xf]
      %v266 = vld [vmem:[%s247 + $0x28] sm:$0xf]
      %v267 = vld [vmem:[%s247 + $0x2c] sm:$0xf]
      %v268 = vld [vmem:[%s247 + $0x30] sm:$0xf]
      %v269 = vld [vmem:[%s247 + $0x34] sm:$0xf]
      %v270 = vld [vmem:[%s247 + $0x38] sm:$0xf]
      %v271 = vld [vmem:[%s247 + $0x3c] sm:$0xf]
      %v272 = vld [vmem:[%s1] sm:$0xf]
      %v273 = vld [vmem:[%s1 + $0x4] sm:$0xf]
      %v274 = vld [vmem:[%s1 + $0x8] sm:$0xf]
      %v275 = vld [vmem:[%s1 + $0xc] sm:$0xf]
      %v276 = vld [vmem:[%s2] sm:$0x1]
      %v278 = vlaneseq
      %v279 = vshrl.u32 %v278, 7
      %v280 = vsub.s32 0, %v279
      %v281 = vrot.slane %v276, %v280
      %v299 = vunpack.c.l.b16 %v256
      %v300 = vunpack.c.l.b16 %v257
      %v301 = vunpack.c.l.b16 %v258
      %v302 = vunpack.c.l.b16 %v259
      %v303 = vunpack.c.l.b16 %v260
      %v304 = vunpack.c.l.b16 %v261
      %v305 = vunpack.c.l.b16 %v262
      %v306 = vunpack.c.l.b16 %v263
      %v307 = vunpack.c.l.b16 %v264
      %v308 = vunpack.c.l.b16 %v265
      %v309 = vunpack.c.l.b16 %v266
      %v310 = vunpack.c.l.b16 %v267
      %v311 = vunpack.c.l.b16 %v268
      %v312 = vunpack.c.l.b16 %v269
      %v313 = vunpack.c.l.b16 %v270
      %v314 = vunpack.c.l.b16 %v271
      %v315 = vpack.c.b16 %v300, %v299
      %v316 = vpack.c.b16 %v302, %v301
      %v317 = vpack.c.b16 %v304, %v303
      %v318 = vpack.c.b16 %v306, %v305
      %v319 = vpack.c.b16 %v308, %v307
      %v320 = vpack.c.b16 %v310, %v309
      %v321 = vpack.c.b16 %v312, %v311
      %v322 = vpack.c.b16 %v314, %v313
      %v327 = vunpack.c.l.b16 %v272
      %v328 = vunpack.c.l.b16 %v273
      %v329 = vunpack.c.l.b16 %v274
      %v330 = vunpack.c.l.b16 %v275
      %v331 = vpack.c.b16 %v328, %v327
      %v332 = vpack.c.b16 %v330, %v329
      %vm335 = vcmask 261120
      %v337 = vsel %vm335, %v315, 0
      %v340 = vsel %vm335, %v316, 0
      %v343 = vsel %vm335, %v317, 0
      %v346 = vsel %vm335, %v318, 0
      %v349 = vsel %vm335, %v319, 0
      %v352 = vsel %vm335, %v320, 0
      %v355 = vsel %vm335, %v321, 0
      %v358 = vsel %vm335, %v322, 0
      %360 = vmatprep.subr.bf16.mxu0 0
      %361 = vmatpush1.bf16.msra.mxu0 0
      %362 = vmatprep.subr.bf16.mxu0 0
      %363 = vmatpush1.bf16.msra.mxu0 0
      %364 = vmatprep.subr.bf16.mxu0 0
      %365 = vmatpush1.bf16.msra.mxu0 0
      %366 = vmatprep.subr.bf16.mxu0 0
      %367 = vmatpush1.bf16.msra.mxu0 0
      %368 = vmatprep.subr.bf16.mxu0 0
      %369 = vmatpush1.bf16.msra.mxu0 0
      %370 = vmatprep.subr.bf16.mxu0 0
      %371 = vmatpush1.bf16.msra.mxu0 0
      %372 = vmatprep.subr.bf16.mxu0 0
      %373 = vmatpush1.bf16.msra.mxu0 %v332
      %374 = vmatprep.subr.bf16.mxu0 0
      %375 = vmatpush1.bf16.msra.mxu0 %v331
      %376 = vmatprep.subr.bf16.mxu0 0
      %377 = vmatpush2.bf16.msra.mxu0 0
      %378 = vmatprep.subr.bf16.mxu0 0
      %379 = vmatpush2.bf16.msra.mxu0 0
      %380 = vmatprep.subr.bf16.mxu0 0
      %381 = vmatpush2.bf16.msra.mxu0 0
      %382 = vmatprep.subr.bf16.mxu0 0
      %383 = vmatpush2.bf16.msra.mxu0 0
      %384 = vmatprep.subr.bf16.mxu0 0
      %385 = vmatpush2.bf16.msra.mxu0 0
      %386 = vmatprep.subr.bf16.mxu0 0
      %387 = vmatpush2.bf16.msra.mxu0 0
      %388 = vmatprep.subr.bf16.mxu0 0
      %389 = vmatpush2.bf16.msra.mxu0 0
      %390 = vmatprep.subr.bf16.mxu0 0
      %391 = vmatpush2.bf16.msra.mxu0 0
      %392 = vmatprep.mubr.bf16.mxu0 0
      %393 = vmatmul.mubr.bf16.gmra.mxu0 %v337
      %v394 = vpop.f32.mrf.mxu0
      %v395 = vadd.f32 %v281, %v394
      %v396 = vpop.f32.mrf.mxu0
      %v397 = vpop.f32.mrf.mxu0
      %v398 = vadd.f32 %v281, %v397
      %v399 = vpop.f32.mrf.mxu0
      %400 = vmatprep.mubr.bf16.mxu0 0
      %401 = vmatmul.mubr.bf16.gmra.mxu0 %v340
      %v402 = vpop.f32.mrf.mxu0
      %v403 = vadd.f32 %v281, %v402
      %v404 = vpop.f32.mrf.mxu0
      %v405 = vpop.f32.mrf.mxu0
      %v406 = vadd.f32 %v281, %v405
      %v407 = vpop.f32.mrf.mxu0
      %408 = vmatprep.mubr.bf16.mxu0 0
      %409 = vmatmul.mubr.bf16.gmra.mxu0 %v343
      %v410 = vpop.f32.mrf.mxu0
      %v411 = vadd.f32 %v281, %v410
      %v412 = vpop.f32.mrf.mxu0
      %v413 = vpop.f32.mrf.mxu0
      %v414 = vadd.f32 %v281, %v413
      %v415 = vpop.f32.mrf.mxu0
      %416 = vmatprep.mubr.bf16.mxu0 0
      %417 = vmatmul.mubr.bf16.gmra.mxu0 %v346
      %v418 = vpop.f32.mrf.mxu0
      %v419 = vadd.f32 %v281, %v418
      %v420 = vpop.f32.mrf.mxu0
      %v421 = vpop.f32.mrf.mxu0
      %v422 = vadd.f32 %v281, %v421
      %v423 = vpop.f32.mrf.mxu0
      %424 = vmatprep.mubr.bf16.mxu0 0
      %425 = vmatmul.mubr.bf16.gmra.mxu0 %v349
      %v426 = vpop.f32.mrf.mxu0
      %v427 = vadd.f32 %v281, %v426
      %v428 = vpop.f32.mrf.mxu0
      %v429 = vpop.f32.mrf.mxu0
      %v430 = vadd.f32 %v281, %v429
      %v431 = vpop.f32.mrf.mxu0
      %432 = vmatprep.mubr.bf16.mxu0 0
      %433 = vmatmul.mubr.bf16.gmra.mxu0 %v352
      %v434 = vpop.f32.mrf.mxu0
      %v435 = vadd.f32 %v281, %v434
      %v436 = vpop.f32.mrf.mxu0
      %v437 = vpop.f32.mrf.mxu0
      %v438 = vadd.f32 %v281, %v437
      %v439 = vpop.f32.mrf.mxu0
      %440 = vmatprep.mubr.bf16.mxu0 0
      %441 = vmatmul.mubr.bf16.gmra.mxu0 %v355
      %v442 = vpop.f32.mrf.mxu0
      %v443 = vadd.f32 %v281, %v442
      %v444 = vpop.f32.mrf.mxu0
      %v445 = vpop.f32.mrf.mxu0
      %v446 = vadd.f32 %v281, %v445
      %v447 = vpop.f32.mrf.mxu0
      %448 = vmatprep.mubr.bf16.mxu0 0
      %449 = vmatmul.mubr.bf16.gmra.mxu0 %v358
      %v450 = vpop.f32.mrf.mxu0
      %v451 = vadd.f32 %v281, %v450
      %v452 = vpop.f32.mrf.mxu0
      %v453 = vpop.f32.mrf.mxu0
      %v454 = vadd.f32 %v281, %v453
      %v455 = vpop.f32.mrf.mxu0
      %456 = vdwg.mxu0
      %vm457 = vcmask 785408
      %458 = vst.msk [vmem:[#allocation2] sm:$0xff] %vm457, %v395
      %459 = vst.msk [vmem:[#allocation2 + $0x8] sm:$0xff] %vm457, %v398
      %460 = vst.msk [vmem:[#allocation2 + $0x10] sm:$0xff] %vm457, %v403
      %461 = vst.msk [vmem:[#allocation2 + $0x18] sm:$0xff] %vm457, %v406
      %462 = vst.msk [vmem:[#allocation2 + $0x20] sm:$0xff] %vm457, %v411
      %463 = vst.msk [vmem:[#allocation2 + $0x28] sm:$0xff] %vm457, %v414
      %464 = vst.msk [vmem:[#allocation2 + $0x30] sm:$0xff] %vm457, %v419
      %465 = vst.msk [vmem:[#allocation2 + $0x38] sm:$0xff] %vm457, %v422
      %466 = vst.msk [vmem:[#allocation2 + $0x40] sm:$0xff] %vm457, %v427
      %467 = vst.msk [vmem:[#allocation2 + $0x48] sm:$0xff] %vm457, %v430
      %468 = vst.msk [vmem:[#allocation2 + $0x50] sm:$0xff] %vm457, %v435
      %469 = vst.msk [vmem:[#allocation2 + $0x58] sm:$0xff] %vm457, %v438
      %470 = vst.msk [vmem:[#allocation2 + $0x60] sm:$0xff] %vm457, %v443
      %471 = vst.msk [vmem:[#allocation2 + $0x68] sm:$0xff] %vm457, %v446
      %472 = vst.msk [vmem:[#allocation2 + $0x70] sm:$0xff] %vm457, %v451
      %473 = vst.msk [vmem:[#allocation2 + $0x78] sm:$0xff] %vm457, %v454
      %v474 = vld [vmem:[#allocation2] sm:$0xff]
      %v475 = vld [vmem:[#allocation2 + $0x8] sm:$0xff]
      %v476 = vld [vmem:[#allocation2 + $0x10] sm:$0xff]
      %v477 = vld [vmem:[#allocation2 + $0x18] sm:$0xff]
      %v478 = vld [vmem:[#allocation2 + $0x20] sm:$0xff]
      %v479 = vld [vmem:[#allocation2 + $0x28] sm:$0xff]
      %v480 = vld [vmem:[#allocation2 + $0x30] sm:$0xff]
      %v481 = vld [vmem:[#allocation2 + $0x38] sm:$0xff]
      %v482 = vld [vmem:[#allocation2 + $0x40] sm:$0xff]
      %v483 = vld [vmem:[#allocation2 + $0x48] sm:$0xff]
      %v484 = vld [vmem:[#allocation2 + $0x50] sm:$0xff]
      %v485 = vld [vmem:[#allocation2 + $0x58] sm:$0xff]
      %v486 = vld [vmem:[#allocation2 + $0x60] sm:$0xff]
      %v487 = vld [vmem:[#allocation2 + $0x68] sm:$0xff]
      %v488 = vld [vmem:[#allocation2 + $0x70] sm:$0xff]
      %v489 = vld [vmem:[#allocation2 + $0x78] sm:$0xff]
      %v490 = vpack.c.bf16 %v475, %v474
      %v491 = vpack.c.bf16 %v477, %v476
      %v492 = vpack.c.bf16 %v479, %v478
      %v493 = vpack.c.bf16 %v481, %v480
      %v494 = vpack.c.bf16 %v483, %v482
      %v495 = vpack.c.bf16 %v485, %v484
      %v496 = vpack.c.bf16 %v487, %v486
      %v497 = vpack.c.bf16 %v489, %v488
      %v498 = vld [vmem:[%s5] sm:$0xff]
      %v499 = vld [vmem:[%s5 + $0x8] sm:$0xff]
      %501 = vrot.lane.b32.xlu0 %v490, 96
      %v502 = vpop.permute.xlu0 %501
      %vm503 = vcmask 64512
      %v505 = vsel %vm503, %v490, 0
      %v508 = vsel %vm503, %v502, 0
      %510 = vmatprep.subr.bf16.mxu0 0
      %511 = vmatpush1.bf16.xpose.msra.mxu0 0
      %512 = vmatprep.subr.bf16.mxu0 0
      %513 = vmatpush1.bf16.xpose.msra.mxu0 0
      %514 = vmatprep.subr.bf16.mxu0 0
      %515 = vmatpush1.bf16.xpose.msra.mxu0 0
      %516 = vmatprep.subr.bf16.mxu0 0
      %517 = vmatpush1.bf16.xpose.msra.mxu0 0
      %518 = vmatprep.subr.bf16.mxu0 0
      %519 = vmatpush1.bf16.xpose.msra.mxu0 0
      %520 = vmatprep.subr.bf16.mxu0 0
      %521 = vmatpush1.bf16.xpose.msra.mxu0 0
      %522 = vmatprep.subr.bf16.mxu0 0
      %523 = vmatpush1.bf16.xpose.msra.mxu0 0
      %524 = vmatprep.subr.bf16.mxu0 0
      %525 = vmatpush1.bf16.xpose.msra.mxu0 %v508
      %526 = vmatprep.subr.bf16.mxu0 0
      %527 = vmatpush2.bf16.xpose.msra.mxu0 0
      %528 = vmatprep.subr.bf16.mxu0 0
      %529 = vmatpush2.bf16.xpose.msra.mxu0 0
      %530 = vmatprep.subr.bf16.mxu0 0
      %531 = vmatpush2.bf16.xpose.msra.mxu0 0
      %532 = vmatprep.subr.bf16.mxu0 0
      %533 = vmatpush2.bf16.xpose.msra.mxu0 0
      %534 = vmatprep.subr.bf16.mxu0 0
      %535 = vmatpush2.bf16.xpose.msra.mxu0 0
      %536 = vmatprep.subr.bf16.mxu0 0
      %537 = vmatpush2.bf16.xpose.msra.mxu0 0
      %538 = vmatprep.subr.bf16.mxu0 0
      %539 = vmatpush2.bf16.xpose.msra.mxu0 0
      %540 = vmatprep.subr.bf16.mxu0 0
      %541 = vmatpush2.bf16.xpose.msra.mxu0 0
      %542 = vmatprep.mubr.bf16.mxu0 0
      %543 = vmatmul.mubr.bf16.gmra.mxu0 %v505
      %v544 = vpop.f32.mrf.mxu0
      %v545 = vadd.f32 %v498, %v544
      %v546 = vpop.f32.mrf.mxu0
      %v547 = vpop.f32.mrf.mxu0
      %v548 = vadd.f32 %v499, %v547
      %v549 = vpop.f32.mrf.mxu0
      %550 = vdwg.mxu0
      %552 = vrot.lane.b32.xlu0 %v491, 96
      %v553 = vpop.permute.xlu0 %552
      %v555 = vsel %vm503, %v491, 0
      %v558 = vsel %vm503, %v553, 0
      %560 = vmatprep.subr.bf16.mxu0 0
      %561 = vmatpush1.bf16.xpose.msra.mxu0 0
      %562 = vmatprep.subr.bf16.mxu0 0
      %563 = vmatpush1.bf16.xpose.msra.mxu0 0
      %564 = vmatprep.subr.bf16.mxu0 0
      %565 = vmatpush1.bf16.xpose.msra.mxu0 0
      %566 = vmatprep.subr.bf16.mxu0 0
      %567 = vmatpush1.bf16.xpose.msra.mxu0 0
      %568 = vmatprep.subr.bf16.mxu0 0
      %569 = vmatpush1.bf16.xpose.msra.mxu0 0
      %570 = vmatprep.subr.bf16.mxu0 0
      %571 = vmatpush1.bf16.xpose.msra.mxu0 0
      %572 = vmatprep.subr.bf16.mxu0 0
      %573 = vmatpush1.bf16.xpose.msra.mxu0 0
      %574 = vmatprep.subr.bf16.mxu0 0
      %575 = vmatpush1.bf16.xpose.msra.mxu0 %v558
      %576 = vmatprep.subr.bf16.mxu0 0
      %577 = vmatpush2.bf16.xpose.msra.mxu0 0
      %578 = vmatprep.subr.bf16.mxu0 0
      %579 = vmatpush2.bf16.xpose.msra.mxu0 0
      %580 = vmatprep.subr.bf16.mxu0 0
      %581 = vmatpush2.bf16.xpose.msra.mxu0 0
      %582 = vmatprep.subr.bf16.mxu0 0
      %583 = vmatpush2.bf16.xpose.msra.mxu0 0
      %584 = vmatprep.subr.bf16.mxu0 0
      %585 = vmatpush2.bf16.xpose.msra.mxu0 0
      %586 = vmatprep.subr.bf16.mxu0 0
      %587 = vmatpush2.bf16.xpose.msra.mxu0 0
      %588 = vmatprep.subr.bf16.mxu0 0
      %589 = vmatpush2.bf16.xpose.msra.mxu0 0
      %590 = vmatprep.subr.bf16.mxu0 0
      %591 = vmatpush2.bf16.xpose.msra.mxu0 0
      %592 = vmatprep.mubr.bf16.mxu0 0
      %593 = vmatmul.mubr.bf16.gmra.mxu0 %v555
      %v594 = vpop.f32.mrf.mxu0
      %v595 = vadd.f32 %v498, %v594
      %v596 = vpop.f32.mrf.mxu0
      %v597 = vpop.f32.mrf.mxu0
      %v598 = vadd.f32 %v499, %v597
      %v599 = vpop.f32.mrf.mxu0
      %600 = vdwg.mxu0
      %602 = vrot.lane.b32.xlu0 %v492, 96
      %v603 = vpop.permute.xlu0 %602
      %v605 = vsel %vm503, %v492, 0
      %v608 = vsel %vm503, %v603, 0
      %610 = vmatprep.subr.bf16.mxu0 0
      %611 = vmatpush1.bf16.xpose.msra.mxu0 0
      %612 = vmatprep.subr.bf16.mxu0 0
      %613 = vmatpush1.bf16.xpose.msra.mxu0 0
      %614 = vmatprep.subr.bf16.mxu0 0
      %615 = vmatpush1.bf16.xpose.msra.mxu0 0
      %616 = vmatprep.subr.bf16.mxu0 0
      %617 = vmatpush1.bf16.xpose.msra.mxu0 0
      %618 = vmatprep.subr.bf16.mxu0 0
      %619 = vmatpush1.bf16.xpose.msra.mxu0 0
      %620 = vmatprep.subr.bf16.mxu0 0
      %621 = vmatpush1.bf16.xpose.msra.mxu0 0
      %622 = vmatprep.subr.bf16.mxu0 0
      %623 = vmatpush1.bf16.xpose.msra.mxu0 0
      %624 = vmatprep.subr.bf16.mxu0 0
      %625 = vmatpush1.bf16.xpose.msra.mxu0 %v608
      %626 = vmatprep.subr.bf16.mxu0 0
      %627 = vmatpush2.bf16.xpose.msra.mxu0 0
      %628 = vmatprep.subr.bf16.mxu0 0
      %629 = vmatpush2.bf16.xpose.msra.mxu0 0
      %630 = vmatprep.subr.bf16.mxu0 0
      %631 = vmatpush2.bf16.xpose.msra.mxu0 0
      %632 = vmatprep.subr.bf16.mxu0 0
      %633 = vmatpush2.bf16.xpose.msra.mxu0 0
      %634 = vmatprep.subr.bf16.mxu0 0
      %635 = vmatpush2.bf16.xpose.msra.mxu0 0
      %636 = vmatprep.subr.bf16.mxu0 0
      %637 = vmatpush2.bf16.xpose.msra.mxu0 0
      %638 = vmatprep.subr.bf16.mxu0 0
      %639 = vmatpush2.bf16.xpose.msra.mxu0 0
      %640 = vmatprep.subr.bf16.mxu0 0
      %641 = vmatpush2.bf16.xpose.msra.mxu0 0
      %642 = vmatprep.mubr.bf16.mxu0 0
      %643 = vmatmul.mubr.bf16.gmra.mxu0 %v605
      %v644 = vpop.f32.mrf.mxu0
      %v645 = vadd.f32 %v498, %v644
      %v646 = vpop.f32.mrf.mxu0
      %v647 = vpop.f32.mrf.mxu0
      %v648 = vadd.f32 %v499, %v647
      %v649 = vpop.f32.mrf.mxu0
      %650 = vdwg.mxu0
      %652 = vrot.lane.b32.xlu0 %v493, 96
      %v653 = vpop.permute.xlu0 %652
      %v655 = vsel %vm503, %v493, 0
      %v658 = vsel %vm503, %v653, 0
      %660 = vmatprep.subr.bf16.mxu0 0
      %661 = vmatpush1.bf16.xpose.msra.mxu0 0
      %662 = vmatprep.subr.bf16.mxu0 0
      %663 = vmatpush1.bf16.xpose.msra.mxu0 0
      %664 = vmatprep.subr.bf16.mxu0 0
      %665 = vmatpush1.bf16.xpose.msra.mxu0 0
      %666 = vmatprep.subr.bf16.mxu0 0
      %667 = vmatpush1.bf16.xpose.msra.mxu0 0
      %668 = vmatprep.subr.bf16.mxu0 0
      %669 = vmatpush1.bf16.xpose.msra.mxu0 0
      %670 = vmatprep.subr.bf16.mxu0 0
      %671 = vmatpush1.bf16.xpose.msra.mxu0 0
      %672 = vmatprep.subr.bf16.mxu0 0
      %673 = vmatpush1.bf16.xpose.msra.mxu0 0
      %674 = vmatprep.subr.bf16.mxu0 0
      %675 = vmatpush1.bf16.xpose.msra.mxu0 %v658
      %676 = vmatprep.subr.bf16.mxu0 0
      %677 = vmatpush2.bf16.xpose.msra.mxu0 0
      %678 = vmatprep.subr.bf16.mxu0 0
      %679 = vmatpush2.bf16.xpose.msra.mxu0 0
      %680 = vmatprep.subr.bf16.mxu0 0
      %681 = vmatpush2.bf16.xpose.msra.mxu0 0
      %682 = vmatprep.subr.bf16.mxu0 0
      %683 = vmatpush2.bf16.xpose.msra.mxu0 0
      %684 = vmatprep.subr.bf16.mxu0 0
      %685 = vmatpush2.bf16.xpose.msra.mxu0 0
      %686 = vmatprep.subr.bf16.mxu0 0
      %687 = vmatpush2.bf16.xpose.msra.mxu0 0
      %688 = vmatprep.subr.bf16.mxu0 0
      %689 = vmatpush2.bf16.xpose.msra.mxu0 0
      %690 = vmatprep.subr.bf16.mxu0 0
      %691 = vmatpush2.bf16.xpose.msra.mxu0 0
      %692 = vmatprep.mubr.bf16.mxu0 0
      %693 = vmatmul.mubr.bf16.gmra.mxu0 %v655
      %v694 = vpop.f32.mrf.mxu0
      %v695 = vadd.f32 %v498, %v694
      %v696 = vpop.f32.mrf.mxu0
      %v697 = vpop.f32.mrf.mxu0
      %v698 = vadd.f32 %v499, %v697
      %v699 = vpop.f32.mrf.mxu0
      %700 = vdwg.mxu0
      %702 = vrot.lane.b32.xlu0 %v494, 96
      %v703 = vpop.permute.xlu0 %702
      %v705 = vsel %vm503, %v494, 0
      %v708 = vsel %vm503, %v703, 0
      %710 = vmatprep.subr.bf16.mxu0 0
      %711 = vmatpush1.bf16.xpose.msra.mxu0 0
      %712 = vmatprep.subr.bf16.mxu0 0
      %713 = vmatpush1.bf16.xpose.msra.mxu0 0
      %714 = vmatprep.subr.bf16.mxu0 0
      %715 = vmatpush1.bf16.xpose.msra.mxu0 0
      %716 = vmatprep.subr.bf16.mxu0 0
      %717 = vmatpush1.bf16.xpose.msra.mxu0 0
      %718 = vmatprep.subr.bf16.mxu0 0
      %719 = vmatpush1.bf16.xpose.msra.mxu0 0
      %720 = vmatprep.subr.bf16.mxu0 0
      %721 = vmatpush1.bf16.xpose.msra.mxu0 0
      %722 = vmatprep.subr.bf16.mxu0 0
      %723 = vmatpush1.bf16.xpose.msra.mxu0 0
      %724 = vmatprep.subr.bf16.mxu0 0
      %725 = vmatpush1.bf16.xpose.msra.mxu0 %v708
      %726 = vmatprep.subr.bf16.mxu0 0
      %727 = vmatpush2.bf16.xpose.msra.mxu0 0
      %728 = vmatprep.subr.bf16.mxu0 0
      %729 = vmatpush2.bf16.xpose.msra.mxu0 0
      %730 = vmatprep.subr.bf16.mxu0 0
      %731 = vmatpush2.bf16.xpose.msra.mxu0 0
      %732 = vmatprep.subr.bf16.mxu0 0
      %733 = vmatpush2.bf16.xpose.msra.mxu0 0
      %734 = vmatprep.subr.bf16.mxu0 0
      %735 = vmatpush2.bf16.xpose.msra.mxu0 0
      %736 = vmatprep.subr.bf16.mxu0 0
      %737 = vmatpush2.bf16.xpose.msra.mxu0 0
      %738 = vmatprep.subr.bf16.mxu0 0
      %739 = vmatpush2.bf16.xpose.msra.mxu0 0
      %740 = vmatprep.subr.bf16.mxu0 0
      %741 = vmatpush2.bf16.xpose.msra.mxu0 0
      %742 = vmatprep.mubr.bf16.mxu0 0
      %743 = vmatmul.mubr.bf16.gmra.mxu0 %v705
      %v744 = vpop.f32.mrf.mxu0
      %v745 = vadd.f32 %v498, %v744
      %v746 = vpop.f32.mrf.mxu0
      %v747 = vpop.f32.mrf.mxu0
      %v748 = vadd.f32 %v499, %v747
      %v749 = vpop.f32.mrf.mxu0
      %750 = vdwg.mxu0
      %752 = vrot.lane.b32.xlu0 %v495, 96
      %v753 = vpop.permute.xlu0 %752
      %v755 = vsel %vm503, %v495, 0
      %v758 = vsel %vm503, %v753, 0
      %760 = vmatprep.subr.bf16.mxu0 0
      %761 = vmatpush1.bf16.xpose.msra.mxu0 0
      %762 = vmatprep.subr.bf16.mxu0 0
      %763 = vmatpush1.bf16.xpose.msra.mxu0 0
      %764 = vmatprep.subr.bf16.mxu0 0
      %765 = vmatpush1.bf16.xpose.msra.mxu0 0
      %766 = vmatprep.subr.bf16.mxu0 0
      %767 = vmatpush1.bf16.xpose.msra.mxu0 0
      %768 = vmatprep.subr.bf16.mxu0 0
      %769 = vmatpush1.bf16.xpose.msra.mxu0 0
      %770 = vmatprep.subr.bf16.mxu0 0
      %771 = vmatpush1.bf16.xpose.msra.mxu0 0
      %772 = vmatprep.subr.bf16.mxu0 0
      %773 = vmatpush1.bf16.xpose.msra.mxu0 0
      %774 = vmatprep.subr.bf16.mxu0 0
      %775 = vmatpush1.bf16.xpose.msra.mxu0 %v758
      %776 = vmatprep.subr.bf16.mxu0 0
      %777 = vmatpush2.bf16.xpose.msra.mxu0 0
      %778 = vmatprep.subr.bf16.mxu0 0
      %779 = vmatpush2.bf16.xpose.msra.mxu0 0
      %780 = vmatprep.subr.bf16.mxu0 0
      %781 = vmatpush2.bf16.xpose.msra.mxu0 0
      %782 = vmatprep.subr.bf16.mxu0 0
      %783 = vmatpush2.bf16.xpose.msra.mxu0 0
      %784 = vmatprep.subr.bf16.mxu0 0
      %785 = vmatpush2.bf16.xpose.msra.mxu0 0
      %786 = vmatprep.subr.bf16.mxu0 0
      %787 = vmatpush2.bf16.xpose.msra.mxu0 0
      %788 = vmatprep.subr.bf16.mxu0 0
      %789 = vmatpush2.bf16.xpose.msra.mxu0 0
      %790 = vmatprep.subr.bf16.mxu0 0
      %791 = vmatpush2.bf16.xpose.msra.mxu0 0
      %792 = vmatprep.mubr.bf16.mxu0 0
      %793 = vmatmul.mubr.bf16.gmra.mxu0 %v755
      %v794 = vpop.f32.mrf.mxu0
      %v795 = vadd.f32 %v498, %v794
      %v796 = vpop.f32.mrf.mxu0
      %v797 = vpop.f32.mrf.mxu0
      %v798 = vadd.f32 %v499, %v797
      %v799 = vpop.f32.mrf.mxu0
      %800 = vdwg.mxu0
      %802 = vrot.lane.b32.xlu0 %v496, 96
      %v803 = vpop.permute.xlu0 %802
      %v805 = vsel %vm503, %v496, 0
      %v808 = vsel %vm503, %v803, 0
      %810 = vmatprep.subr.bf16.mxu0 0
      %811 = vmatpush1.bf16.xpose.msra.mxu0 0
      %812 = vmatprep.subr.bf16.mxu0 0
      %813 = vmatpush1.bf16.xpose.msra.mxu0 0
      %814 = vmatprep.subr.bf16.mxu0 0
      %815 = vmatpush1.bf16.xpose.msra.mxu0 0
      %816 = vmatprep.subr.bf16.mxu0 0
      %817 = vmatpush1.bf16.xpose.msra.mxu0 0
      %818 = vmatprep.subr.bf16.mxu0 0
      %819 = vmatpush1.bf16.xpose.msra.mxu0 0
      %820 = vmatprep.subr.bf16.mxu0 0
      %821 = vmatpush1.bf16.xpose.msra.mxu0 0
      %822 = vmatprep.subr.bf16.mxu0 0
      %823 = vmatpush1.bf16.xpose.msra.mxu0 0
      %824 = vmatprep.subr.bf16.mxu0 0
      %825 = vmatpush1.bf16.xpose.msra.mxu0 %v808
      %826 = vmatprep.subr.bf16.mxu0 0
      %827 = vmatpush2.bf16.xpose.msra.mxu0 0
      %828 = vmatprep.subr.bf16.mxu0 0
      %829 = vmatpush2.bf16.xpose.msra.mxu0 0
      %830 = vmatprep.subr.bf16.mxu0 0
      %831 = vmatpush2.bf16.xpose.msra.mxu0 0
      %832 = vmatprep.subr.bf16.mxu0 0
      %833 = vmatpush2.bf16.xpose.msra.mxu0 0
      %834 = vmatprep.subr.bf16.mxu0 0
      %835 = vmatpush2.bf16.xpose.msra.mxu0 0
      %836 = vmatprep.subr.bf16.mxu0 0
      %837 = vmatpush2.bf16.xpose.msra.mxu0 0
      %838 = vmatprep.subr.bf16.mxu0 0
      %839 = vmatpush2.bf16.xpose.msra.mxu0 0
      %840 = vmatprep.subr.bf16.mxu0 0
      %841 = vmatpush2.bf16.xpose.msra.mxu0 0
      %842 = vmatprep.mubr.bf16.mxu0 0
      %843 = vmatmul.mubr.bf16.gmra.mxu0 %v805
      %v844 = vpop.f32.mrf.mxu0
      %v845 = vadd.f32 %v498, %v844
      %v846 = vpop.f32.mrf.mxu0
      %v847 = vpop.f32.mrf.mxu0
      %v848 = vadd.f32 %v499, %v847
      %v849 = vpop.f32.mrf.mxu0
      %850 = vdwg.mxu0
      %852 = vrot.lane.b32.xlu0 %v497, 96
      %v853 = vpop.permute.xlu0 %852
      %v855 = vsel %vm503, %v497, 0
      %v858 = vsel %vm503, %v853, 0
      %860 = vmatprep.subr.bf16.mxu0 0
      %861 = vmatpush1.bf16.xpose.msra.mxu0 0
      %862 = vmatprep.subr.bf16.mxu0 0
      %863 = vmatpush1.bf16.xpose.msra.mxu0 0
      %864 = vmatprep.subr.bf16.mxu0 0
      %865 = vmatpush1.bf16.xpose.msra.mxu0 0
      %866 = vmatprep.subr.bf16.mxu0 0
      %867 = vmatpush1.bf16.xpose.msra.mxu0 0
      %868 = vmatprep.subr.bf16.mxu0 0
      %869 = vmatpush1.bf16.xpose.msra.mxu0 0
      %870 = vmatprep.subr.bf16.mxu0 0
      %871 = vmatpush1.bf16.xpose.msra.mxu0 0
      %872 = vmatprep.subr.bf16.mxu0 0
      %873 = vmatpush1.bf16.xpose.msra.mxu0 0
      %874 = vmatprep.subr.bf16.mxu0 0
      %875 = vmatpush1.bf16.xpose.msra.mxu0 %v858
      %876 = vmatprep.subr.bf16.mxu0 0
      %877 = vmatpush2.bf16.xpose.msra.mxu0 0
      %878 = vmatprep.subr.bf16.mxu0 0
      %879 = vmatpush2.bf16.xpose.msra.mxu0 0
      %880 = vmatprep.subr.bf16.mxu0 0
      %881 = vmatpush2.bf16.xpose.msra.mxu0 0
      %882 = vmatprep.subr.bf16.mxu0 0
      %883 = vmatpush2.bf16.xpose.msra.mxu0 0
      %884 = vmatprep.subr.bf16.mxu0 0
      %885 = vmatpush2.bf16.xpose.msra.mxu0 0
      %886 = vmatprep.subr.bf16.mxu0 0
      %887 = vmatpush2.bf16.xpose.msra.mxu0 0
      %888 = vmatprep.subr.bf16.mxu0 0
      %889 = vmatpush2.bf16.xpose.msra.mxu0 0
      %890 = vmatprep.subr.bf16.mxu0 0
      %891 = vmatpush2.bf16.xpose.msra.mxu0 0
      %892 = vmatprep.mubr.bf16.mxu0 0
      %893 = vmatmul.mubr.bf16.gmra.mxu0 %v855
      %v894 = vpop.f32.mrf.mxu0
      %v895 = vadd.f32 %v498, %v894
      %v896 = vpop.f32.mrf.mxu0
      %v897 = vpop.f32.mrf.mxu0
      %v898 = vadd.f32 %v499, %v897
      %v899 = vpop.f32.mrf.mxu0
      %900 = vdwg.mxu0
      %vm901 = vcmask 130048
      %v902 = vsel %vm901, %v545, -inf
      %903 = vmax.xlane.f32.xlu0 %v902
      %v904 = vpop.xlane.xlu0 %903
      %v905 = vsel %vm901, %v548, -inf
      %906 = vmax.xlane.f32.xlu0 %v905
      %v907 = vpop.xlane.xlu0 %906
      %v908 = vsel %vm901, %v595, -inf
      %909 = vmax.xlane.f32.xlu0 %v908
      %v910 = vpop.xlane.xlu0 %909
      %v911 = vsel %vm901, %v598, -inf
      %912 = vmax.xlane.f32.xlu0 %v911
      %v913 = vpop.xlane.xlu0 %912
      %v914 = vsel %vm901, %v645, -inf
      %915 = vmax.xlane.f32.xlu0 %v914
      %v916 = vpop.xlane.xlu0 %915
      %v917 = vsel %vm901, %v648, -inf
      %918 = vmax.xlane.f32.xlu0 %v917
      %v919 = vpop.xlane.xlu0 %918
      %v920 = vsel %vm901, %v695, -inf
      %921 = vmax.xlane.f32.xlu0 %v920
      %v922 = vpop.xlane.xlu0 %921
      %v923 = vsel %vm901, %v698, -inf
      %924 = vmax.xlane.f32.xlu0 %v923
      %v925 = vpop.xlane.xlu0 %924
      %v926 = vsel %vm901, %v745, -inf
      %927 = vmax.xlane.f32.xlu0 %v926
      %v928 = vpop.xlane.xlu0 %927
      %v929 = vsel %vm901, %v748, -inf
      %930 = vmax.xlane.f32.xlu0 %v929
      %v931 = vpop.xlane.xlu0 %930
      %v932 = vsel %vm901, %v795, -inf
      %933 = vmax.xlane.f32.xlu0 %v932
      %v934 = vpop.xlane.xlu0 %933
      %v935 = vsel %vm901, %v798, -inf
      %936 = vmax.xlane.f32.xlu0 %v935
      %v937 = vpop.xlane.xlu0 %936
      %v938 = vsel %vm901, %v845, -inf
      %939 = vmax.xlane.f32.xlu0 %v938
      %v940 = vpop.xlane.xlu0 %939
      %v941 = vsel %vm901, %v848, -inf
      %942 = vmax.xlane.f32.xlu0 %v941
      %v943 = vpop.xlane.xlu0 %942
      %v944 = vsel %vm901, %v895, -inf
      %945 = vmax.xlane.f32.xlu0 %v944
      %v946 = vpop.xlane.xlu0 %945
      %v947 = vsel %vm901, %v898, -inf
      %948 = vmax.xlane.f32.xlu0 %v947
      %v949 = vpop.xlane.xlu0 %948
      %v950 = vsub.f32 %v545, %v904
      %v951 = vsub.f32 %v548, %v907
      %v952 = vsub.f32 %v595, %v910
      %v953 = vsub.f32 %v598, %v913
      %v954 = vsub.f32 %v645, %v916
      %v955 = vsub.f32 %v648, %v919
      %v956 = vsub.f32 %v695, %v922
      %v957 = vsub.f32 %v698, %v925
      %v958 = vsub.f32 %v745, %v928
      %v959 = vsub.f32 %v748, %v931
      %v960 = vsub.f32 %v795, %v934
      %v961 = vsub.f32 %v798, %v937
      %v962 = vsub.f32 %v845, %v940
      %v963 = vsub.f32 %v848, %v943
      %v964 = vsub.f32 %v895, %v946
      %v965 = vsub.f32 %v898, %v949
      %v966 = vmul.f32 %v950, 1.442695
      %v967 = vpow.pop %v966
      %v968 = vmul.f32 %v951, 1.442695
      %v969 = vpow.pop %v968
      %v970 = vmul.f32 %v952, 1.442695
      %v971 = vpow.pop %v970
      %v972 = vmul.f32 %v953, 1.442695
      %v973 = vpow.pop %v972
      %v974 = vmul.f32 %v954, 1.442695
      %v975 = vpow.pop %v974
      %v976 = vmul.f32 %v955, 1.442695
      %v977 = vpow.pop %v976
      %v978 = vmul.f32 %v956, 1.442695
      %v979 = vpow.pop %v978
      %v980 = vmul.f32 %v957, 1.442695
      %v981 = vpow.pop %v980
      %v982 = vmul.f32 %v958, 1.442695
      %v983 = vpow.pop %v982
      %v984 = vmul.f32 %v959, 1.442695
      %v985 = vpow.pop %v984
      %v986 = vmul.f32 %v960, 1.442695
      %v987 = vpow.pop %v986
      %v988 = vmul.f32 %v961, 1.442695
      %v989 = vpow.pop %v988
      %v990 = vmul.f32 %v962, 1.442695
      %v991 = vpow.pop %v990
      %v992 = vmul.f32 %v963, 1.442695
      %v993 = vpow.pop %v992
      %v994 = vmul.f32 %v964, 1.442695
      %v995 = vpow.pop %v994
      %v996 = vmul.f32 %v965, 1.442695
      %v997 = vpow.pop %v996
      %v998 = vsel %vm901, %v967, 0.0
      %999 = vadd.xlane.f32.xlu0 %v998
      %v1000 = vpop.xlane.xlu0 %999
      %v1001 = vsel %vm901, %v969, 0.0
      %1002 = vadd.xlane.f32.xlu0 %v1001
      %v1003 = vpop.xlane.xlu0 %1002
      %v1004 = vsel %vm901, %v971, 0.0
      %1005 = vadd.xlane.f32.xlu0 %v1004
      %v1006 = vpop.xlane.xlu0 %1005
      %v1007 = vsel %vm901, %v973, 0.0
      %1008 = vadd.xlane.f32.xlu0 %v1007
      %v1009 = vpop.xlane.xlu0 %1008
      %v1010 = vsel %vm901, %v975, 0.0
      %1011 = vadd.xlane.f32.xlu0 %v1010
      %v1012 = vpop.xlane.xlu0 %1011
      %v1013 = vsel %vm901, %v977, 0.0
      %1014 = vadd.xlane.f32.xlu0 %v1013
      %v1015 = vpop.xlane.xlu0 %1014
      %v1016 = vsel %vm901, %v979, 0.0
      %1017 = vadd.xlane.f32.xlu0 %v1016
      %v1018 = vpop.xlane.xlu0 %1017
      %v1019 = vsel %vm901, %v981, 0.0
      %1020 = vadd.xlane.f32.xlu0 %v1019
      %v1021 = vpop.xlane.xlu0 %1020
      %v1022 = vsel %vm901, %v983, 0.0
      %1023 = vadd.xlane.f32.xlu0 %v1022
      %v1024 = vpop.xlane.xlu0 %1023
      %v1025 = vsel %vm901, %v985, 0.0
      %1026 = vadd.xlane.f32.xlu0 %v1025
      %v1027 = vpop.xlane.xlu0 %1026
      %v1028 = vsel %vm901, %v987, 0.0
      %1029 = vadd.xlane.f32.xlu0 %v1028
      %v1030 = vpop.xlane.xlu0 %1029
      %v1031 = vsel %vm901, %v989, 0.0
      %1032 = vadd.xlane.f32.xlu0 %v1031
      %v1033 = vpop.xlane.xlu0 %1032
      %v1034 = vsel %vm901, %v991, 0.0
      %1035 = vadd.xlane.f32.xlu0 %v1034
      %v1036 = vpop.xlane.xlu0 %1035
      %v1037 = vsel %vm901, %v993, 0.0
      %1038 = vadd.xlane.f32.xlu0 %v1037
      %v1039 = vpop.xlane.xlu0 %1038
      %v1040 = vsel %vm901, %v995, 0.0
      %1041 = vadd.xlane.f32.xlu0 %v1040
      %v1042 = vpop.xlane.xlu0 %1041
      %v1043 = vsel %vm901, %v997, 0.0
      %1044 = vadd.xlane.f32.xlu0 %v1043
      %v1045 = vpop.xlane.xlu0 %1044
      %v1046 = vrcp.pop %v1000
      %v1047 = vrcp.pop %v1003
      %v1048 = vrcp.pop %v1006
      %v1049 = vrcp.pop %v1009
      %v1050 = vrcp.pop %v1012
      %v1051 = vrcp.pop %v1015
      %v1052 = vrcp.pop %v1018
      %v1053 = vrcp.pop %v1021
      %v1054 = vrcp.pop %v1024
      %v1055 = vrcp.pop %v1027
      %v1056 = vrcp.pop %v1030
      %v1057 = vrcp.pop %v1033
      %v1058 = vrcp.pop %v1036
      %v1059 = vrcp.pop %v1039
      %v1060 = vrcp.pop %v1042
      %v1061 = vrcp.pop %v1045
      %v1062 = vmul.f32 %v967, %v1046
      %v1063 = vmul.f32 %v969, %v1047
      %v1064 = vmul.f32 %v971, %v1048
      %v1065 = vmul.f32 %v973, %v1049
      %v1066 = vmul.f32 %v975, %v1050
      %v1067 = vmul.f32 %v977, %v1051
      %v1068 = vmul.f32 %v979, %v1052
      %v1069 = vmul.f32 %v981, %v1053
      %v1070 = vmul.f32 %v983, %v1054
      %v1071 = vmul.f32 %v985, %v1055
      %v1072 = vmul.f32 %v987, %v1056
      %v1073 = vmul.f32 %v989, %v1057
      %v1074 = vmul.f32 %v991, %v1058
      %v1075 = vmul.f32 %v993, %v1059
      %v1076 = vmul.f32 %v995, %v1060
      %v1077 = vmul.f32 %v997, %v1061
      %v1078 = vpack.c.bf16 %v1063, %v1062
      %v1079 = vpack.c.bf16 %v1065, %v1064
      %v1080 = vpack.c.bf16 %v1067, %v1066
      %v1081 = vpack.c.bf16 %v1069, %v1068
      %v1082 = vpack.c.bf16 %v1071, %v1070
      %v1083 = vpack.c.bf16 %v1073, %v1072
      %v1084 = vpack.c.bf16 %v1075, %v1074
      %v1085 = vpack.c.bf16 %v1077, %v1076
      %1086 = vrot.lane.b32.xlu0 %v490, 64
      %v1087 = vpop.permute.xlu0 %1086
      %v1090 = vsel %vm901, %v1078, 0
      %1092 = vmatprep.subr.bf16.mxu0 0
      %1093 = vmatpush1.bf16.msra.mxu0 0
      %1094 = vmatprep.subr.bf16.mxu0 0
      %1095 = vmatpush1.bf16.msra.mxu0 0
      %1096 = vmatprep.subr.bf16.mxu0 0
      %1097 = vmatpush1.bf16.msra.mxu0 0
      %1098 = vmatprep.subr.bf16.mxu0 0
      %1099 = vmatpush1.bf16.msra.mxu0 0
      %1100 = vmatprep.subr.bf16.mxu0 0
      %1101 = vmatpush1.bf16.msra.mxu0 0
      %1102 = vmatprep.subr.bf16.mxu0 0
      %1103 = vmatpush1.bf16.msra.mxu0 0
      %1104 = vmatprep.subr.bf16.mxu0 0
      %1105 = vmatpush1.bf16.msra.mxu0 0
      %1106 = vmatprep.subr.bf16.mxu0 0
      %1107 = vmatpush1.bf16.msra.mxu0 %v1087
      %1108 = vmatprep.subr.bf16.mxu0 0
      %1109 = vmatpush2.bf16.msra.mxu0 0
      %1110 = vmatprep.subr.bf16.mxu0 0
      %1111 = vmatpush2.bf16.msra.mxu0 0
      %1112 = vmatprep.subr.bf16.mxu0 0
      %1113 = vmatpush2.bf16.msra.mxu0 0
      %1114 = vmatprep.subr.bf16.mxu0 0
      %1115 = vmatpush2.bf16.msra.mxu0 0
      %1116 = vmatprep.subr.bf16.mxu0 0
      %1117 = vmatpush2.bf16.msra.mxu0 0
      %1118 = vmatprep.subr.bf16.mxu0 0
      %1119 = vmatpush2.bf16.msra.mxu0 0
      %1120 = vmatprep.subr.bf16.mxu0 0
      %1121 = vmatpush2.bf16.msra.mxu0 0
      %1122 = vmatprep.subr.bf16.mxu0 0
      %1123 = vmatpush2.bf16.msra.mxu0 0
      %1124 = vmatprep.mubr.bf16.mxu0 0
      %1125 = vmatmul.mubr.bf16.gmra.mxu0 %v1090
      %v1126 = vpop.f32.mrf.mxu0
      %v1127 = vadd.f32 0.0, %v1126
      %v1128 = vpop.f32.mrf.mxu0
      %v1129 = vpop.f32.mrf.mxu0
      %v1130 = vadd.f32 0.0, %v1129
      %v1131 = vpop.f32.mrf.mxu0
      %1132 = vdwg.mxu0
      %1133 = vrot.lane.b32.xlu0 %v491, 64
      %v1134 = vpop.permute.xlu0 %1133
      %v1137 = vsel %vm901, %v1079, 0
      %1139 = vmatprep.subr.bf16.mxu0 0
      %1140 = vmatpush1.bf16.msra.mxu0 0
      %1141 = vmatprep.subr.bf16.mxu0 0
      %1142 = vmatpush1.bf16.msra.mxu0 0
      %1143 = vmatprep.subr.bf16.mxu0 0
      %1144 = vmatpush1.bf16.msra.mxu0 0
      %1145 = vmatprep.subr.bf16.mxu0 0
      %1146 = vmatpush1.bf16.msra.mxu0 0
      %1147 = vmatprep.subr.bf16.mxu0 0
      %1148 = vmatpush1.bf16.msra.mxu0 0
      %1149 = vmatprep.subr.bf16.mxu0 0
      %1150 = vmatpush1.bf16.msra.mxu0 0
      %1151 = vmatprep.subr.bf16.mxu0 0
      %1152 = vmatpush1.bf16.msra.mxu0 0
      %1153 = vmatprep.subr.bf16.mxu0 0
      %1154 = vmatpush1.bf16.msra.mxu0 %v1134
      %1155 = vmatprep.subr.bf16.mxu0 0
      %1156 = vmatpush2.bf16.msra.mxu0 0
      %1157 = vmatprep.subr.bf16.mxu0 0
      %1158 = vmatpush2.bf16.msra.mxu0 0
      %1159 = vmatprep.subr.bf16.mxu0 0
      %1160 = vmatpush2.bf16.msra.mxu0 0
      %1161 = vmatprep.subr.bf16.mxu0 0
      %1162 = vmatpush2.bf16.msra.mxu0 0
      %1163 = vmatprep.subr.bf16.mxu0 0
      %1164 = vmatpush2.bf16.msra.mxu0 0
      %1165 = vmatprep.subr.bf16.mxu0 0
      %1166 = vmatpush2.bf16.msra.mxu0 0
      %1167 = vmatprep.subr.bf16.mxu0 0
      %1168 = vmatpush2.bf16.msra.mxu0 0
      %1169 = vmatprep.subr.bf16.mxu0 0
      %1170 = vmatpush2.bf16.msra.mxu0 0
      %1171 = vmatprep.mubr.bf16.mxu0 0
      %1172 = vmatmul.mubr.bf16.gmra.mxu0 %v1137
      %v1173 = vpop.f32.mrf.mxu0
      %v1174 = vadd.f32 0.0, %v1173
      %v1175 = vpop.f32.mrf.mxu0
      %v1176 = vpop.f32.mrf.mxu0
      %v1177 = vadd.f32 0.0, %v1176
      %v1178 = vpop.f32.mrf.mxu0
      %1179 = vdwg.mxu0
      %1180 = vrot.lane.b32.xlu0 %v492, 64
      %v1181 = vpop.permute.xlu0 %1180
      %v1184 = vsel %vm901, %v1080, 0
      %1186 = vmatprep.subr.bf16.mxu0 0
      %1187 = vmatpush1.bf16.msra.mxu0 0
      %1188 = vmatprep.subr.bf16.mxu0 0
      %1189 = vmatpush1.bf16.msra.mxu0 0
      %1190 = vmatprep.subr.bf16.mxu0 0
      %1191 = vmatpush1.bf16.msra.mxu0 0
      %1192 = vmatprep.subr.bf16.mxu0 0
      %1193 = vmatpush1.bf16.msra.mxu0 0
      %1194 = vmatprep.subr.bf16.mxu0 0
      %1195 = vmatpush1.bf16.msra.mxu0 0
      %1196 = vmatprep.subr.bf16.mxu0 0
      %1197 = vmatpush1.bf16.msra.mxu0 0
      %1198 = vmatprep.subr.bf16.mxu0 0
      %1199 = vmatpush1.bf16.msra.mxu0 0
      %1200 = vmatprep.subr.bf16.mxu0 0
      %1201 = vmatpush1.bf16.msra.mxu0 %v1181
      %1202 = vmatprep.subr.bf16.mxu0 0
      %1203 = vmatpush2.bf16.msra.mxu0 0
      %1204 = vmatprep.subr.bf16.mxu0 0
      %1205 = vmatpush2.bf16.msra.mxu0 0
      %1206 = vmatprep.subr.bf16.mxu0 0
      %1207 = vmatpush2.bf16.msra.mxu0 0
      %1208 = vmatprep.subr.bf16.mxu0 0
      %1209 = vmatpush2.bf16.msra.mxu0 0
      %1210 = vmatprep.subr.bf16.mxu0 0
      %1211 = vmatpush2.bf16.msra.mxu0 0
      %1212 = vmatprep.subr.bf16.mxu0 0
      %1213 = vmatpush2.bf16.msra.mxu0 0
      %1214 = vmatprep.subr.bf16.mxu0 0
      %1215 = vmatpush2.bf16.msra.mxu0 0
      %1216 = vmatprep.subr.bf16.mxu0 0
      %1217 = vmatpush2.bf16.msra.mxu0 0
      %1218 = vmatprep.mubr.bf16.mxu0 0
      %1219 = vmatmul.mubr.bf16.gmra.mxu0 %v1184
      %v1220 = vpop.f32.mrf.mxu0
      %v1221 = vadd.f32 0.0, %v1220
      %v1222 = vpop.f32.mrf.mxu0
      %v1223 = vpop.f32.mrf.mxu0
      %v1224 = vadd.f32 0.0, %v1223
      %v1225 = vpop.f32.mrf.mxu0
      %1226 = vdwg.mxu0
      %1227 = vrot.lane.b32.xlu0 %v493, 64
      %v1228 = vpop.permute.xlu0 %1227
      %v1231 = vsel %vm901, %v1081, 0
      %1233 = vmatprep.subr.bf16.mxu0 0
      %1234 = vmatpush1.bf16.msra.mxu0 0
      %1235 = vmatprep.subr.bf16.mxu0 0
      %1236 = vmatpush1.bf16.msra.mxu0 0
      %1237 = vmatprep.subr.bf16.mxu0 0
      %1238 = vmatpush1.bf16.msra.mxu0 0
      %1239 = vmatprep.subr.bf16.mxu0 0
      %1240 = vmatpush1.bf16.msra.mxu0 0
      %1241 = vmatprep.subr.bf16.mxu0 0
      %1242 = vmatpush1.bf16.msra.mxu0 0
      %1243 = vmatprep.subr.bf16.mxu0 0
      %1244 = vmatpush1.bf16.msra.mxu0 0
      %1245 = vmatprep.subr.bf16.mxu0 0
      %1246 = vmatpush1.bf16.msra.mxu0 0
      %1247 = vmatprep.subr.bf16.mxu0 0
      %1248 = vmatpush1.bf16.msra.mxu0 %v1228
      %1249 = vmatprep.subr.bf16.mxu0 0
      %1250 = vmatpush2.bf16.msra.mxu0 0
      %1251 = vmatprep.subr.bf16.mxu0 0
      %1252 = vmatpush2.bf16.msra.mxu0 0
      %1253 = vmatprep.subr.bf16.mxu0 0
      %1254 = vmatpush2.bf16.msra.mxu0 0
      %1255 = vmatprep.subr.bf16.mxu0 0
      %1256 = vmatpush2.bf16.msra.mxu0 0
      %1257 = vmatprep.subr.bf16.mxu0 0
      %1258 = vmatpush2.bf16.msra.mxu0 0
      %1259 = vmatprep.subr.bf16.mxu0 0
      %1260 = vmatpush2.bf16.msra.mxu0 0
      %1261 = vmatprep.subr.bf16.mxu0 0
      %1262 = vmatpush2.bf16.msra.mxu0 0
      %1263 = vmatprep.subr.bf16.mxu0 0
      %1264 = vmatpush2.bf16.msra.mxu0 0
      %1265 = vmatprep.mubr.bf16.mxu0 0
      %1266 = vmatmul.mubr.bf16.gmra.mxu0 %v1231
      %v1267 = vpop.f32.mrf.mxu0
      %v1268 = vadd.f32 0.0, %v1267
      %v1269 = vpop.f32.mrf.mxu0
      %v1270 = vpop.f32.mrf.mxu0
      %v1271 = vadd.f32 0.0, %v1270
      %v1272 = vpop.f32.mrf.mxu0
      %1273 = vdwg.mxu0
      %1274 = vrot.lane.b32.xlu0 %v494, 64
      %v1275 = vpop.permute.xlu0 %1274
      %v1278 = vsel %vm901, %v1082, 0
      %1280 = vmatprep.subr.bf16.mxu0 0
      %1281 = vmatpush1.bf16.msra.mxu0 0
      %1282 = vmatprep.subr.bf16.mxu0 0
      %1283 = vmatpush1.bf16.msra.mxu0 0
      %1284 = vmatprep.subr.bf16.mxu0 0
      %1285 = vmatpush1.bf16.msra.mxu0 0
      %1286 = vmatprep.subr.bf16.mxu0 0
      %1287 = vmatpush1.bf16.msra.mxu0 0
      %1288 = vmatprep.subr.bf16.mxu0 0
      %1289 = vmatpush1.bf16.msra.mxu0 0
      %1290 = vmatprep.subr.bf16.mxu0 0
      %1291 = vmatpush1.bf16.msra.mxu0 0
      %1292 = vmatprep.subr.bf16.mxu0 0
      %1293 = vmatpush1.bf16.msra.mxu0 0
      %1294 = vmatprep.subr.bf16.mxu0 0
      %1295 = vmatpush1.bf16.msra.mxu0 %v1275
      %1296 = vmatprep.subr.bf16.mxu0 0
      %1297 = vmatpush2.bf16.msra.mxu0 0
      %1298 = vmatprep.subr.bf16.mxu0 0
      %1299 = vmatpush2.bf16.msra.mxu0 0
      %1300 = vmatprep.subr.bf16.mxu0 0
      %1301 = vmatpush2.bf16.msra.mxu0 0
      %1302 = vmatprep.subr.bf16.mxu0 0
      %1303 = vmatpush2.bf16.msra.mxu0 0
      %1304 = vmatprep.subr.bf16.mxu0 0
      %1305 = vmatpush2.bf16.msra.mxu0 0
      %1306 = vmatprep.subr.bf16.mxu0 0
      %1307 = vmatpush2.bf16.msra.mxu0 0
      %1308 = vmatprep.subr.bf16.mxu0 0
      %1309 = vmatpush2.bf16.msra.mxu0 0
      %1310 = vmatprep.subr.bf16.mxu0 0
      %1311 = vmatpush2.bf16.msra.mxu0 0
      %1312 = vmatprep.mubr.bf16.mxu0 0
      %1313 = vmatmul.mubr.bf16.gmra.mxu0 %v1278
      %v1314 = vpop.f32.mrf.mxu0
      %v1315 = vadd.f32 0.0, %v1314
      %v1316 = vpop.f32.mrf.mxu0
      %v1317 = vpop.f32.mrf.mxu0
      %v1318 = vadd.f32 0.0, %v1317
      %v1319 = vpop.f32.mrf.mxu0
      %1320 = vdwg.mxu0
      %1321 = vrot.lane.b32.xlu0 %v495, 64
      %v1322 = vpop.permute.xlu0 %1321
      %v1325 = vsel %vm901, %v1083, 0
      %1327 = vmatprep.subr.bf16.mxu0 0
      %1328 = vmatpush1.bf16.msra.mxu0 0
      %1329 = vmatprep.subr.bf16.mxu0 0
      %1330 = vmatpush1.bf16.msra.mxu0 0
      %1331 = vmatprep.subr.bf16.mxu0 0
      %1332 = vmatpush1.bf16.msra.mxu0 0
      %1333 = vmatprep.subr.bf16.mxu0 0
      %1334 = vmatpush1.bf16.msra.mxu0 0
      %1335 = vmatprep.subr.bf16.mxu0 0
      %1336 = vmatpush1.bf16.msra.mxu0 0
      %1337 = vmatprep.subr.bf16.mxu0 0
      %1338 = vmatpush1.bf16.msra.mxu0 0
      %1339 = vmatprep.subr.bf16.mxu0 0
      %1340 = vmatpush1.bf16.msra.mxu0 0
      %1341 = vmatprep.subr.bf16.mxu0 0
      %1342 = vmatpush1.bf16.msra.mxu0 %v1322
      %1343 = vmatprep.subr.bf16.mxu0 0
      %1344 = vmatpush2.bf16.msra.mxu0 0
      %1345 = vmatprep.subr.bf16.mxu0 0
      %1346 = vmatpush2.bf16.msra.mxu0 0
      %1347 = vmatprep.subr.bf16.mxu0 0
      %1348 = vmatpush2.bf16.msra.mxu0 0
      %1349 = vmatprep.subr.bf16.mxu0 0
      %1350 = vmatpush2.bf16.msra.mxu0 0
      %1351 = vmatprep.subr.bf16.mxu0 0
      %1352 = vmatpush2.bf16.msra.mxu0 0
      %1353 = vmatprep.subr.bf16.mxu0 0
      %1354 = vmatpush2.bf16.msra.mxu0 0
      %1355 = vmatprep.subr.bf16.mxu0 0
      %1356 = vmatpush2.bf16.msra.mxu0 0
      %1357 = vmatprep.subr.bf16.mxu0 0
      %1358 = vmatpush2.bf16.msra.mxu0 0
      %1359 = vmatprep.mubr.bf16.mxu0 0
      %1360 = vmatmul.mubr.bf16.gmra.mxu0 %v1325
      %v1361 = vpop.f32.mrf.mxu0
      %v1362 = vadd.f32 0.0, %v1361
      %v1363 = vpop.f32.mrf.mxu0
      %v1364 = vpop.f32.mrf.mxu0
      %v1365 = vadd.f32 0.0, %v1364
      %v1366 = vpop.f32.mrf.mxu0
      %1367 = vdwg.mxu0
      %1368 = vrot.lane.b32.xlu0 %v496, 64
      %v1369 = vpop.permute.xlu0 %1368
      %v1372 = vsel %vm901, %v1084, 0
      %1374 = vmatprep.subr.bf16.mxu0 0
      %1375 = vmatpush1.bf16.msra.mxu0 0
      %1376 = vmatprep.subr.bf16.mxu0 0
      %1377 = vmatpush1.bf16.msra.mxu0 0
      %1378 = vmatprep.subr.bf16.mxu0 0
      %1379 = vmatpush1.bf16.msra.mxu0 0
      %1380 = vmatprep.subr.bf16.mxu0 0
      %1381 = vmatpush1.bf16.msra.mxu0 0
      %1382 = vmatprep.subr.bf16.mxu0 0
      %1383 = vmatpush1.bf16.msra.mxu0 0
      %1384 = vmatprep.subr.bf16.mxu0 0
      %1385 = vmatpush1.bf16.msra.mxu0 0
      %1386 = vmatprep.subr.bf16.mxu0 0
      %1387 = vmatpush1.bf16.msra.mxu0 0
      %1388 = vmatprep.subr.bf16.mxu0 0
      %1389 = vmatpush1.bf16.msra.mxu0 %v1369
      %1390 = vmatprep.subr.bf16.mxu0 0
      %1391 = vmatpush2.bf16.msra.mxu0 0
      %1392 = vmatprep.subr.bf16.mxu0 0
      %1393 = vmatpush2.bf16.msra.mxu0 0
      %1394 = vmatprep.subr.bf16.mxu0 0
      %1395 = vmatpush2.bf16.msra.mxu0 0
      %1396 = vmatprep.subr.bf16.mxu0 0
      %1397 = vmatpush2.bf16.msra.mxu0 0
      %1398 = vmatprep.subr.bf16.mxu0 0
      %1399 = vmatpush2.bf16.msra.mxu0 0
      %1400 = vmatprep.subr.bf16.mxu0 0
      %1401 = vmatpush2.bf16.msra.mxu0 0
      %1402 = vmatprep.subr.bf16.mxu0 0
      %1403 = vmatpush2.bf16.msra.mxu0 0
      %1404 = vmatprep.subr.bf16.mxu0 0
      %1405 = vmatpush2.bf16.msra.mxu0 0
      %1406 = vmatprep.mubr.bf16.mxu0 0
      %1407 = vmatmul.mubr.bf16.gmra.mxu0 %v1372
      %v1408 = vpop.f32.mrf.mxu0
      %v1409 = vadd.f32 0.0, %v1408
      %v1410 = vpop.f32.mrf.mxu0
      %v1411 = vpop.f32.mrf.mxu0
      %v1412 = vadd.f32 0.0, %v1411
      %v1413 = vpop.f32.mrf.mxu0
      %1414 = vdwg.mxu0
      %1415 = vrot.lane.b32.xlu0 %v497, 64
      %v1416 = vpop.permute.xlu0 %1415
      %v1419 = vsel %vm901, %v1085, 0
      %1421 = vmatprep.subr.bf16.mxu0 0
      %1422 = vmatpush1.bf16.msra.mxu0 0
      %1423 = vmatprep.subr.bf16.mxu0 0
      %1424 = vmatpush1.bf16.msra.mxu0 0
      %1425 = vmatprep.subr.bf16.mxu0 0
      %1426 = vmatpush1.bf16.msra.mxu0 0
      %1427 = vmatprep.subr.bf16.mxu0 0
      %1428 = vmatpush1.bf16.msra.mxu0 0
      %1429 = vmatprep.subr.bf16.mxu0 0
      %1430 = vmatpush1.bf16.msra.mxu0 0
      %1431 = vmatprep.subr.bf16.mxu0 0
      %1432 = vmatpush1.bf16.msra.mxu0 0
      %1433 = vmatprep.subr.bf16.mxu0 0
      %1434 = vmatpush1.bf16.msra.mxu0 0
      %1435 = vmatprep.subr.bf16.mxu0 0
      %1436 = vmatpush1.bf16.msra.mxu0 %v1416
      %1437 = vmatprep.subr.bf16.mxu0 0
      %1438 = vmatpush2.bf16.msra.mxu0 0
      %1439 = vmatprep.subr.bf16.mxu0 0
      %1440 = vmatpush2.bf16.msra.mxu0 0
      %1441 = vmatprep.subr.bf16.mxu0 0
      %1442 = vmatpush2.bf16.msra.mxu0 0
      %1443 = vmatprep.subr.bf16.mxu0 0
      %1444 = vmatpush2.bf16.msra.mxu0 0
      %1445 = vmatprep.subr.bf16.mxu0 0
      %1446 = vmatpush2.bf16.msra.mxu0 0
      %1447 = vmatprep.subr.bf16.mxu0 0
      %1448 = vmatpush2.bf16.msra.mxu0 0
      %1449 = vmatprep.subr.bf16.mxu0 0
      %1450 = vmatpush2.bf16.msra.mxu0 0
      %1451 = vmatprep.subr.bf16.mxu0 0
      %1452 = vmatpush2.bf16.msra.mxu0 0
      %1453 = vmatprep.mubr.bf16.mxu0 0
      %1454 = vmatmul.mubr.bf16.gmra.mxu0 %v1419
      %v1455 = vpop.f32.mrf.mxu0
      %v1456 = vadd.f32 0.0, %v1455
      %v1457 = vpop.f32.mrf.mxu0
      %v1458 = vpop.f32.mrf.mxu0
      %v1459 = vadd.f32 0.0, %v1458
      %v1460 = vpop.f32.mrf.mxu0
      %1461 = vdwg.mxu0
      %1462 = vst.msk [vmem:[#allocation3] sm:$0xff] %vm503, %v1127
      %1463 = vst.msk [vmem:[#allocation3 + $0x8] sm:$0xff] %vm503, %v1130
      %1464 = vst.msk [vmem:[#allocation3 + $0x10] sm:$0xff] %vm503, %v1174
      %1465 = vst.msk [vmem:[#allocation3 + $0x18] sm:$0xff] %vm503, %v1177
      %1466 = vst.msk [vmem:[#allocation3 + $0x20] sm:$0xff] %vm503, %v1221
      %1467 = vst.msk [vmem:[#allocation3 + $0x28] sm:$0xff] %vm503, %v1224
      %1468 = vst.msk [vmem:[#allocation3 + $0x30] sm:$0xff] %vm503, %v1268
      %1469 = vst.msk [vmem:[#allocation3 + $0x38] sm:$0xff] %vm503, %v1271
      %1470 = vst.msk [vmem:[#allocation3 + $0x40] sm:$0xff] %vm503, %v1315
      %1471 = vst.msk [vmem:[#allocation3 + $0x48] sm:$0xff] %vm503, %v1318
      %1472 = vst.msk [vmem:[#allocation3 + $0x50] sm:$0xff] %vm503, %v1362
      %1473 = vst.msk [vmem:[#allocation3 + $0x58] sm:$0xff] %vm503, %v1365
      %1474 = vst.msk [vmem:[#allocation3 + $0x60] sm:$0xff] %vm503, %v1409
      %1475 = vst.msk [vmem:[#allocation3 + $0x68] sm:$0xff] %vm503, %v1412
      %1476 = vst.msk [vmem:[#allocation3 + $0x70] sm:$0xff] %vm503, %v1456
      %1477 = vst.msk [vmem:[#allocation3 + $0x78] sm:$0xff] %vm503, %v1459
      %v1478 = vld [vmem:[#allocation2] sm:$0xff]
      %v1479 = vld [vmem:[#allocation2 + $0x8] sm:$0xff]
      %v1480 = vld [vmem:[#allocation2 + $0x10] sm:$0xff]
      %v1481 = vld [vmem:[#allocation2 + $0x18] sm:$0xff]
      %v1482 = vld [vmem:[#allocation2 + $0x20] sm:$0xff]
      %v1483 = vld [vmem:[#allocation2 + $0x28] sm:$0xff]
      %v1484 = vld [vmem:[#allocation2 + $0x30] sm:$0xff]
      %v1485 = vld [vmem:[#allocation2 + $0x38] sm:$0xff]
      %v1486 = vld [vmem:[#allocation2 + $0x40] sm:$0xff]
      %v1487 = vld [vmem:[#allocation2 + $0x48] sm:$0xff]
      %v1488 = vld [vmem:[#allocation2 + $0x50] sm:$0xff]
      %v1489 = vld [vmem:[#allocation2 + $0x58] sm:$0xff]
      %v1490 = vld [vmem:[#allocation2 + $0x60] sm:$0xff]
      %v1491 = vld [vmem:[#allocation2 + $0x68] sm:$0xff]
      %v1492 = vld [vmem:[#allocation2 + $0x70] sm:$0xff]
      %v1493 = vld [vmem:[#allocation2 + $0x78] sm:$0xff]
      %v1494 = vpack.c.bf16 %v1479, %v1478
      %v1495 = vpack.c.bf16 %v1481, %v1480
      %v1496 = vpack.c.bf16 %v1483, %v1482
      %v1497 = vpack.c.bf16 %v1485, %v1484
      %v1498 = vpack.c.bf16 %v1487, %v1486
      %v1499 = vpack.c.bf16 %v1489, %v1488
      %v1500 = vpack.c.bf16 %v1491, %v1490
      %v1501 = vpack.c.bf16 %v1493, %v1492
      %s1502 = scalar_lea.vmem %s5, 16
      %v1503 = vld [vmem:[%s1502] sm:$0xff]
      %v1504 = vld [vmem:[%s1502 + $0x8] sm:$0xff]
      %1506 = vrot.lane.b32.xlu0 %v1494, 120
      %v1507 = vpop.permute.xlu0 %1506
      %1508 = vrot.lane.b32.xlu0 %v1494, 88
      %v1509 = vpop.permute.xlu0 %1508
      %v1511 = vsel %vm503, %v1507, 0
      %v1514 = vsel %vm503, %v1509, 0
      %1516 = vmatprep.subr.bf16.mxu0 0
      %1517 = vmatpush1.bf16.xpose.msra.mxu0 0
      %1518 = vmatprep.subr.bf16.mxu0 0
      %1519 = vmatpush1.bf16.xpose.msra.mxu0 0
      %1520 = vmatprep.subr.bf16.mxu0 0
      %1521 = vmatpush1.bf16.xpose.msra.mxu0 0
      %1522 = vmatprep.subr.bf16.mxu0 0
      %1523 = vmatpush1.bf16.xpose.msra.mxu0 0
      %1524 = vmatprep.subr.bf16.mxu0 0
      %1525 = vmatpush1.bf16.xpose.msra.mxu0 0
      %1526 = vmatprep.subr.bf16.mxu0 0
      %1527 = vmatpush1.bf16.xpose.msra.mxu0 0
      %1528 = vmatprep.subr.bf16.mxu0 0
      %1529 = vmatpush1.bf16.xpose.msra.mxu0 0
      %1530 = vmatprep.subr.bf16.mxu0 0
      %1531 = vmatpush1.bf16.xpose.msra.mxu0 %v1514
      %1532 = vmatprep.subr.bf16.mxu0 0
      %1533 = vmatpush2.bf16.xpose.msra.mxu0 0
      %1534 = vmatprep.subr.bf16.mxu0 0
      %1535 = vmatpush2.bf16.xpose.msra.mxu0 0
      %1536 = vmatprep.subr.bf16.mxu0 0
      %1537 = vmatpush2.bf16.xpose.msra.mxu0 0
      %1538 = vmatprep.subr.bf16.mxu0 0
      %1539 = vmatpush2.bf16.xpose.msra.mxu0 0
      %1540 = vmatprep.subr.bf16.mxu0 0
      %1541 = vmatpush2.bf16.xpose.msra.mxu0 0
      %1542 = vmatprep.subr.bf16.mxu0 0
      %1543 = vmatpush2.bf16.xpose.msra.mxu0 0
      %1544 = vmatprep.subr.bf16.mxu0 0
      %1545 = vmatpush2.bf16.xpose.msra.mxu0 0
      %1546 = vmatprep.subr.bf16.mxu0 0
      %1547 = vmatpush2.bf16.xpose.msra.mxu0 0
      %1548 = vmatprep.mubr.bf16.mxu0 0
      %1549 = vmatmul.mubr.bf16.gmra.mxu0 %v1511
      %v1550 = vpop.f32.mrf.mxu0
      %v1551 = vadd.f32 %v1503, %v1550
      %v1552 = vpop.f32.mrf.mxu0
      %v1553 = vpop.f32.mrf.mxu0
      %v1554 = vadd.f32 %v1504, %v1553
      %v1555 = vpop.f32.mrf.mxu0
      %1556 = vdwg.mxu0
      %1558 = vrot.lane.b32.xlu0 %v1495, 120
      %v1559 = vpop.permute.xlu0 %1558
      %1560 = vrot.lane.b32.xlu0 %v1495, 88
      %v1561 = vpop.permute.xlu0 %1560
      %v1563 = vsel %vm503, %v1559, 0
      %v1566 = vsel %vm503, %v1561, 0
      %1568 = vmatprep.subr.bf16.mxu0 0
      %1569 = vmatpush1.bf16.xpose.msra.mxu0 0
      %1570 = vmatprep.subr.bf16.mxu0 0
      %1571 = vmatpush1.bf16.xpose.msra.mxu0 0
      %1572 = vmatprep.subr.bf16.mxu0 0
      %1573 = vmatpush1.bf16.xpose.msra.mxu0 0
      %1574 = vmatprep.subr.bf16.mxu0 0
      %1575 = vmatpush1.bf16.xpose.msra.mxu0 0
      %1576 = vmatprep.subr.bf16.mxu0 0
      %1577 = vmatpush1.bf16.xpose.msra.mxu0 0
      %1578 = vmatprep.subr.bf16.mxu0 0
      %1579 = vmatpush1.bf16.xpose.msra.mxu0 0
      %1580 = vmatprep.subr.bf16.mxu0 0
      %1581 = vmatpush1.bf16.xpose.msra.mxu0 0
      %1582 = vmatprep.subr.bf16.mxu0 0
      %1583 = vmatpush1.bf16.xpose.msra.mxu0 %v1566
      %1584 = vmatprep.subr.bf16.mxu0 0
      %1585 = vmatpush2.bf16.xpose.msra.mxu0 0
      %1586 = vmatprep.subr.bf16.mxu0 0
      %1587 = vmatpush2.bf16.xpose.msra.mxu0 0
      %1588 = vmatprep.subr.bf16.mxu0 0
      %1589 = vmatpush2.bf16.xpose.msra.mxu0 0
      %1590 = vmatprep.subr.bf16.mxu0 0
      %1591 = vmatpush2.bf16.xpose.msra.mxu0 0
      %1592 = vmatprep.subr.bf16.mxu0 0
      %1593 = vmatpush2.bf16.xpose.msra.mxu0 0
      %1594 = vmatprep.subr.bf16.mxu0 0
      %1595 = vmatpush2.bf16.xpose.msra.mxu0 0
      %1596 = vmatprep.subr.bf16.mxu0 0
      %1597 = vmatpush2.bf16.xpose.msra.mxu0 0
      %1598 = vmatprep.subr.bf16.mxu0 0
      %1599 = vmatpush2.bf16.xpose.msra.mxu0 0
      %1600 = vmatprep.mubr.bf16.mxu0 0
      %1601 = vmatmul.mubr.bf16.gmra.mxu0 %v1563
      %v1602 = vpop.f32.mrf.mxu0
      %v1603 = vadd.f32 %v1503, %v1602
      %v1604 = vpop.f32.mrf.mxu0
      %v1605 = vpop.f32.mrf.mxu0
      %v1606 = vadd.f32 %v1504, %v1605
      %v1607 = vpop.f32.mrf.mxu0
      %1608 = vdwg.mxu0
      %1610 = vrot.lane.b32.xlu0 %v1496, 120
      %v1611 = vpop.permute.xlu0 %1610
      %1612 = vrot.lane.b32.xlu0 %v1496, 88
      %v1613 = vpop.permute.xlu0 %1612
      %v1615 = vsel %vm503, %v1611, 0
      %v1618 = vsel %vm503, %v1613, 0
      %1620 = vmatprep.subr.bf16.mxu0 0
      %1621 = vmatpush1.bf16.xpose.msra.mxu0 0
      %1622 = vmatprep.subr.bf16.mxu0 0
      %1623 = vmatpush1.bf16.xpose.msra.mxu0 0
      %1624 = vmatprep.subr.bf16.mxu0 0
      %1625 = vmatpush1.bf16.xpose.msra.mxu0 0
      %1626 = vmatprep.subr.bf16.mxu0 0
      %1627 = vmatpush1.bf16.xpose.msra.mxu0 0
      %1628 = vmatprep.subr.bf16.mxu0 0
      %1629 = vmatpush1.bf16.xpose.msra.mxu0 0
      %1630 = vmatprep.subr.bf16.mxu0 0
      %1631 = vmatpush1.bf16.xpose.msra.mxu0 0
      %1632 = vmatprep.subr.bf16.mxu0 0
      %1633 = vmatpush1.bf16.xpose.msra.mxu0 0
      %1634 = vmatprep.subr.bf16.mxu0 0
      %1635 = vmatpush1.bf16.xpose.msra.mxu0 %v1618
      %1636 = vmatprep.subr.bf16.mxu0 0
      %1637 = vmatpush2.bf16.xpose.msra.mxu0 0
      %1638 = vmatprep.subr.bf16.mxu0 0
      %1639 = vmatpush2.bf16.xpose.msra.mxu0 0
      %1640 = vmatprep.subr.bf16.mxu0 0
      %1641 = vmatpush2.bf16.xpose.msra.mxu0 0
      %1642 = vmatprep.subr.bf16.mxu0 0
      %1643 = vmatpush2.bf16.xpose.msra.mxu0 0
      %1644 = vmatprep.subr.bf16.mxu0 0
      %1645 = vmatpush2.bf16.xpose.msra.mxu0 0
      %1646 = vmatprep.subr.bf16.mxu0 0
      %1647 = vmatpush2.bf16.xpose.msra.mxu0 0
      %1648 = vmatprep.subr.bf16.mxu0 0
      %1649 = vmatpush2.bf16.xpose.msra.mxu0 0
      %1650 = vmatprep.subr.bf16.mxu0 0
      %1651 = vmatpush2.bf16.xpose.msra.mxu0 0
      %1652 = vmatprep.mubr.bf16.mxu0 0
      %1653 = vmatmul.mubr.bf16.gmra.mxu0 %v1615
      %v1654 = vpop.f32.mrf.mxu0
      %v1655 = vadd.f32 %v1503, %v1654
      %v1656 = vpop.f32.mrf.mxu0
      %v1657 = vpop.f32.mrf.mxu0
      %v1658 = vadd.f32 %v1504, %v1657
      %v1659 = vpop.f32.mrf.mxu0
      %1660 = vdwg.mxu0
      %1662 = vrot.lane.b32.xlu0 %v1497, 120
      %v1663 = vpop.permute.xlu0 %1662
      %1664 = vrot.lane.b32.xlu0 %v1497, 88
      %v1665 = vpop.permute.xlu0 %1664
      %v1667 = vsel %vm503, %v1663, 0
      %v1670 = vsel %vm503, %v1665, 0
      %1672 = vmatprep.subr.bf16.mxu0 0
      %1673 = vmatpush1.bf16.xpose.msra.mxu0 0
      %1674 = vmatprep.subr.bf16.mxu0 0
      %1675 = vmatpush1.bf16.xpose.msra.mxu0 0
      %1676 = vmatprep.subr.bf16.mxu0 0
      %1677 = vmatpush1.bf16.xpose.msra.mxu0 0
      %1678 = vmatprep.subr.bf16.mxu0 0
      %1679 = vmatpush1.bf16.xpose.msra.mxu0 0
      %1680 = vmatprep.subr.bf16.mxu0 0
      %1681 = vmatpush1.bf16.xpose.msra.mxu0 0
      %1682 = vmatprep.subr.bf16.mxu0 0
      %1683 = vmatpush1.bf16.xpose.msra.mxu0 0
      %1684 = vmatprep.subr.bf16.mxu0 0
      %1685 = vmatpush1.bf16.xpose.msra.mxu0 0
      %1686 = vmatprep.subr.bf16.mxu0 0
      %1687 = vmatpush1.bf16.xpose.msra.mxu0 %v1670
      %1688 = vmatprep.subr.bf16.mxu0 0
      %1689 = vmatpush2.bf16.xpose.msra.mxu0 0
      %1690 = vmatprep.subr.bf16.mxu0 0
      %1691 = vmatpush2.bf16.xpose.msra.mxu0 0
      %1692 = vmatprep.subr.bf16.mxu0 0
      %1693 = vmatpush2.bf16.xpose.msra.mxu0 0
      %1694 = vmatprep.subr.bf16.mxu0 0
      %1695 = vmatpush2.bf16.xpose.msra.mxu0 0
      %1696 = vmatprep.subr.bf16.mxu0 0
      %1697 = vmatpush2.bf16.xpose.msra.mxu0 0
      %1698 = vmatprep.subr.bf16.mxu0 0
      %1699 = vmatpush2.bf16.xpose.msra.mxu0 0
      %1700 = vmatprep.subr.bf16.mxu0 0
      %1701 = vmatpush2.bf16.xpose.msra.mxu0 0
      %1702 = vmatprep.subr.bf16.mxu0 0
      %1703 = vmatpush2.bf16.xpose.msra.mxu0 0
      %1704 = vmatprep.mubr.bf16.mxu0 0
      %1705 = vmatmul.mubr.bf16.gmra.mxu0 %v1667
      %v1706 = vpop.f32.mrf.mxu0
      %v1707 = vadd.f32 %v1503, %v1706
      %v1708 = vpop.f32.mrf.mxu0
      %v1709 = vpop.f32.mrf.mxu0
      %v1710 = vadd.f32 %v1504, %v1709
      %v1711 = vpop.f32.mrf.mxu0
      %1712 = vdwg.mxu0
      %1714 = vrot.lane.b32.xlu0 %v1498, 120
      %v1715 = vpop.permute.xlu0 %1714
      %1716 = vrot.lane.b32.xlu0 %v1498, 88
      %v1717 = vpop.permute.xlu0 %1716
      %v1719 = vsel %vm503, %v1715, 0
      %v1722 = vsel %vm503, %v1717, 0
      %1724 = vmatprep.subr.bf16.mxu0 0
      %1725 = vmatpush1.bf16.xpose.msra.mxu0 0
      %1726 = vmatprep.subr.bf16.mxu0 0
      %1727 = vmatpush1.bf16.xpose.msra.mxu0 0
      %1728 = vmatprep.subr.bf16.mxu0 0
      %1729 = vmatpush1.bf16.xpose.msra.mxu0 0
      %1730 = vmatprep.subr.bf16.mxu0 0
      %1731 = vmatpush1.bf16.xpose.msra.mxu0 0
      %1732 = vmatprep.subr.bf16.mxu0 0
      %1733 = vmatpush1.bf16.xpose.msra.mxu0 0
      %1734 = vmatprep.subr.bf16.mxu0 0
      %1735 = vmatpush1.bf16.xpose.msra.mxu0 0
      %1736 = vmatprep.subr.bf16.mxu0 0
      %1737 = vmatpush1.bf16.xpose.msra.mxu0 0
      %1738 = vmatprep.subr.bf16.mxu0 0
      %1739 = vmatpush1.bf16.xpose.msra.mxu0 %v1722
      %1740 = vmatprep.subr.bf16.mxu0 0
      %1741 = vmatpush2.bf16.xpose.msra.mxu0 0
      %1742 = vmatprep.subr.bf16.mxu0 0
      %1743 = vmatpush2.bf16.xpose.msra.mxu0 0
      %1744 = vmatprep.subr.bf16.mxu0 0
      %1745 = vmatpush2.bf16.xpose.msra.mxu0 0
      %1746 = vmatprep.subr.bf16.mxu0 0
      %1747 = vmatpush2.bf16.xpose.msra.mxu0 0
      %1748 = vmatprep.subr.bf16.mxu0 0
      %1749 = vmatpush2.bf16.xpose.msra.mxu0 0
      %1750 = vmatprep.subr.bf16.mxu0 0
      %1751 = vmatpush2.bf16.xpose.msra.mxu0 0
      %1752 = vmatprep.subr.bf16.mxu0 0
      %1753 = vmatpush2.bf16.xpose.msra.mxu0 0
      %1754 = vmatprep.subr.bf16.mxu0 0
      %1755 = vmatpush2.bf16.xpose.msra.mxu0 0
      %1756 = vmatprep.mubr.bf16.mxu0 0
      %1757 = vmatmul.mubr.bf16.gmra.mxu0 %v1719
      %v1758 = vpop.f32.mrf.mxu0
      %v1759 = vadd.f32 %v1503, %v1758
      %v1760 = vpop.f32.mrf.mxu0
      %v1761 = vpop.f32.mrf.mxu0
      %v1762 = vadd.f32 %v1504, %v1761
      %v1763 = vpop.f32.mrf.mxu0
      %1764 = vdwg.mxu0
      %1766 = vrot.lane.b32.xlu0 %v1499, 120
      %v1767 = vpop.permute.xlu0 %1766
      %1768 = vrot.lane.b32.xlu0 %v1499, 88
      %v1769 = vpop.permute.xlu0 %1768
      %v1771 = vsel %vm503, %v1767, 0
      %v1774 = vsel %vm503, %v1769, 0
      %1776 = vmatprep.subr.bf16.mxu0 0
      %1777 = vmatpush1.bf16.xpose.msra.mxu0 0
      %1778 = vmatprep.subr.bf16.mxu0 0
      %1779 = vmatpush1.bf16.xpose.msra.mxu0 0
      %1780 = vmatprep.subr.bf16.mxu0 0
      %1781 = vmatpush1.bf16.xpose.msra.mxu0 0
      %1782 = vmatprep.subr.bf16.mxu0 0
      %1783 = vmatpush1.bf16.xpose.msra.mxu0 0
      %1784 = vmatprep.subr.bf16.mxu0 0
      %1785 = vmatpush1.bf16.xpose.msra.mxu0 0
      %1786 = vmatprep.subr.bf16.mxu0 0
      %1787 = vmatpush1.bf16.xpose.msra.mxu0 0
      %1788 = vmatprep.subr.bf16.mxu0 0
      %1789 = vmatpush1.bf16.xpose.msra.mxu0 0
      %1790 = vmatprep.subr.bf16.mxu0 0
      %1791 = vmatpush1.bf16.xpose.msra.mxu0 %v1774
      %1792 = vmatprep.subr.bf16.mxu0 0
      %1793 = vmatpush2.bf16.xpose.msra.mxu0 0
      %1794 = vmatprep.subr.bf16.mxu0 0
      %1795 = vmatpush2.bf16.xpose.msra.mxu0 0
      %1796 = vmatprep.subr.bf16.mxu0 0
      %1797 = vmatpush2.bf16.xpose.msra.mxu0 0
      %1798 = vmatprep.subr.bf16.mxu0 0
      %1799 = vmatpush2.bf16.xpose.msra.mxu0 0
      %1800 = vmatprep.subr.bf16.mxu0 0
      %1801 = vmatpush2.bf16.xpose.msra.mxu0 0
      %1802 = vmatprep.subr.bf16.mxu0 0
      %1803 = vmatpush2.bf16.xpose.msra.mxu0 0
      %1804 = vmatprep.subr.bf16.mxu0 0
      %1805 = vmatpush2.bf16.xpose.msra.mxu0 0
      %1806 = vmatprep.subr.bf16.mxu0 0
      %1807 = vmatpush2.bf16.xpose.msra.mxu0 0
      %1808 = vmatprep.mubr.bf16.mxu0 0
      %1809 = vmatmul.mubr.bf16.gmra.mxu0 %v1771
      %v1810 = vpop.f32.mrf.mxu0
      %v1811 = vadd.f32 %v1503, %v1810
      %v1812 = vpop.f32.mrf.mxu0
      %v1813 = vpop.f32.mrf.mxu0
      %v1814 = vadd.f32 %v1504, %v1813
      %v1815 = vpop.f32.mrf.mxu0
      %1816 = vdwg.mxu0
      %1818 = vrot.lane.b32.xlu0 %v1500, 120
      %v1819 = vpop.permute.xlu0 %1818
      %1820 = vrot.lane.b32.xlu0 %v1500, 88
      %v1821 = vpop.permute.xlu0 %1820
      %v1823 = vsel %vm503, %v1819, 0
      %v1826 = vsel %vm503, %v1821, 0
      %1828 = vmatprep.subr.bf16.mxu0 0
      %1829 = vmatpush1.bf16.xpose.msra.mxu0 0
      %1830 = vmatprep.subr.bf16.mxu0 0
      %1831 = vmatpush1.bf16.xpose.msra.mxu0 0
      %1832 = vmatprep.subr.bf16.mxu0 0
      %1833 = vmatpush1.bf16.xpose.msra.mxu0 0
      %1834 = vmatprep.subr.bf16.mxu0 0
      %1835 = vmatpush1.bf16.xpose.msra.mxu0 0
      %1836 = vmatprep.subr.bf16.mxu0 0
      %1837 = vmatpush1.bf16.xpose.msra.mxu0 0
      %1838 = vmatprep.subr.bf16.mxu0 0
      %1839 = vmatpush1.bf16.xpose.msra.mxu0 0
      %1840 = vmatprep.subr.bf16.mxu0 0
      %1841 = vmatpush1.bf16.xpose.msra.mxu0 0
      %1842 = vmatprep.subr.bf16.mxu0 0
      %1843 = vmatpush1.bf16.xpose.msra.mxu0 %v1826
      %1844 = vmatprep.subr.bf16.mxu0 0
      %1845 = vmatpush2.bf16.xpose.msra.mxu0 0
      %1846 = vmatprep.subr.bf16.mxu0 0
      %1847 = vmatpush2.bf16.xpose.msra.mxu0 0
      %1848 = vmatprep.subr.bf16.mxu0 0
      %1849 = vmatpush2.bf16.xpose.msra.mxu0 0
      %1850 = vmatprep.subr.bf16.mxu0 0
      %1851 = vmatpush2.bf16.xpose.msra.mxu0 0
      %1852 = vmatprep.subr.bf16.mxu0 0
      %1853 = vmatpush2.bf16.xpose.msra.mxu0 0
      %1854 = vmatprep.subr.bf16.mxu0 0
      %1855 = vmatpush2.bf16.xpose.msra.mxu0 0
      %1856 = vmatprep.subr.bf16.mxu0 0
      %1857 = vmatpush2.bf16.xpose.msra.mxu0 0
      %1858 = vmatprep.subr.bf16.mxu0 0
      %1859 = vmatpush2.bf16.xpose.msra.mxu0 0
      %1860 = vmatprep.mubr.bf16.mxu0 0
      %1861 = vmatmul.mubr.bf16.gmra.mxu0 %v1823
      %v1862 = vpop.f32.mrf.mxu0
      %v1863 = vadd.f32 %v1503, %v1862
      %v1864 = vpop.f32.mrf.mxu0
      %v1865 = vpop.f32.mrf.mxu0
      %v1866 = vadd.f32 %v1504, %v1865
      %v1867 = vpop.f32.mrf.mxu0
      %1868 = vdwg.mxu0
      %1870 = vrot.lane.b32.xlu0 %v1501, 120
      %v1871 = vpop.permute.xlu0 %1870
      %1872 = vrot.lane.b32.xlu0 %v1501, 88
      %v1873 = vpop.permute.xlu0 %1872
      %v1875 = vsel %vm503, %v1871, 0
      %v1878 = vsel %vm503, %v1873, 0
      %1880 = vmatprep.subr.bf16.mxu0 0
      %1881 = vmatpush1.bf16.xpose.msra.mxu0 0
      %1882 = vmatprep.subr.bf16.mxu0 0
      %1883 = vmatpush1.bf16.xpose.msra.mxu0 0
      %1884 = vmatprep.subr.bf16.mxu0 0
      %1885 = vmatpush1.bf16.xpose.msra.mxu0 0
      %1886 = vmatprep.subr.bf16.mxu0 0
      %1887 = vmatpush1.bf16.xpose.msra.mxu0 0
      %1888 = vmatprep.subr.bf16.mxu0 0
      %1889 = vmatpush1.bf16.xpose.msra.mxu0 0
      %1890 = vmatprep.subr.bf16.mxu0 0
      %1891 = vmatpush1.bf16.xpose.msra.mxu0 0
      %1892 = vmatprep.subr.bf16.mxu0 0
      %1893 = vmatpush1.bf16.xpose.msra.mxu0 0
      %1894 = vmatprep.subr.bf16.mxu0 0
      %1895 = vmatpush1.bf16.xpose.msra.mxu0 %v1878
      %1896 = vmatprep.subr.bf16.mxu0 0
      %1897 = vmatpush2.bf16.xpose.msra.mxu0 0
      %1898 = vmatprep.subr.bf16.mxu0 0
      %1899 = vmatpush2.bf16.xpose.msra.mxu0 0
      %1900 = vmatprep.subr.bf16.mxu0 0
      %1901 = vmatpush2.bf16.xpose.msra.mxu0 0
      %1902 = vmatprep.subr.bf16.mxu0 0
      %1903 = vmatpush2.bf16.xpose.msra.mxu0 0
      %1904 = vmatprep.subr.bf16.mxu0 0
      %1905 = vmatpush2.bf16.xpose.msra.mxu0 0
      %1906 = vmatprep.subr.bf16.mxu0 0
      %1907 = vmatpush2.bf16.xpose.msra.mxu0 0
      %1908 = vmatprep.subr.bf16.mxu0 0
      %1909 = vmatpush2.bf16.xpose.msra.mxu0 0
      %1910 = vmatprep.subr.bf16.mxu0 0
      %1911 = vmatpush2.bf16.xpose.msra.mxu0 0
      %1912 = vmatprep.mubr.bf16.mxu0 0
      %1913 = vmatmul.mubr.bf16.gmra.mxu0 %v1875
      %v1914 = vpop.f32.mrf.mxu0
      %v1915 = vadd.f32 %v1503, %v1914
      %v1916 = vpop.f32.mrf.mxu0
      %v1917 = vpop.f32.mrf.mxu0
      %v1918 = vadd.f32 %v1504, %v1917
      %v1919 = vpop.f32.mrf.mxu0
      %1920 = vdwg.mxu0
      %v1921 = vsel %vm901, %v1551, -inf
      %1922 = vmax.xlane.f32.xlu0 %v1921
      %v1923 = vpop.xlane.xlu0 %1922
      %v1924 = vsel %vm901, %v1554, -inf
      %1925 = vmax.xlane.f32.xlu0 %v1924
      %v1926 = vpop.xlane.xlu0 %1925
      %v1927 = vsel %vm901, %v1603, -inf
      %1928 = vmax.xlane.f32.xlu0 %v1927
      %v1929 = vpop.xlane.xlu0 %1928
      %v1930 = vsel %vm901, %v1606, -inf
      %1931 = vmax.xlane.f32.xlu0 %v1930
      %v1932 = vpop.xlane.xlu0 %1931
      %v1933 = vsel %vm901, %v1655, -inf
      %1934 = vmax.xlane.f32.xlu0 %v1933
      %v1935 = vpop.xlane.xlu0 %1934
      %v1936 = vsel %vm901, %v1658, -inf
      %1937 = vmax.xlane.f32.xlu0 %v1936
      %v1938 = vpop.xlane.xlu0 %1937
      %v1939 = vsel %vm901, %v1707, -inf
      %1940 = vmax.xlane.f32.xlu0 %v1939
      %v1941 = vpop.xlane.xlu0 %1940
      %v1942 = vsel %vm901, %v1710, -inf
      %1943 = vmax.xlane.f32.xlu0 %v1942
      %v1944 = vpop.xlane.xlu0 %1943
      %v1945 = vsel %vm901, %v1759, -inf
      %1946 = vmax.xlane.f32.xlu0 %v1945
      %v1947 = vpop.xlane.xlu0 %1946
      %v1948 = vsel %vm901, %v1762, -inf
      %1949 = vmax.xlane.f32.xlu0 %v1948
      %v1950 = vpop.xlane.xlu0 %1949
      %v1951 = vsel %vm901, %v1811, -inf
      %1952 = vmax.xlane.f32.xlu0 %v1951
      %v1953 = vpop.xlane.xlu0 %1952
      %v1954 = vsel %vm901, %v1814, -inf
      %1955 = vmax.xlane.f32.xlu0 %v1954
      %v1956 = vpop.xlane.xlu0 %1955
      %v1957 = vsel %vm901, %v1863, -inf
      %1958 = vmax.xlane.f32.xlu0 %v1957
      %v1959 = vpop.xlane.xlu0 %1958
      %v1960 = vsel %vm901, %v1866, -inf
      %1961 = vmax.xlane.f32.xlu0 %v1960
      %v1962 = vpop.xlane.xlu0 %1961
      %v1963 = vsel %vm901, %v1915, -inf
      %1964 = vmax.xlane.f32.xlu0 %v1963
      %v1965 = vpop.xlane.xlu0 %1964
      %v1966 = vsel %vm901, %v1918, -inf
      %1967 = vmax.xlane.f32.xlu0 %v1966
      %v1968 = vpop.xlane.xlu0 %1967
      %v1969 = vsub.f32 %v1551, %v1923
      %v1970 = vsub.f32 %v1554, %v1926
      %v1971 = vsub.f32 %v1603, %v1929
      %v1972 = vsub.f32 %v1606, %v1932
      %v1973 = vsub.f32 %v1655, %v1935
      %v1974 = vsub.f32 %v1658, %v1938
      %v1975 = vsub.f32 %v1707, %v1941
      %v1976 = vsub.f32 %v1710, %v1944
      %v1977 = vsub.f32 %v1759, %v1947
      %v1978 = vsub.f32 %v1762, %v1950
      %v1979 = vsub.f32 %v1811, %v1953
      %v1980 = vsub.f32 %v1814, %v1956
      %v1981 = vsub.f32 %v1863, %v1959
      %v1982 = vsub.f32 %v1866, %v1962
      %v1983 = vsub.f32 %v1915, %v1965
      %v1984 = vsub.f32 %v1918, %v1968
      %v1985 = vmul.f32 %v1969, 1.442695
      %v1986 = vpow.pop %v1985
      %v1987 = vmul.f32 %v1970, 1.442695
      %v1988 = vpow.pop %v1987
      %v1989 = vmul.f32 %v1971, 1.442695
      %v1990 = vpow.pop %v1989
      %v1991 = vmul.f32 %v1972, 1.442695
      %v1992 = vpow.pop %v1991
      %v1993 = vmul.f32 %v1973, 1.442695
      %v1994 = vpow.pop %v1993
      %v1995 = vmul.f32 %v1974, 1.442695
      %v1996 = vpow.pop %v1995
      %v1997 = vmul.f32 %v1975, 1.442695
      %v1998 = vpow.pop %v1997
      %v1999 = vmul.f32 %v1976, 1.442695
      %v2000 = vpow.pop %v1999
      %v2001 = vmul.f32 %v1977, 1.442695
      %v2002 = vpow.pop %v2001
      %v2003 = vmul.f32 %v1978, 1.442695
      %v2004 = vpow.pop %v2003
      %v2005 = vmul.f32 %v1979, 1.442695
      %v2006 = vpow.pop %v2005
      %v2007 = vmul.f32 %v1980, 1.442695
      %v2008 = vpow.pop %v2007
      %v2009 = vmul.f32 %v1981, 1.442695
      %v2010 = vpow.pop %v2009
      %v2011 = vmul.f32 %v1982, 1.442695
      %v2012 = vpow.pop %v2011
      %v2013 = vmul.f32 %v1983, 1.442695
      %v2014 = vpow.pop %v2013
      %v2015 = vmul.f32 %v1984, 1.442695
      %v2016 = vpow.pop %v2015
      %v2017 = vsel %vm901, %v1986, 0.0
      %2018 = vadd.xlane.f32.xlu0 %v2017
      %v2019 = vpop.xlane.xlu0 %2018
      %v2020 = vsel %vm901, %v1988, 0.0
      %2021 = vadd.xlane.f32.xlu0 %v2020
      %v2022 = vpop.xlane.xlu0 %2021
      %v2023 = vsel %vm901, %v1990, 0.0
      %2024 = vadd.xlane.f32.xlu0 %v2023
      %v2025 = vpop.xlane.xlu0 %2024
      %v2026 = vsel %vm901, %v1992, 0.0
      %2027 = vadd.xlane.f32.xlu0 %v2026
      %v2028 = vpop.xlane.xlu0 %2027
      %v2029 = vsel %vm901, %v1994, 0.0
      %2030 = vadd.xlane.f32.xlu0 %v2029
      %v2031 = vpop.xlane.xlu0 %2030
      %v2032 = vsel %vm901, %v1996, 0.0
      %2033 = vadd.xlane.f32.xlu0 %v2032
      %v2034 = vpop.xlane.xlu0 %2033
      %v2035 = vsel %vm901, %v1998, 0.0
      %2036 = vadd.xlane.f32.xlu0 %v2035
      %v2037 = vpop.xlane.xlu0 %2036
      %v2038 = vsel %vm901, %v2000, 0.0
      %2039 = vadd.xlane.f32.xlu0 %v2038
      %v2040 = vpop.xlane.xlu0 %2039
      %v2041 = vsel %vm901, %v2002, 0.0
      %2042 = vadd.xlane.f32.xlu0 %v2041
      %v2043 = vpop.xlane.xlu0 %2042
      %v2044 = vsel %vm901, %v2004, 0.0
      %2045 = vadd.xlane.f32.xlu0 %v2044
      %v2046 = vpop.xlane.xlu0 %2045
      %v2047 = vsel %vm901, %v2006, 0.0
      %2048 = vadd.xlane.f32.xlu0 %v2047
      %v2049 = vpop.xlane.xlu0 %2048
      %v2050 = vsel %vm901, %v2008, 0.0
      %2051 = vadd.xlane.f32.xlu0 %v2050
      %v2052 = vpop.xlane.xlu0 %2051
      %v2053 = vsel %vm901, %v2010, 0.0
      %2054 = vadd.xlane.f32.xlu0 %v2053
      %v2055 = vpop.xlane.xlu0 %2054
      %v2056 = vsel %vm901, %v2012, 0.0
      %2057 = vadd.xlane.f32.xlu0 %v2056
      %v2058 = vpop.xlane.xlu0 %2057
      %v2059 = vsel %vm901, %v2014, 0.0
      %2060 = vadd.xlane.f32.xlu0 %v2059
      %v2061 = vpop.xlane.xlu0 %2060
      %v2062 = vsel %vm901, %v2016, 0.0
      %2063 = vadd.xlane.f32.xlu0 %v2062
      %v2064 = vpop.xlane.xlu0 %2063
      %v2065 = vrcp.pop %v2019
      %v2066 = vrcp.pop %v2022
      %v2067 = vrcp.pop %v2025
      %v2068 = vrcp.pop %v2028
      %v2069 = vrcp.pop %v2031
      %v2070 = vrcp.pop %v2034
      %v2071 = vrcp.pop %v2037
      %v2072 = vrcp.pop %v2040
      %v2073 = vrcp.pop %v2043
      %v2074 = vrcp.pop %v2046
      %v2075 = vrcp.pop %v2049
      %v2076 = vrcp.pop %v2052
      %v2077 = vrcp.pop %v2055
      %v2078 = vrcp.pop %v2058
      %v2079 = vrcp.pop %v2061
      %v2080 = vrcp.pop %v2064
      %v2081 = vmul.f32 %v1986, %v2065
      %v2082 = vmul.f32 %v1988, %v2066
      %v2083 = vmul.f32 %v1990, %v2067
      %v2084 = vmul.f32 %v1992, %v2068
      %v2085 = vmul.f32 %v1994, %v2069
      %v2086 = vmul.f32 %v1996, %v2070
      %v2087 = vmul.f32 %v1998, %v2071
      %v2088 = vmul.f32 %v2000, %v2072
      %v2089 = vmul.f32 %v2002, %v2073
      %v2090 = vmul.f32 %v2004, %v2074
      %v2091 = vmul.f32 %v2006, %v2075
      %v2092 = vmul.f32 %v2008, %v2076
      %v2093 = vmul.f32 %v2010, %v2077
      %v2094 = vmul.f32 %v2012, %v2078
      %v2095 = vmul.f32 %v2014, %v2079
      %v2096 = vmul.f32 %v2016, %v2080
      %v2097 = vpack.c.bf16 %v2082, %v2081
      %v2098 = vpack.c.bf16 %v2084, %v2083
      %v2099 = vpack.c.bf16 %v2086, %v2085
      %v2100 = vpack.c.bf16 %v2088, %v2087
      %v2101 = vpack.c.bf16 %v2090, %v2089
      %v2102 = vpack.c.bf16 %v2092, %v2091
      %v2103 = vpack.c.bf16 %v2094, %v2093
      %v2104 = vpack.c.bf16 %v2096, %v2095
      %2105 = vrot.lane.b32.xlu0 %v1494, 56
      %v2106 = vpop.permute.xlu0 %2105
      %v2109 = vsel %vm901, %v2097, 0
      %2111 = vmatprep.subr.bf16.mxu0 0
      %2112 = vmatpush1.bf16.msra.mxu0 0
      %2113 = vmatprep.subr.bf16.mxu0 0
      %2114 = vmatpush1.bf16.msra.mxu0 0
      %2115 = vmatprep.subr.bf16.mxu0 0
      %2116 = vmatpush1.bf16.msra.mxu0 0
      %2117 = vmatprep.subr.bf16.mxu0 0
      %2118 = vmatpush1.bf16.msra.mxu0 0
      %2119 = vmatprep.subr.bf16.mxu0 0
      %2120 = vmatpush1.bf16.msra.mxu0 0
      %2121 = vmatprep.subr.bf16.mxu0 0
      %2122 = vmatpush1.bf16.msra.mxu0 0
      %2123 = vmatprep.subr.bf16.mxu0 0
      %2124 = vmatpush1.bf16.msra.mxu0 0
      %2125 = vmatprep.subr.bf16.mxu0 0
      %2126 = vmatpush1.bf16.msra.mxu0 %v2106
      %2127 = vmatprep.subr.bf16.mxu0 0
      %2128 = vmatpush2.bf16.msra.mxu0 0
      %2129 = vmatprep.subr.bf16.mxu0 0
      %2130 = vmatpush2.bf16.msra.mxu0 0
      %2131 = vmatprep.subr.bf16.mxu0 0
      %2132 = vmatpush2.bf16.msra.mxu0 0
      %2133 = vmatprep.subr.bf16.mxu0 0
      %2134 = vmatpush2.bf16.msra.mxu0 0
      %2135 = vmatprep.subr.bf16.mxu0 0
      %2136 = vmatpush2.bf16.msra.mxu0 0
      %2137 = vmatprep.subr.bf16.mxu0 0
      %2138 = vmatpush2.bf16.msra.mxu0 0
      %2139 = vmatprep.subr.bf16.mxu0 0
      %2140 = vmatpush2.bf16.msra.mxu0 0
      %2141 = vmatprep.subr.bf16.mxu0 0
      %2142 = vmatpush2.bf16.msra.mxu0 0
      %2143 = vmatprep.mubr.bf16.mxu0 0
      %2144 = vmatmul.mubr.bf16.gmra.mxu0 %v2109
      %v2145 = vpop.f32.mrf.mxu0
      %v2146 = vadd.f32 0.0, %v2145
      %v2147 = vpop.f32.mrf.mxu0
      %v2148 = vpop.f32.mrf.mxu0
      %v2149 = vadd.f32 0.0, %v2148
      %v2150 = vpop.f32.mrf.mxu0
      %2151 = vdwg.mxu0
      %2152 = vrot.lane.b32.xlu0 %v1495, 56
      %v2153 = vpop.permute.xlu0 %2152
      %v2156 = vsel %vm901, %v2098, 0
      %2158 = vmatprep.subr.bf16.mxu0 0
      %2159 = vmatpush1.bf16.msra.mxu0 0
      %2160 = vmatprep.subr.bf16.mxu0 0
      %2161 = vmatpush1.bf16.msra.mxu0 0
      %2162 = vmatprep.subr.bf16.mxu0 0
      %2163 = vmatpush1.bf16.msra.mxu0 0
      %2164 = vmatprep.subr.bf16.mxu0 0
      %2165 = vmatpush1.bf16.msra.mxu0 0
      %2166 = vmatprep.subr.bf16.mxu0 0
      %2167 = vmatpush1.bf16.msra.mxu0 0
      %2168 = vmatprep.subr.bf16.mxu0 0
      %2169 = vmatpush1.bf16.msra.mxu0 0
      %2170 = vmatprep.subr.bf16.mxu0 0
      %2171 = vmatpush1.bf16.msra.mxu0 0
      %2172 = vmatprep.subr.bf16.mxu0 0
      %2173 = vmatpush1.bf16.msra.mxu0 %v2153
      %2174 = vmatprep.subr.bf16.mxu0 0
      %2175 = vmatpush2.bf16.msra.mxu0 0
      %2176 = vmatprep.subr.bf16.mxu0 0
      %2177 = vmatpush2.bf16.msra.mxu0 0
      %2178 = vmatprep.subr.bf16.mxu0 0
      %2179 = vmatpush2.bf16.msra.mxu0 0
      %2180 = vmatprep.subr.bf16.mxu0 0
      %2181 = vmatpush2.bf16.msra.mxu0 0
      %2182 = vmatprep.subr.bf16.mxu0 0
      %2183 = vmatpush2.bf16.msra.mxu0 0
      %2184 = vmatprep.subr.bf16.mxu0 0
      %2185 = vmatpush2.bf16.msra.mxu0 0
      %2186 = vmatprep.subr.bf16.mxu0 0
      %2187 = vmatpush2.bf16.msra.mxu0 0
      %2188 = vmatprep.subr.bf16.mxu0 0
      %2189 = vmatpush2.bf16.msra.mxu0 0
      %2190 = vmatprep.mubr.bf16.mxu0 0
      %2191 = vmatmul.mubr.bf16.gmra.mxu0 %v2156
      %v2192 = vpop.f32.mrf.mxu0
      %v2193 = vadd.f32 0.0, %v2192
      %v2194 = vpop.f32.mrf.mxu0
      %v2195 = vpop.f32.mrf.mxu0
      %v2196 = vadd.f32 0.0, %v2195
      %v2197 = vpop.f32.mrf.mxu0
      %2198 = vdwg.mxu0
      %2199 = vrot.lane.b32.xlu0 %v1496, 56
      %v2200 = vpop.permute.xlu0 %2199
      %v2203 = vsel %vm901, %v2099, 0
      %2205 = vmatprep.subr.bf16.mxu0 0
      %2206 = vmatpush1.bf16.msra.mxu0 0
      %2207 = vmatprep.subr.bf16.mxu0 0
      %2208 = vmatpush1.bf16.msra.mxu0 0
      %2209 = vmatprep.subr.bf16.mxu0 0
      %2210 = vmatpush1.bf16.msra.mxu0 0
      %2211 = vmatprep.subr.bf16.mxu0 0
      %2212 = vmatpush1.bf16.msra.mxu0 0
      %2213 = vmatprep.subr.bf16.mxu0 0
      %2214 = vmatpush1.bf16.msra.mxu0 0
      %2215 = vmatprep.subr.bf16.mxu0 0
      %2216 = vmatpush1.bf16.msra.mxu0 0
      %2217 = vmatprep.subr.bf16.mxu0 0
      %2218 = vmatpush1.bf16.msra.mxu0 0
      %2219 = vmatprep.subr.bf16.mxu0 0
      %2220 = vmatpush1.bf16.msra.mxu0 %v2200
      %2221 = vmatprep.subr.bf16.mxu0 0
      %2222 = vmatpush2.bf16.msra.mxu0 0
      %2223 = vmatprep.subr.bf16.mxu0 0
      %2224 = vmatpush2.bf16.msra.mxu0 0
      %2225 = vmatprep.subr.bf16.mxu0 0
      %2226 = vmatpush2.bf16.msra.mxu0 0
      %2227 = vmatprep.subr.bf16.mxu0 0
      %2228 = vmatpush2.bf16.msra.mxu0 0
      %2229 = vmatprep.subr.bf16.mxu0 0
      %2230 = vmatpush2.bf16.msra.mxu0 0
      %2231 = vmatprep.subr.bf16.mxu0 0
      %2232 = vmatpush2.bf16.msra.mxu0 0
      %2233 = vmatprep.subr.bf16.mxu0 0
      %2234 = vmatpush2.bf16.msra.mxu0 0
      %2235 = vmatprep.subr.bf16.mxu0 0
      %2236 = vmatpush2.bf16.msra.mxu0 0
      %2237 = vmatprep.mubr.bf16.mxu0 0
      %2238 = vmatmul.mubr.bf16.gmra.mxu0 %v2203
      %v2239 = vpop.f32.mrf.mxu0
      %v2240 = vadd.f32 0.0, %v2239
      %v2241 = vpop.f32.mrf.mxu0
      %v2242 = vpop.f32.mrf.mxu0
      %v2243 = vadd.f32 0.0, %v2242
      %v2244 = vpop.f32.mrf.mxu0
      %2245 = vdwg.mxu0
      %2246 = vrot.lane.b32.xlu0 %v1497, 56
      %v2247 = vpop.permute.xlu0 %2246
      %v2250 = vsel %vm901, %v2100, 0
      %2252 = vmatprep.subr.bf16.mxu0 0
      %2253 = vmatpush1.bf16.msra.mxu0 0
      %2254 = vmatprep.subr.bf16.mxu0 0
      %2255 = vmatpush1.bf16.msra.mxu0 0
      %2256 = vmatprep.subr.bf16.mxu0 0
      %2257 = vmatpush1.bf16.msra.mxu0 0
      %2258 = vmatprep.subr.bf16.mxu0 0
      %2259 = vmatpush1.bf16.msra.mxu0 0
      %2260 = vmatprep.subr.bf16.mxu0 0
      %2261 = vmatpush1.bf16.msra.mxu0 0
      %2262 = vmatprep.subr.bf16.mxu0 0
      %2263 = vmatpush1.bf16.msra.mxu0 0
      %2264 = vmatprep.subr.bf16.mxu0 0
      %2265 = vmatpush1.bf16.msra.mxu0 0
      %2266 = vmatprep.subr.bf16.mxu0 0
      %2267 = vmatpush1.bf16.msra.mxu0 %v2247
      %2268 = vmatprep.subr.bf16.mxu0 0
      %2269 = vmatpush2.bf16.msra.mxu0 0
      %2270 = vmatprep.subr.bf16.mxu0 0
      %2271 = vmatpush2.bf16.msra.mxu0 0
      %2272 = vmatprep.subr.bf16.mxu0 0
      %2273 = vmatpush2.bf16.msra.mxu0 0
      %2274 = vmatprep.subr.bf16.mxu0 0
      %2275 = vmatpush2.bf16.msra.mxu0 0
      %2276 = vmatprep.subr.bf16.mxu0 0
      %2277 = vmatpush2.bf16.msra.mxu0 0
      %2278 = vmatprep.subr.bf16.mxu0 0
      %2279 = vmatpush2.bf16.msra.mxu0 0
      %2280 = vmatprep.subr.bf16.mxu0 0
      %2281 = vmatpush2.bf16.msra.mxu0 0
      %2282 = vmatprep.subr.bf16.mxu0 0
      %2283 = vmatpush2.bf16.msra.mxu0 0
      %2284 = vmatprep.mubr.bf16.mxu0 0
      %2285 = vmatmul.mubr.bf16.gmra.mxu0 %v2250
      %v2286 = vpop.f32.mrf.mxu0
      %v2287 = vadd.f32 0.0, %v2286
      %v2288 = vpop.f32.mrf.mxu0
      %v2289 = vpop.f32.mrf.mxu0
      %v2290 = vadd.f32 0.0, %v2289
      %v2291 = vpop.f32.mrf.mxu0
      %2292 = vdwg.mxu0
      %2293 = vrot.lane.b32.xlu0 %v1498, 56
      %v2294 = vpop.permute.xlu0 %2293
      %v2297 = vsel %vm901, %v2101, 0
      %2299 = vmatprep.subr.bf16.mxu0 0
      %2300 = vmatpush1.bf16.msra.mxu0 0
      %2301 = vmatprep.subr.bf16.mxu0 0
      %2302 = vmatpush1.bf16.msra.mxu0 0
      %2303 = vmatprep.subr.bf16.mxu0 0
      %2304 = vmatpush1.bf16.msra.mxu0 0
      %2305 = vmatprep.subr.bf16.mxu0 0
      %2306 = vmatpush1.bf16.msra.mxu0 0
      %2307 = vmatprep.subr.bf16.mxu0 0
      %2308 = vmatpush1.bf16.msra.mxu0 0
      %2309 = vmatprep.subr.bf16.mxu0 0
      %2310 = vmatpush1.bf16.msra.mxu0 0
      %2311 = vmatprep.subr.bf16.mxu0 0
      %2312 = vmatpush1.bf16.msra.mxu0 0
      %2313 = vmatprep.subr.bf16.mxu0 0
      %2314 = vmatpush1.bf16.msra.mxu0 %v2294
      %2315 = vmatprep.subr.bf16.mxu0 0
      %2316 = vmatpush2.bf16.msra.mxu0 0
      %2317 = vmatprep.subr.bf16.mxu0 0
      %2318 = vmatpush2.bf16.msra.mxu0 0
      %2319 = vmatprep.subr.bf16.mxu0 0
      %2320 = vmatpush2.bf16.msra.mxu0 0
      %2321 = vmatprep.subr.bf16.mxu0 0
      %2322 = vmatpush2.bf16.msra.mxu0 0
      %2323 = vmatprep.subr.bf16.mxu0 0
      %2324 = vmatpush2.bf16.msra.mxu0 0
      %2325 = vmatprep.subr.bf16.mxu0 0
      %2326 = vmatpush2.bf16.msra.mxu0 0
      %2327 = vmatprep.subr.bf16.mxu0 0
      %2328 = vmatpush2.bf16.msra.mxu0 0
      %2329 = vmatprep.subr.bf16.mxu0 0
      %2330 = vmatpush2.bf16.msra.mxu0 0
      %2331 = vmatprep.mubr.bf16.mxu0 0
      %2332 = vmatmul.mubr.bf16.gmra.mxu0 %v2297
      %v2333 = vpop.f32.mrf.mxu0
      %v2334 = vadd.f32 0.0, %v2333
      %v2335 = vpop.f32.mrf.mxu0
      %v2336 = vpop.f32.mrf.mxu0
      %v2337 = vadd.f32 0.0, %v2336
      %v2338 = vpop.f32.mrf.mxu0
      %2339 = vdwg.mxu0
      %2340 = vrot.lane.b32.xlu0 %v1499, 56
      %v2341 = vpop.permute.xlu0 %2340
      %v2344 = vsel %vm901, %v2102, 0
      %2346 = vmatprep.subr.bf16.mxu0 0
      %2347 = vmatpush1.bf16.msra.mxu0 0
      %2348 = vmatprep.subr.bf16.mxu0 0
      %2349 = vmatpush1.bf16.msra.mxu0 0
      %2350 = vmatprep.subr.bf16.mxu0 0
      %2351 = vmatpush1.bf16.msra.mxu0 0
      %2352 = vmatprep.subr.bf16.mxu0 0
      %2353 = vmatpush1.bf16.msra.mxu0 0
      %2354 = vmatprep.subr.bf16.mxu0 0
      %2355 = vmatpush1.bf16.msra.mxu0 0
      %2356 = vmatprep.subr.bf16.mxu0 0
      %2357 = vmatpush1.bf16.msra.mxu0 0
      %2358 = vmatprep.subr.bf16.mxu0 0
      %2359 = vmatpush1.bf16.msra.mxu0 0
      %2360 = vmatprep.subr.bf16.mxu0 0
      %2361 = vmatpush1.bf16.msra.mxu0 %v2341
      %2362 = vmatprep.subr.bf16.mxu0 0
      %2363 = vmatpush2.bf16.msra.mxu0 0
      %2364 = vmatprep.subr.bf16.mxu0 0
      %2365 = vmatpush2.bf16.msra.mxu0 0
      %2366 = vmatprep.subr.bf16.mxu0 0
      %2367 = vmatpush2.bf16.msra.mxu0 0
      %2368 = vmatprep.subr.bf16.mxu0 0
      %2369 = vmatpush2.bf16.msra.mxu0 0
      %2370 = vmatprep.subr.bf16.mxu0 0
      %2371 = vmatpush2.bf16.msra.mxu0 0
      %2372 = vmatprep.subr.bf16.mxu0 0
      %2373 = vmatpush2.bf16.msra.mxu0 0
      %2374 = vmatprep.subr.bf16.mxu0 0
      %2375 = vmatpush2.bf16.msra.mxu0 0
      %2376 = vmatprep.subr.bf16.mxu0 0
      %2377 = vmatpush2.bf16.msra.mxu0 0
      %2378 = vmatprep.mubr.bf16.mxu0 0
      %2379 = vmatmul.mubr.bf16.gmra.mxu0 %v2344
      %v2380 = vpop.f32.mrf.mxu0
      %v2381 = vadd.f32 0.0, %v2380
      %v2382 = vpop.f32.mrf.mxu0
      %v2383 = vpop.f32.mrf.mxu0
      %v2384 = vadd.f32 0.0, %v2383
      %v2385 = vpop.f32.mrf.mxu0
      %2386 = vdwg.mxu0
      %2387 = vrot.lane.b32.xlu0 %v1500, 56
      %v2388 = vpop.permute.xlu0 %2387
      %v2391 = vsel %vm901, %v2103, 0
      %2393 = vmatprep.subr.bf16.mxu0 0
      %2394 = vmatpush1.bf16.msra.mxu0 0
      %2395 = vmatprep.subr.bf16.mxu0 0
      %2396 = vmatpush1.bf16.msra.mxu0 0
      %2397 = vmatprep.subr.bf16.mxu0 0
      %2398 = vmatpush1.bf16.msra.mxu0 0
      %2399 = vmatprep.subr.bf16.mxu0 0
      %2400 = vmatpush1.bf16.msra.mxu0 0
      %2401 = vmatprep.subr.bf16.mxu0 0
      %2402 = vmatpush1.bf16.msra.mxu0 0
      %2403 = vmatprep.subr.bf16.mxu0 0
      %2404 = vmatpush1.bf16.msra.mxu0 0
      %2405 = vmatprep.subr.bf16.mxu0 0
      %2406 = vmatpush1.bf16.msra.mxu0 0
      %2407 = vmatprep.subr.bf16.mxu0 0
      %2408 = vmatpush1.bf16.msra.mxu0 %v2388
      %2409 = vmatprep.subr.bf16.mxu0 0
      %2410 = vmatpush2.bf16.msra.mxu0 0
      %2411 = vmatprep.subr.bf16.mxu0 0
      %2412 = vmatpush2.bf16.msra.mxu0 0
      %2413 = vmatprep.subr.bf16.mxu0 0
      %2414 = vmatpush2.bf16.msra.mxu0 0
      %2415 = vmatprep.subr.bf16.mxu0 0
      %2416 = vmatpush2.bf16.msra.mxu0 0
      %2417 = vmatprep.subr.bf16.mxu0 0
      %2418 = vmatpush2.bf16.msra.mxu0 0
      %2419 = vmatprep.subr.bf16.mxu0 0
      %2420 = vmatpush2.bf16.msra.mxu0 0
      %2421 = vmatprep.subr.bf16.mxu0 0
      %2422 = vmatpush2.bf16.msra.mxu0 0
      %2423 = vmatprep.subr.bf16.mxu0 0
      %2424 = vmatpush2.bf16.msra.mxu0 0
      %2425 = vmatprep.mubr.bf16.mxu0 0
      %2426 = vmatmul.mubr.bf16.gmra.mxu0 %v2391
      %v2427 = vpop.f32.mrf.mxu0
      %v2428 = vadd.f32 0.0, %v2427
      %v2429 = vpop.f32.mrf.mxu0
      %v2430 = vpop.f32.mrf.mxu0
      %v2431 = vadd.f32 0.0, %v2430
      %v2432 = vpop.f32.mrf.mxu0
      %2433 = vdwg.mxu0
      %2434 = vrot.lane.b32.xlu0 %v1501, 56
      %v2435 = vpop.permute.xlu0 %2434
      %v2438 = vsel %vm901, %v2104, 0
      %2440 = vmatprep.subr.bf16.mxu0 0
      %2441 = vmatpush1.bf16.msra.mxu0 0
      %2442 = vmatprep.subr.bf16.mxu0 0
      %2443 = vmatpush1.bf16.msra.mxu0 0
      %2444 = vmatprep.subr.bf16.mxu0 0
      %2445 = vmatpush1.bf16.msra.mxu0 0
      %2446 = vmatprep.subr.bf16.mxu0 0
      %2447 = vmatpush1.bf16.msra.mxu0 0
      %2448 = vmatprep.subr.bf16.mxu0 0
      %2449 = vmatpush1.bf16.msra.mxu0 0
      %2450 = vmatprep.subr.bf16.mxu0 0
      %2451 = vmatpush1.bf16.msra.mxu0 0
      %2452 = vmatprep.subr.bf16.mxu0 0
      %2453 = vmatpush1.bf16.msra.mxu0 0
      %2454 = vmatprep.subr.bf16.mxu0 0
      %2455 = vmatpush1.bf16.msra.mxu0 %v2435
      %2456 = vmatprep.subr.bf16.mxu0 0
      %2457 = vmatpush2.bf16.msra.mxu0 0
      %2458 = vmatprep.subr.bf16.mxu0 0
      %2459 = vmatpush2.bf16.msra.mxu0 0
      %2460 = vmatprep.subr.bf16.mxu0 0
      %2461 = vmatpush2.bf16.msra.mxu0 0
      %2462 = vmatprep.subr.bf16.mxu0 0
      %2463 = vmatpush2.bf16.msra.mxu0 0
      %2464 = vmatprep.subr.bf16.mxu0 0
      %2465 = vmatpush2.bf16.msra.mxu0 0
      %2466 = vmatprep.subr.bf16.mxu0 0
      %2467 = vmatpush2.bf16.msra.mxu0 0
      %2468 = vmatprep.subr.bf16.mxu0 0
      %2469 = vmatpush2.bf16.msra.mxu0 0
      %2470 = vmatprep.subr.bf16.mxu0 0
      %2471 = vmatpush2.bf16.msra.mxu0 0
      %2472 = vmatprep.mubr.bf16.mxu0 0
      %2473 = vmatmul.mubr.bf16.gmra.mxu0 %v2438
      %v2474 = vpop.f32.mrf.mxu0
      %v2475 = vadd.f32 0.0, %v2474
      %v2476 = vpop.f32.mrf.mxu0
      %v2477 = vpop.f32.mrf.mxu0
      %v2478 = vadd.f32 0.0, %v2477
      %v2479 = vpop.f32.mrf.mxu0
      %2480 = vdwg.mxu0
      %2497 = vrot.lane.b32.xlu0 %v2146, 8
      %v2498 = vpop.permute.xlu0 %2497
      %2499 = vrot.lane.b32.xlu0 %v2149, 8
      %v2500 = vpop.permute.xlu0 %2499
      %2501 = vrot.lane.b32.xlu0 %v2193, 8
      %v2502 = vpop.permute.xlu0 %2501
      %2503 = vrot.lane.b32.xlu0 %v2196, 8
      %v2504 = vpop.permute.xlu0 %2503
      %2505 = vrot.lane.b32.xlu0 %v2240, 8
      %v2506 = vpop.permute.xlu0 %2505
      %2507 = vrot.lane.b32.xlu0 %v2243, 8
      %v2508 = vpop.permute.xlu0 %2507
      %2509 = vrot.lane.b32.xlu0 %v2287, 8
      %v2510 = vpop.permute.xlu0 %2509
      %2511 = vrot.lane.b32.xlu0 %v2290, 8
      %v2512 = vpop.permute.xlu0 %2511
      %2513 = vrot.lane.b32.xlu0 %v2334, 8
      %v2514 = vpop.permute.xlu0 %2513
      %2515 = vrot.lane.b32.xlu0 %v2337, 8
      %v2516 = vpop.permute.xlu0 %2515
      %2517 = vrot.lane.b32.xlu0 %v2381, 8
      %v2518 = vpop.permute.xlu0 %2517
      %2519 = vrot.lane.b32.xlu0 %v2384, 8
      %v2520 = vpop.permute.xlu0 %2519
      %2521 = vrot.lane.b32.xlu0 %v2428, 8
      %v2522 = vpop.permute.xlu0 %2521
      %2523 = vrot.lane.b32.xlu0 %v2431, 8
      %v2524 = vpop.permute.xlu0 %2523
      %2525 = vrot.lane.b32.xlu0 %v2475, 8
      %v2526 = vpop.permute.xlu0 %2525
      %2527 = vrot.lane.b32.xlu0 %v2478, 8
      %v2528 = vpop.permute.xlu0 %2527
      %vm2545 = vcmask 130112
      %2546 = vst.msk [vmem:[#allocation3] sm:$0xff] %vm2545, %v2498
      %2547 = vst.msk [vmem:[#allocation3 + $0x8] sm:$0xff] %vm2545, %v2500
      %2548 = vst.msk [vmem:[#allocation3 + $0x10] sm:$0xff] %vm2545, %v2502
      %2549 = vst.msk [vmem:[#allocation3 + $0x18] sm:$0xff] %vm2545, %v2504
      %2550 = vst.msk [vmem:[#allocation3 + $0x20] sm:$0xff] %vm2545, %v2506
      %2551 = vst.msk [vmem:[#allocation3 + $0x28] sm:$0xff] %vm2545, %v2508
      %2552 = vst.msk [vmem:[#allocation3 + $0x30] sm:$0xff] %vm2545, %v2510
      %2553 = vst.msk [vmem:[#allocation3 + $0x38] sm:$0xff] %vm2545, %v2512
      %2554 = vst.msk [vmem:[#allocation3 + $0x40] sm:$0xff] %vm2545, %v2514
      %2555 = vst.msk [vmem:[#allocation3 + $0x48] sm:$0xff] %vm2545, %v2516
      %2556 = vst.msk [vmem:[#allocation3 + $0x50] sm:$0xff] %vm2545, %v2518
      %2557 = vst.msk [vmem:[#allocation3 + $0x58] sm:$0xff] %vm2545, %v2520
      %2558 = vst.msk [vmem:[#allocation3 + $0x60] sm:$0xff] %vm2545, %v2522
      %2559 = vst.msk [vmem:[#allocation3 + $0x68] sm:$0xff] %vm2545, %v2524
      %2560 = vst.msk [vmem:[#allocation3 + $0x70] sm:$0xff] %vm2545, %v2526
      %2561 = vst.msk [vmem:[#allocation3 + $0x78] sm:$0xff] %vm2545, %v2528
      %v2562 = vld [vmem:[#allocation2] sm:$0xff]
      %v2563 = vld [vmem:[#allocation2 + $0x8] sm:$0xff]
      %v2564 = vld [vmem:[#allocation2 + $0x10] sm:$0xff]
      %v2565 = vld [vmem:[#allocation2 + $0x18] sm:$0xff]
      %v2566 = vld [vmem:[#allocation2 + $0x20] sm:$0xff]
      %v2567 = vld [vmem:[#allocation2 + $0x28] sm:$0xff]
      %v2568 = vld [vmem:[#allocation2 + $0x30] sm:$0xff]
      %v2569 = vld [vmem:[#allocation2 + $0x38] sm:$0xff]
      %v2570 = vld [vmem:[#allocation2 + $0x40] sm:$0xff]
      %v2571 = vld [vmem:[#allocation2 + $0x48] sm:$0xff]
      %v2572 = vld [vmem:[#allocation2 + $0x50] sm:$0xff]
      %v2573 = vld [vmem:[#allocation2 + $0x58] sm:$0xff]
      %v2574 = vld [vmem:[#allocation2 + $0x60] sm:$0xff]
      %v2575 = vld [vmem:[#allocation2 + $0x68] sm:$0xff]
      %v2576 = vld [vmem:[#allocation2 + $0x70] sm:$0xff]
      %v2577 = vld [vmem:[#allocation2 + $0x78] sm:$0xff]
      %v2578 = vpack.c.bf16 %v2563, %v2562
      %v2579 = vpack.c.bf16 %v2565, %v2564
      %v2580 = vpack.c.bf16 %v2567, %v2566
      %v2581 = vpack.c.bf16 %v2569, %v2568
      %v2582 = vpack.c.bf16 %v2571, %v2570
      %v2583 = vpack.c.bf16 %v2573, %v2572
      %v2584 = vpack.c.bf16 %v2575, %v2574
      %v2585 = vpack.c.bf16 %v2577, %v2576
      %s2586 = scalar_lea.vmem %s5, 32
      %v2587 = vld [vmem:[%s2586] sm:$0xff]
      %v2588 = vld [vmem:[%s2586 + $0x8] sm:$0xff]
      %2590 = vrot.lane.b32.xlu0 %v2578, 112
      %v2591 = vpop.permute.xlu0 %2590
      %2592 = vrot.lane.b32.xlu0 %v2578, 80
      %v2593 = vpop.permute.xlu0 %2592
      %v2595 = vsel %vm503, %v2591, 0
      %v2598 = vsel %vm503, %v2593, 0
      %2600 = vmatprep.subr.bf16.mxu0 0
      %2601 = vmatpush1.bf16.xpose.msra.mxu0 0
      %2602 = vmatprep.subr.bf16.mxu0 0
      %2603 = vmatpush1.bf16.xpose.msra.mxu0 0
      %2604 = vmatprep.subr.bf16.mxu0 0
      %2605 = vmatpush1.bf16.xpose.msra.mxu0 0
      %2606 = vmatprep.subr.bf16.mxu0 0
      %2607 = vmatpush1.bf16.xpose.msra.mxu0 0
      %2608 = vmatprep.subr.bf16.mxu0 0
      %2609 = vmatpush1.bf16.xpose.msra.mxu0 0
      %2610 = vmatprep.subr.bf16.mxu0 0
      %2611 = vmatpush1.bf16.xpose.msra.mxu0 0
      %2612 = vmatprep.subr.bf16.mxu0 0
      %2613 = vmatpush1.bf16.xpose.msra.mxu0 0
      %2614 = vmatprep.subr.bf16.mxu0 0
      %2615 = vmatpush1.bf16.xpose.msra.mxu0 %v2598
      %2616 = vmatprep.subr.bf16.mxu0 0
      %2617 = vmatpush2.bf16.xpose.msra.mxu0 0
      %2618 = vmatprep.subr.bf16.mxu0 0
      %2619 = vmatpush2.bf16.xpose.msra.mxu0 0
      %2620 = vmatprep.subr.bf16.mxu0 0
      %2621 = vmatpush2.bf16.xpose.msra.mxu0 0
      %2622 = vmatprep.subr.bf16.mxu0 0
      %2623 = vmatpush2.bf16.xpose.msra.mxu0 0
      %2624 = vmatprep.subr.bf16.mxu0 0
      %2625 = vmatpush2.bf16.xpose.msra.mxu0 0
      %2626 = vmatprep.subr.bf16.mxu0 0
      %2627 = vmatpush2.bf16.xpose.msra.mxu0 0
      %2628 = vmatprep.subr.bf16.mxu0 0
      %2629 = vmatpush2.bf16.xpose.msra.mxu0 0
      %2630 = vmatprep.subr.bf16.mxu0 0
      %2631 = vmatpush2.bf16.xpose.msra.mxu0 0
      %2632 = vmatprep.mubr.bf16.mxu0 0
      %2633 = vmatmul.mubr.bf16.gmra.mxu0 %v2595
      %v2634 = vpop.f32.mrf.mxu0
      %v2635 = vadd.f32 %v2587, %v2634
      %v2636 = vpop.f32.mrf.mxu0
      %v2637 = vpop.f32.mrf.mxu0
      %v2638 = vadd.f32 %v2588, %v2637
      %v2639 = vpop.f32.mrf.mxu0
      %2640 = vdwg.mxu0
      %2642 = vrot.lane.b32.xlu0 %v2579, 112
      %v2643 = vpop.permute.xlu0 %2642
      %2644 = vrot.lane.b32.xlu0 %v2579, 80
      %v2645 = vpop.permute.xlu0 %2644
      %v2647 = vsel %vm503, %v2643, 0
      %v2650 = vsel %vm503, %v2645, 0
      %2652 = vmatprep.subr.bf16.mxu0 0
      %2653 = vmatpush1.bf16.xpose.msra.mxu0 0
      %2654 = vmatprep.subr.bf16.mxu0 0
      %2655 = vmatpush1.bf16.xpose.msra.mxu0 0
      %2656 = vmatprep.subr.bf16.mxu0 0
      %2657 = vmatpush1.bf16.xpose.msra.mxu0 0
      %2658 = vmatprep.subr.bf16.mxu0 0
      %2659 = vmatpush1.bf16.xpose.msra.mxu0 0
      %2660 = vmatprep.subr.bf16.mxu0 0
      %2661 = vmatpush1.bf16.xpose.msra.mxu0 0
      %2662 = vmatprep.subr.bf16.mxu0 0
      %2663 = vmatpush1.bf16.xpose.msra.mxu0 0
      %2664 = vmatprep.subr.bf16.mxu0 0
      %2665 = vmatpush1.bf16.xpose.msra.mxu0 0
      %2666 = vmatprep.subr.bf16.mxu0 0
      %2667 = vmatpush1.bf16.xpose.msra.mxu0 %v2650
      %2668 = vmatprep.subr.bf16.mxu0 0
      %2669 = vmatpush2.bf16.xpose.msra.mxu0 0
      %2670 = vmatprep.subr.bf16.mxu0 0
      %2671 = vmatpush2.bf16.xpose.msra.mxu0 0
      %2672 = vmatprep.subr.bf16.mxu0 0
      %2673 = vmatpush2.bf16.xpose.msra.mxu0 0
      %2674 = vmatprep.subr.bf16.mxu0 0
      %2675 = vmatpush2.bf16.xpose.msra.mxu0 0
      %2676 = vmatprep.subr.bf16.mxu0 0
      %2677 = vmatpush2.bf16.xpose.msra.mxu0 0
      %2678 = vmatprep.subr.bf16.mxu0 0
      %2679 = vmatpush2.bf16.xpose.msra.mxu0 0
      %2680 = vmatprep.subr.bf16.mxu0 0
      %2681 = vmatpush2.bf16.xpose.msra.mxu0 0
      %2682 = vmatprep.subr.bf16.mxu0 0
      %2683 = vmatpush2.bf16.xpose.msra.mxu0 0
      %2684 = vmatprep.mubr.bf16.mxu0 0
      %2685 = vmatmul.mubr.bf16.gmra.mxu0 %v2647
      %v2686 = vpop.f32.mrf.mxu0
      %v2687 = vadd.f32 %v2587, %v2686
      %v2688 = vpop.f32.mrf.mxu0
      %v2689 = vpop.f32.mrf.mxu0
      %v2690 = vadd.f32 %v2588, %v2689
      %v2691 = vpop.f32.mrf.mxu0
      %2692 = vdwg.mxu0
      %2694 = vrot.lane.b32.xlu0 %v2580, 112
      %v2695 = vpop.permute.xlu0 %2694
      %2696 = vrot.lane.b32.xlu0 %v2580, 80
      %v2697 = vpop.permute.xlu0 %2696
      %v2699 = vsel %vm503, %v2695, 0
      %v2702 = vsel %vm503, %v2697, 0
      %2704 = vmatprep.subr.bf16.mxu0 0
      %2705 = vmatpush1.bf16.xpose.msra.mxu0 0
      %2706 = vmatprep.subr.bf16.mxu0 0
      %2707 = vmatpush1.bf16.xpose.msra.mxu0 0
      %2708 = vmatprep.subr.bf16.mxu0 0
      %2709 = vmatpush1.bf16.xpose.msra.mxu0 0
      %2710 = vmatprep.subr.bf16.mxu0 0
      %2711 = vmatpush1.bf16.xpose.msra.mxu0 0
      %2712 = vmatprep.subr.bf16.mxu0 0
      %2713 = vmatpush1.bf16.xpose.msra.mxu0 0
      %2714 = vmatprep.subr.bf16.mxu0 0
      %2715 = vmatpush1.bf16.xpose.msra.mxu0 0
      %2716 = vmatprep.subr.bf16.mxu0 0
      %2717 = vmatpush1.bf16.xpose.msra.mxu0 0
      %2718 = vmatprep.subr.bf16.mxu0 0
      %2719 = vmatpush1.bf16.xpose.msra.mxu0 %v2702
      %2720 = vmatprep.subr.bf16.mxu0 0
      %2721 = vmatpush2.bf16.xpose.msra.mxu0 0
      %2722 = vmatprep.subr.bf16.mxu0 0
      %2723 = vmatpush2.bf16.xpose.msra.mxu0 0
      %2724 = vmatprep.subr.bf16.mxu0 0
      %2725 = vmatpush2.bf16.xpose.msra.mxu0 0
      %2726 = vmatprep.subr.bf16.mxu0 0
      %2727 = vmatpush2.bf16.xpose.msra.mxu0 0
      %2728 = vmatprep.subr.bf16.mxu0 0
      %2729 = vmatpush2.bf16.xpose.msra.mxu0 0
      %2730 = vmatprep.subr.bf16.mxu0 0
      %2731 = vmatpush2.bf16.xpose.msra.mxu0 0
      %2732 = vmatprep.subr.bf16.mxu0 0
      %2733 = vmatpush2.bf16.xpose.msra.mxu0 0
      %2734 = vmatprep.subr.bf16.mxu0 0
      %2735 = vmatpush2.bf16.xpose.msra.mxu0 0
      %2736 = vmatprep.mubr.bf16.mxu0 0
      %2737 = vmatmul.mubr.bf16.gmra.mxu0 %v2699
      %v2738 = vpop.f32.mrf.mxu0
      %v2739 = vadd.f32 %v2587, %v2738
      %v2740 = vpop.f32.mrf.mxu0
      %v2741 = vpop.f32.mrf.mxu0
      %v2742 = vadd.f32 %v2588, %v2741
      %v2743 = vpop.f32.mrf.mxu0
      %2744 = vdwg.mxu0
      %2746 = vrot.lane.b32.xlu0 %v2581, 112
      %v2747 = vpop.permute.xlu0 %2746
      %2748 = vrot.lane.b32.xlu0 %v2581, 80
      %v2749 = vpop.permute.xlu0 %2748
      %v2751 = vsel %vm503, %v2747, 0
      %v2754 = vsel %vm503, %v2749, 0
      %2756 = vmatprep.subr.bf16.mxu0 0
      %2757 = vmatpush1.bf16.xpose.msra.mxu0 0
      %2758 = vmatprep.subr.bf16.mxu0 0
      %2759 = vmatpush1.bf16.xpose.msra.mxu0 0
      %2760 = vmatprep.subr.bf16.mxu0 0
      %2761 = vmatpush1.bf16.xpose.msra.mxu0 0
      %2762 = vmatprep.subr.bf16.mxu0 0
      %2763 = vmatpush1.bf16.xpose.msra.mxu0 0
      %2764 = vmatprep.subr.bf16.mxu0 0
      %2765 = vmatpush1.bf16.xpose.msra.mxu0 0
      %2766 = vmatprep.subr.bf16.mxu0 0
      %2767 = vmatpush1.bf16.xpose.msra.mxu0 0
      %2768 = vmatprep.subr.bf16.mxu0 0
      %2769 = vmatpush1.bf16.xpose.msra.mxu0 0
      %2770 = vmatprep.subr.bf16.mxu0 0
      %2771 = vmatpush1.bf16.xpose.msra.mxu0 %v2754
      %2772 = vmatprep.subr.bf16.mxu0 0
      %2773 = vmatpush2.bf16.xpose.msra.mxu0 0
      %2774 = vmatprep.subr.bf16.mxu0 0
      %2775 = vmatpush2.bf16.xpose.msra.mxu0 0
      %2776 = vmatprep.subr.bf16.mxu0 0
      %2777 = vmatpush2.bf16.xpose.msra.mxu0 0
      %2778 = vmatprep.subr.bf16.mxu0 0
      %2779 = vmatpush2.bf16.xpose.msra.mxu0 0
      %2780 = vmatprep.subr.bf16.mxu0 0
      %2781 = vmatpush2.bf16.xpose.msra.mxu0 0
      %2782 = vmatprep.subr.bf16.mxu0 0
      %2783 = vmatpush2.bf16.xpose.msra.mxu0 0
      %2784 = vmatprep.subr.bf16.mxu0 0
      %2785 = vmatpush2.bf16.xpose.msra.mxu0 0
      %2786 = vmatprep.subr.bf16.mxu0 0
      %2787 = vmatpush2.bf16.xpose.msra.mxu0 0
      %2788 = vmatprep.mubr.bf16.mxu0 0
      %2789 = vmatmul.mubr.bf16.gmra.mxu0 %v2751
      %v2790 = vpop.f32.mrf.mxu0
      %v2791 = vadd.f32 %v2587, %v2790
      %v2792 = vpop.f32.mrf.mxu0
      %v2793 = vpop.f32.mrf.mxu0
      %v2794 = vadd.f32 %v2588, %v2793
      %v2795 = vpop.f32.mrf.mxu0
      %2796 = vdwg.mxu0
      %2798 = vrot.lane.b32.xlu0 %v2582, 112
      %v2799 = vpop.permute.xlu0 %2798
      %2800 = vrot.lane.b32.xlu0 %v2582, 80
      %v2801 = vpop.permute.xlu0 %2800
      %v2803 = vsel %vm503, %v2799, 0
      %v2806 = vsel %vm503, %v2801, 0
      %2808 = vmatprep.subr.bf16.mxu0 0
      %2809 = vmatpush1.bf16.xpose.msra.mxu0 0
      %2810 = vmatprep.subr.bf16.mxu0 0
      %2811 = vmatpush1.bf16.xpose.msra.mxu0 0
      %2812 = vmatprep.subr.bf16.mxu0 0
      %2813 = vmatpush1.bf16.xpose.msra.mxu0 0
      %2814 = vmatprep.subr.bf16.mxu0 0
      %2815 = vmatpush1.bf16.xpose.msra.mxu0 0
      %2816 = vmatprep.subr.bf16.mxu0 0
      %2817 = vmatpush1.bf16.xpose.msra.mxu0 0
      %2818 = vmatprep.subr.bf16.mxu0 0
      %2819 = vmatpush1.bf16.xpose.msra.mxu0 0
      %2820 = vmatprep.subr.bf16.mxu0 0
      %2821 = vmatpush1.bf16.xpose.msra.mxu0 0
      %2822 = vmatprep.subr.bf16.mxu0 0
      %2823 = vmatpush1.bf16.xpose.msra.mxu0 %v2806
      %2824 = vmatprep.subr.bf16.mxu0 0
      %2825 = vmatpush2.bf16.xpose.msra.mxu0 0
      %2826 = vmatprep.subr.bf16.mxu0 0
      %2827 = vmatpush2.bf16.xpose.msra.mxu0 0
      %2828 = vmatprep.subr.bf16.mxu0 0
      %2829 = vmatpush2.bf16.xpose.msra.mxu0 0
      %2830 = vmatprep.subr.bf16.mxu0 0
      %2831 = vmatpush2.bf16.xpose.msra.mxu0 0
      %2832 = vmatprep.subr.bf16.mxu0 0
      %2833 = vmatpush2.bf16.xpose.msra.mxu0 0
      %2834 = vmatprep.subr.bf16.mxu0 0
      %2835 = vmatpush2.bf16.xpose.msra.mxu0 0
      %2836 = vmatprep.subr.bf16.mxu0 0
      %2837 = vmatpush2.bf16.xpose.msra.mxu0 0
      %2838 = vmatprep.subr.bf16.mxu0 0
      %2839 = vmatpush2.bf16.xpose.msra.mxu0 0
      %2840 = vmatprep.mubr.bf16.mxu0 0
      %2841 = vmatmul.mubr.bf16.gmra.mxu0 %v2803
      %v2842 = vpop.f32.mrf.mxu0
      %v2843 = vadd.f32 %v2587, %v2842
      %v2844 = vpop.f32.mrf.mxu0
      %v2845 = vpop.f32.mrf.mxu0
      %v2846 = vadd.f32 %v2588, %v2845
      %v2847 = vpop.f32.mrf.mxu0
      %2848 = vdwg.mxu0
      %2850 = vrot.lane.b32.xlu0 %v2583, 112
      %v2851 = vpop.permute.xlu0 %2850
      %2852 = vrot.lane.b32.xlu0 %v2583, 80
      %v2853 = vpop.permute.xlu0 %2852
      %v2855 = vsel %vm503, %v2851, 0
      %v2858 = vsel %vm503, %v2853, 0
      %2860 = vmatprep.subr.bf16.mxu0 0
      %2861 = vmatpush1.bf16.xpose.msra.mxu0 0
      %2862 = vmatprep.subr.bf16.mxu0 0
      %2863 = vmatpush1.bf16.xpose.msra.mxu0 0
      %2864 = vmatprep.subr.bf16.mxu0 0
      %2865 = vmatpush1.bf16.xpose.msra.mxu0 0
      %2866 = vmatprep.subr.bf16.mxu0 0
      %2867 = vmatpush1.bf16.xpose.msra.mxu0 0
      %2868 = vmatprep.subr.bf16.mxu0 0
      %2869 = vmatpush1.bf16.xpose.msra.mxu0 0
      %2870 = vmatprep.subr.bf16.mxu0 0
      %2871 = vmatpush1.bf16.xpose.msra.mxu0 0
      %2872 = vmatprep.subr.bf16.mxu0 0
      %2873 = vmatpush1.bf16.xpose.msra.mxu0 0
      %2874 = vmatprep.subr.bf16.mxu0 0
      %2875 = vmatpush1.bf16.xpose.msra.mxu0 %v2858
      %2876 = vmatprep.subr.bf16.mxu0 0
      %2877 = vmatpush2.bf16.xpose.msra.mxu0 0
      %2878 = vmatprep.subr.bf16.mxu0 0
      %2879 = vmatpush2.bf16.xpose.msra.mxu0 0
      %2880 = vmatprep.subr.bf16.mxu0 0
      %2881 = vmatpush2.bf16.xpose.msra.mxu0 0
      %2882 = vmatprep.subr.bf16.mxu0 0
      %2883 = vmatpush2.bf16.xpose.msra.mxu0 0
      %2884 = vmatprep.subr.bf16.mxu0 0
      %2885 = vmatpush2.bf16.xpose.msra.mxu0 0
      %2886 = vmatprep.subr.bf16.mxu0 0
      %2887 = vmatpush2.bf16.xpose.msra.mxu0 0
      %2888 = vmatprep.subr.bf16.mxu0 0
      %2889 = vmatpush2.bf16.xpose.msra.mxu0 0
      %2890 = vmatprep.subr.bf16.mxu0 0
      %2891 = vmatpush2.bf16.xpose.msra.mxu0 0
      %2892 = vmatprep.mubr.bf16.mxu0 0
      %2893 = vmatmul.mubr.bf16.gmra.mxu0 %v2855
      %v2894 = vpop.f32.mrf.mxu0
      %v2895 = vadd.f32 %v2587, %v2894
      %v2896 = vpop.f32.mrf.mxu0
      %v2897 = vpop.f32.mrf.mxu0
      %v2898 = vadd.f32 %v2588, %v2897
      %v2899 = vpop.f32.mrf.mxu0
      %2900 = vdwg.mxu0
      %2902 = vrot.lane.b32.xlu0 %v2584, 112
      %v2903 = vpop.permute.xlu0 %2902
      %2904 = vrot.lane.b32.xlu0 %v2584, 80
      %v2905 = vpop.permute.xlu0 %2904
      %v2907 = vsel %vm503, %v2903, 0
      %v2910 = vsel %vm503, %v2905, 0
      %2912 = vmatprep.subr.bf16.mxu0 0
      %2913 = vmatpush1.bf16.xpose.msra.mxu0 0
      %2914 = vmatprep.subr.bf16.mxu0 0
      %2915 = vmatpush1.bf16.xpose.msra.mxu0 0
      %2916 = vmatprep.subr.bf16.mxu0 0
      %2917 = vmatpush1.bf16.xpose.msra.mxu0 0
      %2918 = vmatprep.subr.bf16.mxu0 0
      %2919 = vmatpush1.bf16.xpose.msra.mxu0 0
      %2920 = vmatprep.subr.bf16.mxu0 0
      %2921 = vmatpush1.bf16.xpose.msra.mxu0 0
      %2922 = vmatprep.subr.bf16.mxu0 0
      %2923 = vmatpush1.bf16.xpose.msra.mxu0 0
      %2924 = vmatprep.subr.bf16.mxu0 0
      %2925 = vmatpush1.bf16.xpose.msra.mxu0 0
      %2926 = vmatprep.subr.bf16.mxu0 0
      %2927 = vmatpush1.bf16.xpose.msra.mxu0 %v2910
      %2928 = vmatprep.subr.bf16.mxu0 0
      %2929 = vmatpush2.bf16.xpose.msra.mxu0 0
      %2930 = vmatprep.subr.bf16.mxu0 0
      %2931 = vmatpush2.bf16.xpose.msra.mxu0 0
      %2932 = vmatprep.subr.bf16.mxu0 0
      %2933 = vmatpush2.bf16.xpose.msra.mxu0 0
      %2934 = vmatprep.subr.bf16.mxu0 0
      %2935 = vmatpush2.bf16.xpose.msra.mxu0 0
      %2936 = vmatprep.subr.bf16.mxu0 0
      %2937 = vmatpush2.bf16.xpose.msra.mxu0 0
      %2938 = vmatprep.subr.bf16.mxu0 0
      %2939 = vmatpush2.bf16.xpose.msra.mxu0 0
      %2940 = vmatprep.subr.bf16.mxu0 0
      %2941 = vmatpush2.bf16.xpose.msra.mxu0 0
      %2942 = vmatprep.subr.bf16.mxu0 0
      %2943 = vmatpush2.bf16.xpose.msra.mxu0 0
      %2944 = vmatprep.mubr.bf16.mxu0 0
      %2945 = vmatmul.mubr.bf16.gmra.mxu0 %v2907
      %v2946 = vpop.f32.mrf.mxu0
      %v2947 = vadd.f32 %v2587, %v2946
      %v2948 = vpop.f32.mrf.mxu0
      %v2949 = vpop.f32.mrf.mxu0
      %v2950 = vadd.f32 %v2588, %v2949
      %v2951 = vpop.f32.mrf.mxu0
      %2952 = vdwg.mxu0
      %2954 = vrot.lane.b32.xlu0 %v2585, 112
      %v2955 = vpop.permute.xlu0 %2954
      %2956 = vrot.lane.b32.xlu0 %v2585, 80
      %v2957 = vpop.permute.xlu0 %2956
      %v2959 = vsel %vm503, %v2955, 0
      %v2962 = vsel %vm503, %v2957, 0
      %2964 = vmatprep.subr.bf16.mxu0 0
      %2965 = vmatpush1.bf16.xpose.msra.mxu0 0
      %2966 = vmatprep.subr.bf16.mxu0 0
      %2967 = vmatpush1.bf16.xpose.msra.mxu0 0
      %2968 = vmatprep.subr.bf16.mxu0 0
      %2969 = vmatpush1.bf16.xpose.msra.mxu0 0
      %2970 = vmatprep.subr.bf16.mxu0 0
      %2971 = vmatpush1.bf16.xpose.msra.mxu0 0
      %2972 = vmatprep.subr.bf16.mxu0 0
      %2973 = vmatpush1.bf16.xpose.msra.mxu0 0
      %2974 = vmatprep.subr.bf16.mxu0 0
      %2975 = vmatpush1.bf16.xpose.msra.mxu0 0
      %2976 = vmatprep.subr.bf16.mxu0 0
      %2977 = vmatpush1.bf16.xpose.msra.mxu0 0
      %2978 = vmatprep.subr.bf16.mxu0 0
      %2979 = vmatpush1.bf16.xpose.msra.mxu0 %v2962
      %2980 = vmatprep.subr.bf16.mxu0 0
      %2981 = vmatpush2.bf16.xpose.msra.mxu0 0
      %2982 = vmatprep.subr.bf16.mxu0 0
      %2983 = vmatpush2.bf16.xpose.msra.mxu0 0
      %2984 = vmatprep.subr.bf16.mxu0 0
      %2985 = vmatpush2.bf16.xpose.msra.mxu0 0
      %2986 = vmatprep.subr.bf16.mxu0 0
      %2987 = vmatpush2.bf16.xpose.msra.mxu0 0
      %2988 = vmatprep.subr.bf16.mxu0 0
      %2989 = vmatpush2.bf16.xpose.msra.mxu0 0
      %2990 = vmatprep.subr.bf16.mxu0 0
      %2991 = vmatpush2.bf16.xpose.msra.mxu0 0
      %2992 = vmatprep.subr.bf16.mxu0 0
      %2993 = vmatpush2.bf16.xpose.msra.mxu0 0
      %2994 = vmatprep.subr.bf16.mxu0 0
      %2995 = vmatpush2.bf16.xpose.msra.mxu0 0
      %2996 = vmatprep.mubr.bf16.mxu0 0
      %2997 = vmatmul.mubr.bf16.gmra.mxu0 %v2959
      %v2998 = vpop.f32.mrf.mxu0
      %v2999 = vadd.f32 %v2587, %v2998
      %v3000 = vpop.f32.mrf.mxu0
      %v3001 = vpop.f32.mrf.mxu0
      %v3002 = vadd.f32 %v2588, %v3001
      %v3003 = vpop.f32.mrf.mxu0
      %3004 = vdwg.mxu0
      %v3005 = vsel %vm901, %v2635, -inf
      %3006 = vmax.xlane.f32.xlu0 %v3005
      %v3007 = vpop.xlane.xlu0 %3006
      %v3008 = vsel %vm901, %v2638, -inf
      %3009 = vmax.xlane.f32.xlu0 %v3008
      %v3010 = vpop.xlane.xlu0 %3009
      %v3011 = vsel %vm901, %v2687, -inf
      %3012 = vmax.xlane.f32.xlu0 %v3011
      %v3013 = vpop.xlane.xlu0 %3012
      %v3014 = vsel %vm901, %v2690, -inf
      %3015 = vmax.xlane.f32.xlu0 %v3014
      %v3016 = vpop.xlane.xlu0 %3015
      %v3017 = vsel %vm901, %v2739, -inf
      %3018 = vmax.xlane.f32.xlu0 %v3017
      %v3019 = vpop.xlane.xlu0 %3018
      %v3020 = vsel %vm901, %v2742, -inf
      %3021 = vmax.xlane.f32.xlu0 %v3020
      %v3022 = vpop.xlane.xlu0 %3021
      %v3023 = vsel %vm901, %v2791, -inf
      %3024 = vmax.xlane.f32.xlu0 %v3023
      %v3025 = vpop.xlane.xlu0 %3024
      %v3026 = vsel %vm901, %v2794, -inf
      %3027 = vmax.xlane.f32.xlu0 %v3026
      %v3028 = vpop.xlane.xlu0 %3027
      %v3029 = vsel %vm901, %v2843, -inf
      %3030 = vmax.xlane.f32.xlu0 %v3029
      %v3031 = vpop.xlane.xlu0 %3030
      %v3032 = vsel %vm901, %v2846, -inf
      %3033 = vmax.xlane.f32.xlu0 %v3032
      %v3034 = vpop.xlane.xlu0 %3033
      %v3035 = vsel %vm901, %v2895, -inf
      %3036 = vmax.xlane.f32.xlu0 %v3035
      %v3037 = vpop.xlane.xlu0 %3036
      %v3038 = vsel %vm901, %v2898, -inf
      %3039 = vmax.xlane.f32.xlu0 %v3038
      %v3040 = vpop.xlane.xlu0 %3039
      %v3041 = vsel %vm901, %v2947, -inf
      %3042 = vmax.xlane.f32.xlu0 %v3041
      %v3043 = vpop.xlane.xlu0 %3042
      %v3044 = vsel %vm901, %v2950, -inf
      %3045 = vmax.xlane.f32.xlu0 %v3044
      %v3046 = vpop.xlane.xlu0 %3045
      %v3047 = vsel %vm901, %v2999, -inf
      %3048 = vmax.xlane.f32.xlu0 %v3047
      %v3049 = vpop.xlane.xlu0 %3048
      %v3050 = vsel %vm901, %v3002, -inf
      %3051 = vmax.xlane.f32.xlu0 %v3050
      %v3052 = vpop.xlane.xlu0 %3051
      %v3053 = vsub.f32 %v2635, %v3007
      %v3054 = vsub.f32 %v2638, %v3010
      %v3055 = vsub.f32 %v2687, %v3013
      %v3056 = vsub.f32 %v2690, %v3016
      %v3057 = vsub.f32 %v2739, %v3019
      %v3058 = vsub.f32 %v2742, %v3022
      %v3059 = vsub.f32 %v2791, %v3025
      %v3060 = vsub.f32 %v2794, %v3028
      %v3061 = vsub.f32 %v2843, %v3031
      %v3062 = vsub.f32 %v2846, %v3034
      %v3063 = vsub.f32 %v2895, %v3037
      %v3064 = vsub.f32 %v2898, %v3040
      %v3065 = vsub.f32 %v2947, %v3043
      %v3066 = vsub.f32 %v2950, %v3046
      %v3067 = vsub.f32 %v2999, %v3049
      %v3068 = vsub.f32 %v3002, %v3052
      %v3069 = vmul.f32 %v3053, 1.442695
      %v3070 = vpow.pop %v3069
      %v3071 = vmul.f32 %v3054, 1.442695
      %v3072 = vpow.pop %v3071
      %v3073 = vmul.f32 %v3055, 1.442695
      %v3074 = vpow.pop %v3073
      %v3075 = vmul.f32 %v3056, 1.442695
      %v3076 = vpow.pop %v3075
      %v3077 = vmul.f32 %v3057, 1.442695
      %v3078 = vpow.pop %v3077
      %v3079 = vmul.f32 %v3058, 1.442695
      %v3080 = vpow.pop %v3079
      %v3081 = vmul.f32 %v3059, 1.442695
      %v3082 = vpow.pop %v3081
      %v3083 = vmul.f32 %v3060, 1.442695
      %v3084 = vpow.pop %v3083
      %v3085 = vmul.f32 %v3061, 1.442695
      %v3086 = vpow.pop %v3085
      %v3087 = vmul.f32 %v3062, 1.442695
      %v3088 = vpow.pop %v3087
      %v3089 = vmul.f32 %v3063, 1.442695
      %v3090 = vpow.pop %v3089
      %v3091 = vmul.f32 %v3064, 1.442695
      %v3092 = vpow.pop %v3091
      %v3093 = vmul.f32 %v3065, 1.442695
      %v3094 = vpow.pop %v3093
      %v3095 = vmul.f32 %v3066, 1.442695
      %v3096 = vpow.pop %v3095
      %v3097 = vmul.f32 %v3067, 1.442695
      %v3098 = vpow.pop %v3097
      %v3099 = vmul.f32 %v3068, 1.442695
      %v3100 = vpow.pop %v3099
      %v3101 = vsel %vm901, %v3070, 0.0
      %3102 = vadd.xlane.f32.xlu0 %v3101
      %v3103 = vpop.xlane.xlu0 %3102
      %v3104 = vsel %vm901, %v3072, 0.0
      %3105 = vadd.xlane.f32.xlu0 %v3104
      %v3106 = vpop.xlane.xlu0 %3105
      %v3107 = vsel %vm901, %v3074, 0.0
      %3108 = vadd.xlane.f32.xlu0 %v3107
      %v3109 = vpop.xlane.xlu0 %3108
      %v3110 = vsel %vm901, %v3076, 0.0
      %3111 = vadd.xlane.f32.xlu0 %v3110
      %v3112 = vpop.xlane.xlu0 %3111
      %v3113 = vsel %vm901, %v3078, 0.0
      %3114 = vadd.xlane.f32.xlu0 %v3113
      %v3115 = vpop.xlane.xlu0 %3114
      %v3116 = vsel %vm901, %v3080, 0.0
      %3117 = vadd.xlane.f32.xlu0 %v3116
      %v3118 = vpop.xlane.xlu0 %3117
      %v3119 = vsel %vm901, %v3082, 0.0
      %3120 = vadd.xlane.f32.xlu0 %v3119
      %v3121 = vpop.xlane.xlu0 %3120
      %v3122 = vsel %vm901, %v3084, 0.0
      %3123 = vadd.xlane.f32.xlu0 %v3122
      %v3124 = vpop.xlane.xlu0 %3123
      %v3125 = vsel %vm901, %v3086, 0.0
      %3126 = vadd.xlane.f32.xlu0 %v3125
      %v3127 = vpop.xlane.xlu0 %3126
      %v3128 = vsel %vm901, %v3088, 0.0
      %3129 = vadd.xlane.f32.xlu0 %v3128
      %v3130 = vpop.xlane.xlu0 %3129
      %v3131 = vsel %vm901, %v3090, 0.0
      %3132 = vadd.xlane.f32.xlu0 %v3131
      %v3133 = vpop.xlane.xlu0 %3132
      %v3134 = vsel %vm901, %v3092, 0.0
      %3135 = vadd.xlane.f32.xlu0 %v3134
      %v3136 = vpop.xlane.xlu0 %3135
      %v3137 = vsel %vm901, %v3094, 0.0
      %3138 = vadd.xlane.f32.xlu0 %v3137
      %v3139 = vpop.xlane.xlu0 %3138
      %v3140 = vsel %vm901, %v3096, 0.0
      %3141 = vadd.xlane.f32.xlu0 %v3140
      %v3142 = vpop.xlane.xlu0 %3141
      %v3143 = vsel %vm901, %v3098, 0.0
      %3144 = vadd.xlane.f32.xlu0 %v3143
      %v3145 = vpop.xlane.xlu0 %3144
      %v3146 = vsel %vm901, %v3100, 0.0
      %3147 = vadd.xlane.f32.xlu0 %v3146
      %v3148 = vpop.xlane.xlu0 %3147
      %v3149 = vrcp.pop %v3103
      %v3150 = vrcp.pop %v3106
      %v3151 = vrcp.pop %v3109
      %v3152 = vrcp.pop %v3112
      %v3153 = vrcp.pop %v3115
      %v3154 = vrcp.pop %v3118
      %v3155 = vrcp.pop %v3121
      %v3156 = vrcp.pop %v3124
      %v3157 = vrcp.pop %v3127
      %v3158 = vrcp.pop %v3130
      %v3159 = vrcp.pop %v3133
      %v3160 = vrcp.pop %v3136
      %v3161 = vrcp.pop %v3139
      %v3162 = vrcp.pop %v3142
      %v3163 = vrcp.pop %v3145
      %v3164 = vrcp.pop %v3148
      %v3165 = vmul.f32 %v3070, %v3149
      %v3166 = vmul.f32 %v3072, %v3150
      %v3167 = vmul.f32 %v3074, %v3151
      %v3168 = vmul.f32 %v3076, %v3152
      %v3169 = vmul.f32 %v3078, %v3153
      %v3170 = vmul.f32 %v3080, %v3154
      %v3171 = vmul.f32 %v3082, %v3155
      %v3172 = vmul.f32 %v3084, %v3156
      %v3173 = vmul.f32 %v3086, %v3157
      %v3174 = vmul.f32 %v3088, %v3158
      %v3175 = vmul.f32 %v3090, %v3159
      %v3176 = vmul.f32 %v3092, %v3160
      %v3177 = vmul.f32 %v3094, %v3161
      %v3178 = vmul.f32 %v3096, %v3162
      %v3179 = vmul.f32 %v3098, %v3163
      %v3180 = vmul.f32 %v3100, %v3164
      %v3181 = vpack.c.bf16 %v3166, %v3165
      %v3182 = vpack.c.bf16 %v3168, %v3167
      %v3183 = vpack.c.bf16 %v3170, %v3169
      %v3184 = vpack.c.bf16 %v3172, %v3171
      %v3185 = vpack.c.bf16 %v3174, %v3173
      %v3186 = vpack.c.bf16 %v3176, %v3175
      %v3187 = vpack.c.bf16 %v3178, %v3177
      %v3188 = vpack.c.bf16 %v3180, %v3179
      %3189 = vrot.lane.b32.xlu0 %v2578, 48
      %v3190 = vpop.permute.xlu0 %3189
      %v3193 = vsel %vm901, %v3181, 0
      %3195 = vmatprep.subr.bf16.mxu0 0
      %3196 = vmatpush1.bf16.msra.mxu0 0
      %3197 = vmatprep.subr.bf16.mxu0 0
      %3198 = vmatpush1.bf16.msra.mxu0 0
      %3199 = vmatprep.subr.bf16.mxu0 0
      %3200 = vmatpush1.bf16.msra.mxu0 0
      %3201 = vmatprep.subr.bf16.mxu0 0
      %3202 = vmatpush1.bf16.msra.mxu0 0
      %3203 = vmatprep.subr.bf16.mxu0 0
      %3204 = vmatpush1.bf16.msra.mxu0 0
      %3205 = vmatprep.subr.bf16.mxu0 0
      %3206 = vmatpush1.bf16.msra.mxu0 0
      %3207 = vmatprep.subr.bf16.mxu0 0
      %3208 = vmatpush1.bf16.msra.mxu0 0
      %3209 = vmatprep.subr.bf16.mxu0 0
      %3210 = vmatpush1.bf16.msra.mxu0 %v3190
      %3211 = vmatprep.subr.bf16.mxu0 0
      %3212 = vmatpush2.bf16.msra.mxu0 0
      %3213 = vmatprep.subr.bf16.mxu0 0
      %3214 = vmatpush2.bf16.msra.mxu0 0
      %3215 = vmatprep.subr.bf16.mxu0 0
      %3216 = vmatpush2.bf16.msra.mxu0 0
      %3217 = vmatprep.subr.bf16.mxu0 0
      %3218 = vmatpush2.bf16.msra.mxu0 0
      %3219 = vmatprep.subr.bf16.mxu0 0
      %3220 = vmatpush2.bf16.msra.mxu0 0
      %3221 = vmatprep.subr.bf16.mxu0 0
      %3222 = vmatpush2.bf16.msra.mxu0 0
      %3223 = vmatprep.subr.bf16.mxu0 0
      %3224 = vmatpush2.bf16.msra.mxu0 0
      %3225 = vmatprep.subr.bf16.mxu0 0
      %3226 = vmatpush2.bf16.msra.mxu0 0
      %3227 = vmatprep.mubr.bf16.mxu0 0
      %3228 = vmatmul.mubr.bf16.gmra.mxu0 %v3193
      %v3229 = vpop.f32.mrf.mxu0
      %v3230 = vadd.f32 0.0, %v3229
      %v3231 = vpop.f32.mrf.mxu0
      %v3232 = vpop.f32.mrf.mxu0
      %v3233 = vadd.f32 0.0, %v3232
      %v3234 = vpop.f32.mrf.mxu0
      %3235 = vdwg.mxu0
      %3236 = vrot.lane.b32.xlu0 %v2579, 48
      %v3237 = vpop.permute.xlu0 %3236
      %v3240 = vsel %vm901, %v3182, 0
      %3242 = vmatprep.subr.bf16.mxu0 0
      %3243 = vmatpush1.bf16.msra.mxu0 0
      %3244 = vmatprep.subr.bf16.mxu0 0
      %3245 = vmatpush1.bf16.msra.mxu0 0
      %3246 = vmatprep.subr.bf16.mxu0 0
      %3247 = vmatpush1.bf16.msra.mxu0 0
      %3248 = vmatprep.subr.bf16.mxu0 0
      %3249 = vmatpush1.bf16.msra.mxu0 0
      %3250 = vmatprep.subr.bf16.mxu0 0
      %3251 = vmatpush1.bf16.msra.mxu0 0
      %3252 = vmatprep.subr.bf16.mxu0 0
      %3253 = vmatpush1.bf16.msra.mxu0 0
      %3254 = vmatprep.subr.bf16.mxu0 0
      %3255 = vmatpush1.bf16.msra.mxu0 0
      %3256 = vmatprep.subr.bf16.mxu0 0
      %3257 = vmatpush1.bf16.msra.mxu0 %v3237
      %3258 = vmatprep.subr.bf16.mxu0 0
      %3259 = vmatpush2.bf16.msra.mxu0 0
      %3260 = vmatprep.subr.bf16.mxu0 0
      %3261 = vmatpush2.bf16.msra.mxu0 0
      %3262 = vmatprep.subr.bf16.mxu0 0
      %3263 = vmatpush2.bf16.msra.mxu0 0
      %3264 = vmatprep.subr.bf16.mxu0 0
      %3265 = vmatpush2.bf16.msra.mxu0 0
      %3266 = vmatprep.subr.bf16.mxu0 0
      %3267 = vmatpush2.bf16.msra.mxu0 0
      %3268 = vmatprep.subr.bf16.mxu0 0
      %3269 = vmatpush2.bf16.msra.mxu0 0
      %3270 = vmatprep.subr.bf16.mxu0 0
      %3271 = vmatpush2.bf16.msra.mxu0 0
      %3272 = vmatprep.subr.bf16.mxu0 0
      %3273 = vmatpush2.bf16.msra.mxu0 0
      %3274 = vmatprep.mubr.bf16.mxu0 0
      %3275 = vmatmul.mubr.bf16.gmra.mxu0 %v3240
      %v3276 = vpop.f32.mrf.mxu0
      %v3277 = vadd.f32 0.0, %v3276
      %v3278 = vpop.f32.mrf.mxu0
      %v3279 = vpop.f32.mrf.mxu0
      %v3280 = vadd.f32 0.0, %v3279
      %v3281 = vpop.f32.mrf.mxu0
      %3282 = vdwg.mxu0
      %3283 = vrot.lane.b32.xlu0 %v2580, 48
      %v3284 = vpop.permute.xlu0 %3283
      %v3287 = vsel %vm901, %v3183, 0
      %3289 = vmatprep.subr.bf16.mxu0 0
      %3290 = vmatpush1.bf16.msra.mxu0 0
      %3291 = vmatprep.subr.bf16.mxu0 0
      %3292 = vmatpush1.bf16.msra.mxu0 0
      %3293 = vmatprep.subr.bf16.mxu0 0
      %3294 = vmatpush1.bf16.msra.mxu0 0
      %3295 = vmatprep.subr.bf16.mxu0 0
      %3296 = vmatpush1.bf16.msra.mxu0 0
      %3297 = vmatprep.subr.bf16.mxu0 0
      %3298 = vmatpush1.bf16.msra.mxu0 0
      %3299 = vmatprep.subr.bf16.mxu0 0
      %3300 = vmatpush1.bf16.msra.mxu0 0
      %3301 = vmatprep.subr.bf16.mxu0 0
      %3302 = vmatpush1.bf16.msra.mxu0 0
      %3303 = vmatprep.subr.bf16.mxu0 0
      %3304 = vmatpush1.bf16.msra.mxu0 %v3284
      %3305 = vmatprep.subr.bf16.mxu0 0
      %3306 = vmatpush2.bf16.msra.mxu0 0
      %3307 = vmatprep.subr.bf16.mxu0 0
      %3308 = vmatpush2.bf16.msra.mxu0 0
      %3309 = vmatprep.subr.bf16.mxu0 0
      %3310 = vmatpush2.bf16.msra.mxu0 0
      %3311 = vmatprep.subr.bf16.mxu0 0
      %3312 = vmatpush2.bf16.msra.mxu0 0
      %3313 = vmatprep.subr.bf16.mxu0 0
      %3314 = vmatpush2.bf16.msra.mxu0 0
      %3315 = vmatprep.subr.bf16.mxu0 0
      %3316 = vmatpush2.bf16.msra.mxu0 0
      %3317 = vmatprep.subr.bf16.mxu0 0
      %3318 = vmatpush2.bf16.msra.mxu0 0
      %3319 = vmatprep.subr.bf16.mxu0 0
      %3320 = vmatpush2.bf16.msra.mxu0 0
      %3321 = vmatprep.mubr.bf16.mxu0 0
      %3322 = vmatmul.mubr.bf16.gmra.mxu0 %v3287
      %v3323 = vpop.f32.mrf.mxu0
      %v3324 = vadd.f32 0.0, %v3323
      %v3325 = vpop.f32.mrf.mxu0
      %v3326 = vpop.f32.mrf.mxu0
      %v3327 = vadd.f32 0.0, %v3326
      %v3328 = vpop.f32.mrf.mxu0
      %3329 = vdwg.mxu0
      %3330 = vrot.lane.b32.xlu0 %v2581, 48
      %v3331 = vpop.permute.xlu0 %3330
      %v3334 = vsel %vm901, %v3184, 0
      %3336 = vmatprep.subr.bf16.mxu0 0
      %3337 = vmatpush1.bf16.msra.mxu0 0
      %3338 = vmatprep.subr.bf16.mxu0 0
      %3339 = vmatpush1.bf16.msra.mxu0 0
      %3340 = vmatprep.subr.bf16.mxu0 0
      %3341 = vmatpush1.bf16.msra.mxu0 0
      %3342 = vmatprep.subr.bf16.mxu0 0
      %3343 = vmatpush1.bf16.msra.mxu0 0
      %3344 = vmatprep.subr.bf16.mxu0 0
      %3345 = vmatpush1.bf16.msra.mxu0 0
      %3346 = vmatprep.subr.bf16.mxu0 0
      %3347 = vmatpush1.bf16.msra.mxu0 0
      %3348 = vmatprep.subr.bf16.mxu0 0
      %3349 = vmatpush1.bf16.msra.mxu0 0
      %3350 = vmatprep.subr.bf16.mxu0 0
      %3351 = vmatpush1.bf16.msra.mxu0 %v3331
      %3352 = vmatprep.subr.bf16.mxu0 0
      %3353 = vmatpush2.bf16.msra.mxu0 0
      %3354 = vmatprep.subr.bf16.mxu0 0
      %3355 = vmatpush2.bf16.msra.mxu0 0
      %3356 = vmatprep.subr.bf16.mxu0 0
      %3357 = vmatpush2.bf16.msra.mxu0 0
      %3358 = vmatprep.subr.bf16.mxu0 0
      %3359 = vmatpush2.bf16.msra.mxu0 0
      %3360 = vmatprep.subr.bf16.mxu0 0
      %3361 = vmatpush2.bf16.msra.mxu0 0
      %3362 = vmatprep.subr.bf16.mxu0 0
      %3363 = vmatpush2.bf16.msra.mxu0 0
      %3364 = vmatprep.subr.bf16.mxu0 0
      %3365 = vmatpush2.bf16.msra.mxu0 0
      %3366 = vmatprep.subr.bf16.mxu0 0
      %3367 = vmatpush2.bf16.msra.mxu0 0
      %3368 = vmatprep.mubr.bf16.mxu0 0
      %3369 = vmatmul.mubr.bf16.gmra.mxu0 %v3334
      %v3370 = vpop.f32.mrf.mxu0
      %v3371 = vadd.f32 0.0, %v3370
      %v3372 = vpop.f32.mrf.mxu0
      %v3373 = vpop.f32.mrf.mxu0
      %v3374 = vadd.f32 0.0, %v3373
      %v3375 = vpop.f32.mrf.mxu0
      %3376 = vdwg.mxu0
      %3377 = vrot.lane.b32.xlu0 %v2582, 48
      %v3378 = vpop.permute.xlu0 %3377
      %v3381 = vsel %vm901, %v3185, 0
      %3383 = vmatprep.subr.bf16.mxu0 0
      %3384 = vmatpush1.bf16.msra.mxu0 0
      %3385 = vmatprep.subr.bf16.mxu0 0
      %3386 = vmatpush1.bf16.msra.mxu0 0
      %3387 = vmatprep.subr.bf16.mxu0 0
      %3388 = vmatpush1.bf16.msra.mxu0 0
      %3389 = vmatprep.subr.bf16.mxu0 0
      %3390 = vmatpush1.bf16.msra.mxu0 0
      %3391 = vmatprep.subr.bf16.mxu0 0
      %3392 = vmatpush1.bf16.msra.mxu0 0
      %3393 = vmatprep.subr.bf16.mxu0 0
      %3394 = vmatpush1.bf16.msra.mxu0 0
      %3395 = vmatprep.subr.bf16.mxu0 0
      %3396 = vmatpush1.bf16.msra.mxu0 0
      %3397 = vmatprep.subr.bf16.mxu0 0
      %3398 = vmatpush1.bf16.msra.mxu0 %v3378
      %3399 = vmatprep.subr.bf16.mxu0 0
      %3400 = vmatpush2.bf16.msra.mxu0 0
      %3401 = vmatprep.subr.bf16.mxu0 0
      %3402 = vmatpush2.bf16.msra.mxu0 0
      %3403 = vmatprep.subr.bf16.mxu0 0
      %3404 = vmatpush2.bf16.msra.mxu0 0
      %3405 = vmatprep.subr.bf16.mxu0 0
      %3406 = vmatpush2.bf16.msra.mxu0 0
      %3407 = vmatprep.subr.bf16.mxu0 0
      %3408 = vmatpush2.bf16.msra.mxu0 0
      %3409 = vmatprep.subr.bf16.mxu0 0
      %3410 = vmatpush2.bf16.msra.mxu0 0
      %3411 = vmatprep.subr.bf16.mxu0 0
      %3412 = vmatpush2.bf16.msra.mxu0 0
      %3413 = vmatprep.subr.bf16.mxu0 0
      %3414 = vmatpush2.bf16.msra.mxu0 0
      %3415 = vmatprep.mubr.bf16.mxu0 0
      %3416 = vmatmul.mubr.bf16.gmra.mxu0 %v3381
      %v3417 = vpop.f32.mrf.mxu0
      %v3418 = vadd.f32 0.0, %v3417
      %v3419 = vpop.f32.mrf.mxu0
      %v3420 = vpop.f32.mrf.mxu0
      %v3421 = vadd.f32 0.0, %v3420
      %v3422 = vpop.f32.mrf.mxu0
      %3423 = vdwg.mxu0
      %3424 = vrot.lane.b32.xlu0 %v2583, 48
      %v3425 = vpop.permute.xlu0 %3424
      %v3428 = vsel %vm901, %v3186, 0
      %3430 = vmatprep.subr.bf16.mxu0 0
      %3431 = vmatpush1.bf16.msra.mxu0 0
      %3432 = vmatprep.subr.bf16.mxu0 0
      %3433 = vmatpush1.bf16.msra.mxu0 0
      %3434 = vmatprep.subr.bf16.mxu0 0
      %3435 = vmatpush1.bf16.msra.mxu0 0
      %3436 = vmatprep.subr.bf16.mxu0 0
      %3437 = vmatpush1.bf16.msra.mxu0 0
      %3438 = vmatprep.subr.bf16.mxu0 0
      %3439 = vmatpush1.bf16.msra.mxu0 0
      %3440 = vmatprep.subr.bf16.mxu0 0
      %3441 = vmatpush1.bf16.msra.mxu0 0
      %3442 = vmatprep.subr.bf16.mxu0 0
      %3443 = vmatpush1.bf16.msra.mxu0 0
      %3444 = vmatprep.subr.bf16.mxu0 0
      %3445 = vmatpush1.bf16.msra.mxu0 %v3425
      %3446 = vmatprep.subr.bf16.mxu0 0
      %3447 = vmatpush2.bf16.msra.mxu0 0
      %3448 = vmatprep.subr.bf16.mxu0 0
      %3449 = vmatpush2.bf16.msra.mxu0 0
      %3450 = vmatprep.subr.bf16.mxu0 0
      %3451 = vmatpush2.bf16.msra.mxu0 0
      %3452 = vmatprep.subr.bf16.mxu0 0
      %3453 = vmatpush2.bf16.msra.mxu0 0
      %3454 = vmatprep.subr.bf16.mxu0 0
      %3455 = vmatpush2.bf16.msra.mxu0 0
      %3456 = vmatprep.subr.bf16.mxu0 0
      %3457 = vmatpush2.bf16.msra.mxu0 0
      %3458 = vmatprep.subr.bf16.mxu0 0
      %3459 = vmatpush2.bf16.msra.mxu0 0
      %3460 = vmatprep.subr.bf16.mxu0 0
      %3461 = vmatpush2.bf16.msra.mxu0 0
      %3462 = vmatprep.mubr.bf16.mxu0 0
      %3463 = vmatmul.mubr.bf16.gmra.mxu0 %v3428
      %v3464 = vpop.f32.mrf.mxu0
      %v3465 = vadd.f32 0.0, %v3464
      %v3466 = vpop.f32.mrf.mxu0
      %v3467 = vpop.f32.mrf.mxu0
      %v3468 = vadd.f32 0.0, %v3467
      %v3469 = vpop.f32.mrf.mxu0
      %3470 = vdwg.mxu0
      %3471 = vrot.lane.b32.xlu0 %v2584, 48
      %v3472 = vpop.permute.xlu0 %3471
      %v3475 = vsel %vm901, %v3187, 0
      %3477 = vmatprep.subr.bf16.mxu0 0
      %3478 = vmatpush1.bf16.msra.mxu0 0
      %3479 = vmatprep.subr.bf16.mxu0 0
      %3480 = vmatpush1.bf16.msra.mxu0 0
      %3481 = vmatprep.subr.bf16.mxu0 0
      %3482 = vmatpush1.bf16.msra.mxu0 0
      %3483 = vmatprep.subr.bf16.mxu0 0
      %3484 = vmatpush1.bf16.msra.mxu0 0
      %3485 = vmatprep.subr.bf16.mxu0 0
      %3486 = vmatpush1.bf16.msra.mxu0 0
      %3487 = vmatprep.subr.bf16.mxu0 0
      %3488 = vmatpush1.bf16.msra.mxu0 0
      %3489 = vmatprep.subr.bf16.mxu0 0
      %3490 = vmatpush1.bf16.msra.mxu0 0
      %3491 = vmatprep.subr.bf16.mxu0 0
      %3492 = vmatpush1.bf16.msra.mxu0 %v3472
      %3493 = vmatprep.subr.bf16.mxu0 0
      %3494 = vmatpush2.bf16.msra.mxu0 0
      %3495 = vmatprep.subr.bf16.mxu0 0
      %3496 = vmatpush2.bf16.msra.mxu0 0
      %3497 = vmatprep.subr.bf16.mxu0 0
      %3498 = vmatpush2.bf16.msra.mxu0 0
      %3499 = vmatprep.subr.bf16.mxu0 0
      %3500 = vmatpush2.bf16.msra.mxu0 0
      %3501 = vmatprep.subr.bf16.mxu0 0
      %3502 = vmatpush2.bf16.msra.mxu0 0
      %3503 = vmatprep.subr.bf16.mxu0 0
      %3504 = vmatpush2.bf16.msra.mxu0 0
      %3505 = vmatprep.subr.bf16.mxu0 0
      %3506 = vmatpush2.bf16.msra.mxu0 0
      %3507 = vmatprep.subr.bf16.mxu0 0
      %3508 = vmatpush2.bf16.msra.mxu0 0
      %3509 = vmatprep.mubr.bf16.mxu0 0
      %3510 = vmatmul.mubr.bf16.gmra.mxu0 %v3475
      %v3511 = vpop.f32.mrf.mxu0
      %v3512 = vadd.f32 0.0, %v3511
      %v3513 = vpop.f32.mrf.mxu0
      %v3514 = vpop.f32.mrf.mxu0
      %v3515 = vadd.f32 0.0, %v3514
      %v3516 = vpop.f32.mrf.mxu0
      %3517 = vdwg.mxu0
      %3518 = vrot.lane.b32.xlu0 %v2585, 48
      %v3519 = vpop.permute.xlu0 %3518
      %v3522 = vsel %vm901, %v3188, 0
      %3524 = vmatprep.subr.bf16.mxu0 0
      %3525 = vmatpush1.bf16.msra.mxu0 0
      %3526 = vmatprep.subr.bf16.mxu0 0
      %3527 = vmatpush1.bf16.msra.mxu0 0
      %3528 = vmatprep.subr.bf16.mxu0 0
      %3529 = vmatpush1.bf16.msra.mxu0 0
      %3530 = vmatprep.subr.bf16.mxu0 0
      %3531 = vmatpush1.bf16.msra.mxu0 0
      %3532 = vmatprep.subr.bf16.mxu0 0
      %3533 = vmatpush1.bf16.msra.mxu0 0
      %3534 = vmatprep.subr.bf16.mxu0 0
      %3535 = vmatpush1.bf16.msra.mxu0 0
      %3536 = vmatprep.subr.bf16.mxu0 0
      %3537 = vmatpush1.bf16.msra.mxu0 0
      %3538 = vmatprep.subr.bf16.mxu0 0
      %3539 = vmatpush1.bf16.msra.mxu0 %v3519
      %3540 = vmatprep.subr.bf16.mxu0 0
      %3541 = vmatpush2.bf16.msra.mxu0 0
      %3542 = vmatprep.subr.bf16.mxu0 0
      %3543 = vmatpush2.bf16.msra.mxu0 0
      %3544 = vmatprep.subr.bf16.mxu0 0
      %3545 = vmatpush2.bf16.msra.mxu0 0
      %3546 = vmatprep.subr.bf16.mxu0 0
      %3547 = vmatpush2.bf16.msra.mxu0 0
      %3548 = vmatprep.subr.bf16.mxu0 0
      %3549 = vmatpush2.bf16.msra.mxu0 0
      %3550 = vmatprep.subr.bf16.mxu0 0
      %3551 = vmatpush2.bf16.msra.mxu0 0
      %3552 = vmatprep.subr.bf16.mxu0 0
      %3553 = vmatpush2.bf16.msra.mxu0 0
      %3554 = vmatprep.subr.bf16.mxu0 0
      %3555 = vmatpush2.bf16.msra.mxu0 0
      %3556 = vmatprep.mubr.bf16.mxu0 0
      %3557 = vmatmul.mubr.bf16.gmra.mxu0 %v3522
      %v3558 = vpop.f32.mrf.mxu0
      %v3559 = vadd.f32 0.0, %v3558
      %v3560 = vpop.f32.mrf.mxu0
      %v3561 = vpop.f32.mrf.mxu0
      %v3562 = vadd.f32 0.0, %v3561
      %v3563 = vpop.f32.mrf.mxu0
      %3564 = vdwg.mxu0
      %3581 = vrot.lane.b32.xlu0 %v3230, 16
      %v3582 = vpop.permute.xlu0 %3581
      %3583 = vrot.lane.b32.xlu0 %v3233, 16
      %v3584 = vpop.permute.xlu0 %3583
      %3585 = vrot.lane.b32.xlu0 %v3277, 16
      %v3586 = vpop.permute.xlu0 %3585
      %3587 = vrot.lane.b32.xlu0 %v3280, 16
      %v3588 = vpop.permute.xlu0 %3587
      %3589 = vrot.lane.b32.xlu0 %v3324, 16
      %v3590 = vpop.permute.xlu0 %3589
      %3591 = vrot.lane.b32.xlu0 %v3327, 16
      %v3592 = vpop.permute.xlu0 %3591
      %3593 = vrot.lane.b32.xlu0 %v3371, 16
      %v3594 = vpop.permute.xlu0 %3593
      %3595 = vrot.lane.b32.xlu0 %v3374, 16
      %v3596 = vpop.permute.xlu0 %3595
      %3597 = vrot.lane.b32.xlu0 %v3418, 16
      %v3598 = vpop.permute.xlu0 %3597
      %3599 = vrot.lane.b32.xlu0 %v3421, 16
      %v3600 = vpop.permute.xlu0 %3599
      %3601 = vrot.lane.b32.xlu0 %v3465, 16
      %v3602 = vpop.permute.xlu0 %3601
      %3603 = vrot.lane.b32.xlu0 %v3468, 16
      %v3604 = vpop.permute.xlu0 %3603
      %3605 = vrot.lane.b32.xlu0 %v3512, 16
      %v3606 = vpop.permute.xlu0 %3605
      %3607 = vrot.lane.b32.xlu0 %v3515, 16
      %v3608 = vpop.permute.xlu0 %3607
      %3609 = vrot.lane.b32.xlu0 %v3559, 16
      %v3610 = vpop.permute.xlu0 %3609
      %3611 = vrot.lane.b32.xlu0 %v3562, 16
      %v3612 = vpop.permute.xlu0 %3611
      %vm3629 = vcmask 195712
      %3630 = vst.msk [vmem:[#allocation3] sm:$0xff] %vm3629, %v3582
      %3631 = vst.msk [vmem:[#allocation3 + $0x8] sm:$0xff] %vm3629, %v3584
      %3632 = vst.msk [vmem:[#allocation3 + $0x10] sm:$0xff] %vm3629, %v3586
      %3633 = vst.msk [vmem:[#allocation3 + $0x18] sm:$0xff] %vm3629, %v3588
      %3634 = vst.msk [vmem:[#allocation3 + $0x20] sm:$0xff] %vm3629, %v3590
      %3635 = vst.msk [vmem:[#allocation3 + $0x28] sm:$0xff] %vm3629, %v3592
      %3636 = vst.msk [vmem:[#allocation3 + $0x30] sm:$0xff] %vm3629, %v3594
      %3637 = vst.msk [vmem:[#allocation3 + $0x38] sm:$0xff] %vm3629, %v3596
      %3638 = vst.msk [vmem:[#allocation3 + $0x40] sm:$0xff] %vm3629, %v3598
      %3639 = vst.msk [vmem:[#allocation3 + $0x48] sm:$0xff] %vm3629, %v3600
      %3640 = vst.msk [vmem:[#allocation3 + $0x50] sm:$0xff] %vm3629, %v3602
      %3641 = vst.msk [vmem:[#allocation3 + $0x58] sm:$0xff] %vm3629, %v3604
      %3642 = vst.msk [vmem:[#allocation3 + $0x60] sm:$0xff] %vm3629, %v3606
      %3643 = vst.msk [vmem:[#allocation3 + $0x68] sm:$0xff] %vm3629, %v3608
      %3644 = vst.msk [vmem:[#allocation3 + $0x70] sm:$0xff] %vm3629, %v3610
      %3645 = vst.msk [vmem:[#allocation3 + $0x78] sm:$0xff] %vm3629, %v3612
      %v3646 = vld [vmem:[#allocation2] sm:$0xff]
      %v3647 = vld [vmem:[#allocation2 + $0x8] sm:$0xff]
      %v3648 = vld [vmem:[#allocation2 + $0x10] sm:$0xff]
      %v3649 = vld [vmem:[#allocation2 + $0x18] sm:$0xff]
      %v3650 = vld [vmem:[#allocation2 + $0x20] sm:$0xff]
      %v3651 = vld [vmem:[#allocation2 + $0x28] sm:$0xff]
      %v3652 = vld [vmem:[#allocation2 + $0x30] sm:$0xff]
      %v3653 = vld [vmem:[#allocation2 + $0x38] sm:$0xff]
      %v3654 = vld [vmem:[#allocation2 + $0x40] sm:$0xff]
      %v3655 = vld [vmem:[#allocation2 + $0x48] sm:$0xff]
      %v3656 = vld [vmem:[#allocation2 + $0x50] sm:$0xff]
      %v3657 = vld [vmem:[#allocation2 + $0x58] sm:$0xff]
      %v3658 = vld [vmem:[#allocation2 + $0x60] sm:$0xff]
      %v3659 = vld [vmem:[#allocation2 + $0x68] sm:$0xff]
      %v3660 = vld [vmem:[#allocation2 + $0x70] sm:$0xff]
      %v3661 = vld [vmem:[#allocation2 + $0x78] sm:$0xff]
      %v3662 = vpack.c.bf16 %v3647, %v3646
      %v3663 = vpack.c.bf16 %v3649, %v3648
      %v3664 = vpack.c.bf16 %v3651, %v3650
      %v3665 = vpack.c.bf16 %v3653, %v3652
      %v3666 = vpack.c.bf16 %v3655, %v3654
      %v3667 = vpack.c.bf16 %v3657, %v3656
      %v3668 = vpack.c.bf16 %v3659, %v3658
      %v3669 = vpack.c.bf16 %v3661, %v3660
      %s3670 = scalar_lea.vmem %s5, 48
      %v3671 = vld [vmem:[%s3670] sm:$0xff]
      %v3672 = vld [vmem:[%s3670 + $0x8] sm:$0xff]
      %3674 = vrot.lane.b32.xlu0 %v3662, 104
      %v3675 = vpop.permute.xlu0 %3674
      %3676 = vrot.lane.b32.xlu0 %v3662, 72
      %v3677 = vpop.permute.xlu0 %3676
      %v3679 = vsel %vm503, %v3675, 0
      %v3682 = vsel %vm503, %v3677, 0
      %3684 = vmatprep.subr.bf16.mxu0 0
      %3685 = vmatpush1.bf16.xpose.msra.mxu0 0
      %3686 = vmatprep.subr.bf16.mxu0 0
      %3687 = vmatpush1.bf16.xpose.msra.mxu0 0
      %3688 = vmatprep.subr.bf16.mxu0 0
      %3689 = vmatpush1.bf16.xpose.msra.mxu0 0
      %3690 = vmatprep.subr.bf16.mxu0 0
      %3691 = vmatpush1.bf16.xpose.msra.mxu0 0
      %3692 = vmatprep.subr.bf16.mxu0 0
      %3693 = vmatpush1.bf16.xpose.msra.mxu0 0
      %3694 = vmatprep.subr.bf16.mxu0 0
      %3695 = vmatpush1.bf16.xpose.msra.mxu0 0
      %3696 = vmatprep.subr.bf16.mxu0 0
      %3697 = vmatpush1.bf16.xpose.msra.mxu0 0
      %3698 = vmatprep.subr.bf16.mxu0 0
      %3699 = vmatpush1.bf16.xpose.msra.mxu0 %v3682
      %3700 = vmatprep.subr.bf16.mxu0 0
      %3701 = vmatpush2.bf16.xpose.msra.mxu0 0
      %3702 = vmatprep.subr.bf16.mxu0 0
      %3703 = vmatpush2.bf16.xpose.msra.mxu0 0
      %3704 = vmatprep.subr.bf16.mxu0 0
      %3705 = vmatpush2.bf16.xpose.msra.mxu0 0
      %3706 = vmatprep.subr.bf16.mxu0 0
      %3707 = vmatpush2.bf16.xpose.msra.mxu0 0
      %3708 = vmatprep.subr.bf16.mxu0 0
      %3709 = vmatpush2.bf16.xpose.msra.mxu0 0
      %3710 = vmatprep.subr.bf16.mxu0 0
      %3711 = vmatpush2.bf16.xpose.msra.mxu0 0
      %3712 = vmatprep.subr.bf16.mxu0 0
      %3713 = vmatpush2.bf16.xpose.msra.mxu0 0
      %3714 = vmatprep.subr.bf16.mxu0 0
      %3715 = vmatpush2.bf16.xpose.msra.mxu0 0
      %3716 = vmatprep.mubr.bf16.mxu0 0
      %3717 = vmatmul.mubr.bf16.gmra.mxu0 %v3679
      %v3718 = vpop.f32.mrf.mxu0
      %v3719 = vadd.f32 %v3671, %v3718
      %v3720 = vpop.f32.mrf.mxu0
      %v3721 = vpop.f32.mrf.mxu0
      %v3722 = vadd.f32 %v3672, %v3721
      %v3723 = vpop.f32.mrf.mxu0
      %3724 = vdwg.mxu0
      %3726 = vrot.lane.b32.xlu0 %v3663, 104
      %v3727 = vpop.permute.xlu0 %3726
      %3728 = vrot.lane.b32.xlu0 %v3663, 72
      %v3729 = vpop.permute.xlu0 %3728
      %v3731 = vsel %vm503, %v3727, 0
      %v3734 = vsel %vm503, %v3729, 0
      %3736 = vmatprep.subr.bf16.mxu0 0
      %3737 = vmatpush1.bf16.xpose.msra.mxu0 0
      %3738 = vmatprep.subr.bf16.mxu0 0
      %3739 = vmatpush1.bf16.xpose.msra.mxu0 0
      %3740 = vmatprep.subr.bf16.mxu0 0
      %3741 = vmatpush1.bf16.xpose.msra.mxu0 0
      %3742 = vmatprep.subr.bf16.mxu0 0
      %3743 = vmatpush1.bf16.xpose.msra.mxu0 0
      %3744 = vmatprep.subr.bf16.mxu0 0
      %3745 = vmatpush1.bf16.xpose.msra.mxu0 0
      %3746 = vmatprep.subr.bf16.mxu0 0
      %3747 = vmatpush1.bf16.xpose.msra.mxu0 0
      %3748 = vmatprep.subr.bf16.mxu0 0
      %3749 = vmatpush1.bf16.xpose.msra.mxu0 0
      %3750 = vmatprep.subr.bf16.mxu0 0
      %3751 = vmatpush1.bf16.xpose.msra.mxu0 %v3734
      %3752 = vmatprep.subr.bf16.mxu0 0
      %3753 = vmatpush2.bf16.xpose.msra.mxu0 0
      %3754 = vmatprep.subr.bf16.mxu0 0
      %3755 = vmatpush2.bf16.xpose.msra.mxu0 0
      %3756 = vmatprep.subr.bf16.mxu0 0
      %3757 = vmatpush2.bf16.xpose.msra.mxu0 0
      %3758 = vmatprep.subr.bf16.mxu0 0
      %3759 = vmatpush2.bf16.xpose.msra.mxu0 0
      %3760 = vmatprep.subr.bf16.mxu0 0
      %3761 = vmatpush2.bf16.xpose.msra.mxu0 0
      %3762 = vmatprep.subr.bf16.mxu0 0
      %3763 = vmatpush2.bf16.xpose.msra.mxu0 0
      %3764 = vmatprep.subr.bf16.mxu0 0
      %3765 = vmatpush2.bf16.xpose.msra.mxu0 0
      %3766 = vmatprep.subr.bf16.mxu0 0
      %3767 = vmatpush2.bf16.xpose.msra.mxu0 0
      %3768 = vmatprep.mubr.bf16.mxu0 0
      %3769 = vmatmul.mubr.bf16.gmra.mxu0 %v3731
      %v3770 = vpop.f32.mrf.mxu0
      %v3771 = vadd.f32 %v3671, %v3770
      %v3772 = vpop.f32.mrf.mxu0
      %v3773 = vpop.f32.mrf.mxu0
      %v3774 = vadd.f32 %v3672, %v3773
      %v3775 = vpop.f32.mrf.mxu0
      %3776 = vdwg.mxu0
      %3778 = vrot.lane.b32.xlu0 %v3664, 104
      %v3779 = vpop.permute.xlu0 %3778
      %3780 = vrot.lane.b32.xlu0 %v3664, 72
      %v3781 = vpop.permute.xlu0 %3780
      %v3783 = vsel %vm503, %v3779, 0
      %v3786 = vsel %vm503, %v3781, 0
      %3788 = vmatprep.subr.bf16.mxu0 0
      %3789 = vmatpush1.bf16.xpose.msra.mxu0 0
      %3790 = vmatprep.subr.bf16.mxu0 0
      %3791 = vmatpush1.bf16.xpose.msra.mxu0 0
      %3792 = vmatprep.subr.bf16.mxu0 0
      %3793 = vmatpush1.bf16.xpose.msra.mxu0 0
      %3794 = vmatprep.subr.bf16.mxu0 0
      %3795 = vmatpush1.bf16.xpose.msra.mxu0 0
      %3796 = vmatprep.subr.bf16.mxu0 0
      %3797 = vmatpush1.bf16.xpose.msra.mxu0 0
      %3798 = vmatprep.subr.bf16.mxu0 0
      %3799 = vmatpush1.bf16.xpose.msra.mxu0 0
      %3800 = vmatprep.subr.bf16.mxu0 0
      %3801 = vmatpush1.bf16.xpose.msra.mxu0 0
      %3802 = vmatprep.subr.bf16.mxu0 0
      %3803 = vmatpush1.bf16.xpose.msra.mxu0 %v3786
      %3804 = vmatprep.subr.bf16.mxu0 0
      %3805 = vmatpush2.bf16.xpose.msra.mxu0 0
      %3806 = vmatprep.subr.bf16.mxu0 0
      %3807 = vmatpush2.bf16.xpose.msra.mxu0 0
      %3808 = vmatprep.subr.bf16.mxu0 0
      %3809 = vmatpush2.bf16.xpose.msra.mxu0 0
      %3810 = vmatprep.subr.bf16.mxu0 0
      %3811 = vmatpush2.bf16.xpose.msra.mxu0 0
      %3812 = vmatprep.subr.bf16.mxu0 0
      %3813 = vmatpush2.bf16.xpose.msra.mxu0 0
      %3814 = vmatprep.subr.bf16.mxu0 0
      %3815 = vmatpush2.bf16.xpose.msra.mxu0 0
      %3816 = vmatprep.subr.bf16.mxu0 0
      %3817 = vmatpush2.bf16.xpose.msra.mxu0 0
      %3818 = vmatprep.subr.bf16.mxu0 0
      %3819 = vmatpush2.bf16.xpose.msra.mxu0 0
      %3820 = vmatprep.mubr.bf16.mxu0 0
      %3821 = vmatmul.mubr.bf16.gmra.mxu0 %v3783
      %v3822 = vpop.f32.mrf.mxu0
      %v3823 = vadd.f32 %v3671, %v3822
      %v3824 = vpop.f32.mrf.mxu0
      %v3825 = vpop.f32.mrf.mxu0
      %v3826 = vadd.f32 %v3672, %v3825
      %v3827 = vpop.f32.mrf.mxu0
      %3828 = vdwg.mxu0
      %3830 = vrot.lane.b32.xlu0 %v3665, 104
      %v3831 = vpop.permute.xlu0 %3830
      %3832 = vrot.lane.b32.xlu0 %v3665, 72
      %v3833 = vpop.permute.xlu0 %3832
      %v3835 = vsel %vm503, %v3831, 0
      %v3838 = vsel %vm503, %v3833, 0
      %3840 = vmatprep.subr.bf16.mxu0 0
      %3841 = vmatpush1.bf16.xpose.msra.mxu0 0
      %3842 = vmatprep.subr.bf16.mxu0 0
      %3843 = vmatpush1.bf16.xpose.msra.mxu0 0
      %3844 = vmatprep.subr.bf16.mxu0 0
      %3845 = vmatpush1.bf16.xpose.msra.mxu0 0
      %3846 = vmatprep.subr.bf16.mxu0 0
      %3847 = vmatpush1.bf16.xpose.msra.mxu0 0
      %3848 = vmatprep.subr.bf16.mxu0 0
      %3849 = vmatpush1.bf16.xpose.msra.mxu0 0
      %3850 = vmatprep.subr.bf16.mxu0 0
      %3851 = vmatpush1.bf16.xpose.msra.mxu0 0
      %3852 = vmatprep.subr.bf16.mxu0 0
      %3853 = vmatpush1.bf16.xpose.msra.mxu0 0
      %3854 = vmatprep.subr.bf16.mxu0 0
      %3855 = vmatpush1.bf16.xpose.msra.mxu0 %v3838
      %3856 = vmatprep.subr.bf16.mxu0 0
      %3857 = vmatpush2.bf16.xpose.msra.mxu0 0
      %3858 = vmatprep.subr.bf16.mxu0 0
      %3859 = vmatpush2.bf16.xpose.msra.mxu0 0
      %3860 = vmatprep.subr.bf16.mxu0 0
      %3861 = vmatpush2.bf16.xpose.msra.mxu0 0
      %3862 = vmatprep.subr.bf16.mxu0 0
      %3863 = vmatpush2.bf16.xpose.msra.mxu0 0
      %3864 = vmatprep.subr.bf16.mxu0 0
      %3865 = vmatpush2.bf16.xpose.msra.mxu0 0
      %3866 = vmatprep.subr.bf16.mxu0 0
      %3867 = vmatpush2.bf16.xpose.msra.mxu0 0
      %3868 = vmatprep.subr.bf16.mxu0 0
      %3869 = vmatpush2.bf16.xpose.msra.mxu0 0
      %3870 = vmatprep.subr.bf16.mxu0 0
      %3871 = vmatpush2.bf16.xpose.msra.mxu0 0
      %3872 = vmatprep.mubr.bf16.mxu0 0
      %3873 = vmatmul.mubr.bf16.gmra.mxu0 %v3835
      %v3874 = vpop.f32.mrf.mxu0
      %v3875 = vadd.f32 %v3671, %v3874
      %v3876 = vpop.f32.mrf.mxu0
      %v3877 = vpop.f32.mrf.mxu0
      %v3878 = vadd.f32 %v3672, %v3877
      %v3879 = vpop.f32.mrf.mxu0
      %3880 = vdwg.mxu0
      %3882 = vrot.lane.b32.xlu0 %v3666, 104
      %v3883 = vpop.permute.xlu0 %3882
      %3884 = vrot.lane.b32.xlu0 %v3666, 72
      %v3885 = vpop.permute.xlu0 %3884
      %v3887 = vsel %vm503, %v3883, 0
      %v3890 = vsel %vm503, %v3885, 0
      %3892 = vmatprep.subr.bf16.mxu0 0
      %3893 = vmatpush1.bf16.xpose.msra.mxu0 0
      %3894 = vmatprep.subr.bf16.mxu0 0
      %3895 = vmatpush1.bf16.xpose.msra.mxu0 0
      %3896 = vmatprep.subr.bf16.mxu0 0
      %3897 = vmatpush1.bf16.xpose.msra.mxu0 0
      %3898 = vmatprep.subr.bf16.mxu0 0
      %3899 = vmatpush1.bf16.xpose.msra.mxu0 0
      %3900 = vmatprep.subr.bf16.mxu0 0
      %3901 = vmatpush1.bf16.xpose.msra.mxu0 0
      %3902 = vmatprep.subr.bf16.mxu0 0
      %3903 = vmatpush1.bf16.xpose.msra.mxu0 0
      %3904 = vmatprep.subr.bf16.mxu0 0
      %3905 = vmatpush1.bf16.xpose.msra.mxu0 0
      %3906 = vmatprep.subr.bf16.mxu0 0
      %3907 = vmatpush1.bf16.xpose.msra.mxu0 %v3890
      %3908 = vmatprep.subr.bf16.mxu0 0
      %3909 = vmatpush2.bf16.xpose.msra.mxu0 0
      %3910 = vmatprep.subr.bf16.mxu0 0
      %3911 = vmatpush2.bf16.xpose.msra.mxu0 0
      %3912 = vmatprep.subr.bf16.mxu0 0
      %3913 = vmatpush2.bf16.xpose.msra.mxu0 0
      %3914 = vmatprep.subr.bf16.mxu0 0
      %3915 = vmatpush2.bf16.xpose.msra.mxu0 0
      %3916 = vmatprep.subr.bf16.mxu0 0
      %3917 = vmatpush2.bf16.xpose.msra.mxu0 0
      %3918 = vmatprep.subr.bf16.mxu0 0
      %3919 = vmatpush2.bf16.xpose.msra.mxu0 0
      %3920 = vmatprep.subr.bf16.mxu0 0
      %3921 = vmatpush2.bf16.xpose.msra.mxu0 0
      %3922 = vmatprep.subr.bf16.mxu0 0
      %3923 = vmatpush2.bf16.xpose.msra.mxu0 0
      %3924 = vmatprep.mubr.bf16.mxu0 0
      %3925 = vmatmul.mubr.bf16.gmra.mxu0 %v3887
      %v3926 = vpop.f32.mrf.mxu0
      %v3927 = vadd.f32 %v3671, %v3926
      %v3928 = vpop.f32.mrf.mxu0
      %v3929 = vpop.f32.mrf.mxu0
      %v3930 = vadd.f32 %v3672, %v3929
      %v3931 = vpop.f32.mrf.mxu0
      %3932 = vdwg.mxu0
      %3934 = vrot.lane.b32.xlu0 %v3667, 104
      %v3935 = vpop.permute.xlu0 %3934
      %3936 = vrot.lane.b32.xlu0 %v3667, 72
      %v3937 = vpop.permute.xlu0 %3936
      %v3939 = vsel %vm503, %v3935, 0
      %v3942 = vsel %vm503, %v3937, 0
      %3944 = vmatprep.subr.bf16.mxu0 0
      %3945 = vmatpush1.bf16.xpose.msra.mxu0 0
      %3946 = vmatprep.subr.bf16.mxu0 0
      %3947 = vmatpush1.bf16.xpose.msra.mxu0 0
      %3948 = vmatprep.subr.bf16.mxu0 0
      %3949 = vmatpush1.bf16.xpose.msra.mxu0 0
      %3950 = vmatprep.subr.bf16.mxu0 0
      %3951 = vmatpush1.bf16.xpose.msra.mxu0 0
      %3952 = vmatprep.subr.bf16.mxu0 0
      %3953 = vmatpush1.bf16.xpose.msra.mxu0 0
      %3954 = vmatprep.subr.bf16.mxu0 0
      %3955 = vmatpush1.bf16.xpose.msra.mxu0 0
      %3956 = vmatprep.subr.bf16.mxu0 0
      %3957 = vmatpush1.bf16.xpose.msra.mxu0 0
      %3958 = vmatprep.subr.bf16.mxu0 0
      %3959 = vmatpush1.bf16.xpose.msra.mxu0 %v3942
      %3960 = vmatprep.subr.bf16.mxu0 0
      %3961 = vmatpush2.bf16.xpose.msra.mxu0 0
      %3962 = vmatprep.subr.bf16.mxu0 0
      %3963 = vmatpush2.bf16.xpose.msra.mxu0 0
      %3964 = vmatprep.subr.bf16.mxu0 0
      %3965 = vmatpush2.bf16.xpose.msra.mxu0 0
      %3966 = vmatprep.subr.bf16.mxu0 0
      %3967 = vmatpush2.bf16.xpose.msra.mxu0 0
      %3968 = vmatprep.subr.bf16.mxu0 0
      %3969 = vmatpush2.bf16.xpose.msra.mxu0 0
      %3970 = vmatprep.subr.bf16.mxu0 0
      %3971 = vmatpush2.bf16.xpose.msra.mxu0 0
      %3972 = vmatprep.subr.bf16.mxu0 0
      %3973 = vmatpush2.bf16.xpose.msra.mxu0 0
      %3974 = vmatprep.subr.bf16.mxu0 0
      %3975 = vmatpush2.bf16.xpose.msra.mxu0 0
      %3976 = vmatprep.mubr.bf16.mxu0 0
      %3977 = vmatmul.mubr.bf16.gmra.mxu0 %v3939
      %v3978 = vpop.f32.mrf.mxu0
      %v3979 = vadd.f32 %v3671, %v3978
      %v3980 = vpop.f32.mrf.mxu0
      %v3981 = vpop.f32.mrf.mxu0
      %v3982 = vadd.f32 %v3672, %v3981
      %v3983 = vpop.f32.mrf.mxu0
      %3984 = vdwg.mxu0
      %3986 = vrot.lane.b32.xlu0 %v3668, 104
      %v3987 = vpop.permute.xlu0 %3986
      %3988 = vrot.lane.b32.xlu0 %v3668, 72
      %v3989 = vpop.permute.xlu0 %3988
      %v3991 = vsel %vm503, %v3987, 0
      %v3994 = vsel %vm503, %v3989, 0
      %3996 = vmatprep.subr.bf16.mxu0 0
      %3997 = vmatpush1.bf16.xpose.msra.mxu0 0
      %3998 = vmatprep.subr.bf16.mxu0 0
      %3999 = vmatpush1.bf16.xpose.msra.mxu0 0
      %4000 = vmatprep.subr.bf16.mxu0 0
      %4001 = vmatpush1.bf16.xpose.msra.mxu0 0
      %4002 = vmatprep.subr.bf16.mxu0 0
      %4003 = vmatpush1.bf16.xpose.msra.mxu0 0
      %4004 = vmatprep.subr.bf16.mxu0 0
      %4005 = vmatpush1.bf16.xpose.msra.mxu0 0
      %4006 = vmatprep.subr.bf16.mxu0 0
      %4007 = vmatpush1.bf16.xpose.msra.mxu0 0
      %4008 = vmatprep.subr.bf16.mxu0 0
      %4009 = vmatpush1.bf16.xpose.msra.mxu0 0
      %4010 = vmatprep.subr.bf16.mxu0 0
      %4011 = vmatpush1.bf16.xpose.msra.mxu0 %v3994
      %4012 = vmatprep.subr.bf16.mxu0 0
      %4013 = vmatpush2.bf16.xpose.msra.mxu0 0
      %4014 = vmatprep.subr.bf16.mxu0 0
      %4015 = vmatpush2.bf16.xpose.msra.mxu0 0
      %4016 = vmatprep.subr.bf16.mxu0 0
      %4017 = vmatpush2.bf16.xpose.msra.mxu0 0
      %4018 = vmatprep.subr.bf16.mxu0 0
      %4019 = vmatpush2.bf16.xpose.msra.mxu0 0
      %4020 = vmatprep.subr.bf16.mxu0 0
      %4021 = vmatpush2.bf16.xpose.msra.mxu0 0
      %4022 = vmatprep.subr.bf16.mxu0 0
      %4023 = vmatpush2.bf16.xpose.msra.mxu0 0
      %4024 = vmatprep.subr.bf16.mxu0 0
      %4025 = vmatpush2.bf16.xpose.msra.mxu0 0
      %4026 = vmatprep.subr.bf16.mxu0 0
      %4027 = vmatpush2.bf16.xpose.msra.mxu0 0
      %4028 = vmatprep.mubr.bf16.mxu0 0
      %4029 = vmatmul.mubr.bf16.gmra.mxu0 %v3991
      %v4030 = vpop.f32.mrf.mxu0
      %v4031 = vadd.f32 %v3671, %v4030
      %v4032 = vpop.f32.mrf.mxu0
      %v4033 = vpop.f32.mrf.mxu0
      %v4034 = vadd.f32 %v3672, %v4033
      %v4035 = vpop.f32.mrf.mxu0
      %4036 = vdwg.mxu0
      %4038 = vrot.lane.b32.xlu0 %v3669, 104
      %v4039 = vpop.permute.xlu0 %4038
      %4040 = vrot.lane.b32.xlu0 %v3669, 72
      %v4041 = vpop.permute.xlu0 %4040
      %v4043 = vsel %vm503, %v4039, 0
      %v4046 = vsel %vm503, %v4041, 0
      %4048 = vmatprep.subr.bf16.mxu0 0
      %4049 = vmatpush1.bf16.xpose.msra.mxu0 0
      %4050 = vmatprep.subr.bf16.mxu0 0
      %4051 = vmatpush1.bf16.xpose.msra.mxu0 0
      %4052 = vmatprep.subr.bf16.mxu0 0
      %4053 = vmatpush1.bf16.xpose.msra.mxu0 0
      %4054 = vmatprep.subr.bf16.mxu0 0
      %4055 = vmatpush1.bf16.xpose.msra.mxu0 0
      %4056 = vmatprep.subr.bf16.mxu0 0
      %4057 = vmatpush1.bf16.xpose.msra.mxu0 0
      %4058 = vmatprep.subr.bf16.mxu0 0
      %4059 = vmatpush1.bf16.xpose.msra.mxu0 0
      %4060 = vmatprep.subr.bf16.mxu0 0
      %4061 = vmatpush1.bf16.xpose.msra.mxu0 0
      %4062 = vmatprep.subr.bf16.mxu0 0
      %4063 = vmatpush1.bf16.xpose.msra.mxu0 %v4046
      %4064 = vmatprep.subr.bf16.mxu0 0
      %4065 = vmatpush2.bf16.xpose.msra.mxu0 0
      %4066 = vmatprep.subr.bf16.mxu0 0
      %4067 = vmatpush2.bf16.xpose.msra.mxu0 0
      %4068 = vmatprep.subr.bf16.mxu0 0
      %4069 = vmatpush2.bf16.xpose.msra.mxu0 0
      %4070 = vmatprep.subr.bf16.mxu0 0
      %4071 = vmatpush2.bf16.xpose.msra.mxu0 0
      %4072 = vmatprep.subr.bf16.mxu0 0
      %4073 = vmatpush2.bf16.xpose.msra.mxu0 0
      %4074 = vmatprep.subr.bf16.mxu0 0
      %4075 = vmatpush2.bf16.xpose.msra.mxu0 0
      %4076 = vmatprep.subr.bf16.mxu0 0
      %4077 = vmatpush2.bf16.xpose.msra.mxu0 0
      %4078 = vmatprep.subr.bf16.mxu0 0
      %4079 = vmatpush2.bf16.xpose.msra.mxu0 0
      %4080 = vmatprep.mubr.bf16.mxu0 0
      %4081 = vmatmul.mubr.bf16.gmra.mxu0 %v4043
      %v4082 = vpop.f32.mrf.mxu0
      %v4083 = vadd.f32 %v3671, %v4082
      %v4084 = vpop.f32.mrf.mxu0
      %v4085 = vpop.f32.mrf.mxu0
      %v4086 = vadd.f32 %v3672, %v4085
      %v4087 = vpop.f32.mrf.mxu0
      %4088 = vdwg.mxu0
      %v4089 = vsel %vm901, %v3719, -inf
      %4090 = vmax.xlane.f32.xlu0 %v4089
      %v4091 = vpop.xlane.xlu0 %4090
      %v4092 = vsel %vm901, %v3722, -inf
      %4093 = vmax.xlane.f32.xlu0 %v4092
      %v4094 = vpop.xlane.xlu0 %4093
      %v4095 = vsel %vm901, %v3771, -inf
      %4096 = vmax.xlane.f32.xlu0 %v4095
      %v4097 = vpop.xlane.xlu0 %4096
      %v4098 = vsel %vm901, %v3774, -inf
      %4099 = vmax.xlane.f32.xlu0 %v4098
      %v4100 = vpop.xlane.xlu0 %4099
      %v4101 = vsel %vm901, %v3823, -inf
      %4102 = vmax.xlane.f32.xlu0 %v4101
      %v4103 = vpop.xlane.xlu0 %4102
      %v4104 = vsel %vm901, %v3826, -inf
      %4105 = vmax.xlane.f32.xlu0 %v4104
      %v4106 = vpop.xlane.xlu0 %4105
      %v4107 = vsel %vm901, %v3875, -inf
      %4108 = vmax.xlane.f32.xlu0 %v4107
      %v4109 = vpop.xlane.xlu0 %4108
      %v4110 = vsel %vm901, %v3878, -inf
      %4111 = vmax.xlane.f32.xlu0 %v4110
      %v4112 = vpop.xlane.xlu0 %4111
      %v4113 = vsel %vm901, %v3927, -inf
      %4114 = vmax.xlane.f32.xlu0 %v4113
      %v4115 = vpop.xlane.xlu0 %4114
      %v4116 = vsel %vm901, %v3930, -inf
      %4117 = vmax.xlane.f32.xlu0 %v4116
      %v4118 = vpop.xlane.xlu0 %4117
      %v4119 = vsel %vm901, %v3979, -inf
      %4120 = vmax.xlane.f32.xlu0 %v4119
      %v4121 = vpop.xlane.xlu0 %4120
      %v4122 = vsel %vm901, %v3982, -inf
      %4123 = vmax.xlane.f32.xlu0 %v4122
      %v4124 = vpop.xlane.xlu0 %4123
      %v4125 = vsel %vm901, %v4031, -inf
      %4126 = vmax.xlane.f32.xlu0 %v4125
      %v4127 = vpop.xlane.xlu0 %4126
      %v4128 = vsel %vm901, %v4034, -inf
      %4129 = vmax.xlane.f32.xlu0 %v4128
      %v4130 = vpop.xlane.xlu0 %4129
      %v4131 = vsel %vm901, %v4083, -inf
      %4132 = vmax.xlane.f32.xlu0 %v4131
      %v4133 = vpop.xlane.xlu0 %4132
      %v4134 = vsel %vm901, %v4086, -inf
      %4135 = vmax.xlane.f32.xlu0 %v4134
      %v4136 = vpop.xlane.xlu0 %4135
      %v4137 = vsub.f32 %v3719, %v4091
      %v4138 = vsub.f32 %v3722, %v4094
      %v4139 = vsub.f32 %v3771, %v4097
      %v4140 = vsub.f32 %v3774, %v4100
      %v4141 = vsub.f32 %v3823, %v4103
      %v4142 = vsub.f32 %v3826, %v4106
      %v4143 = vsub.f32 %v3875, %v4109
      %v4144 = vsub.f32 %v3878, %v4112
      %v4145 = vsub.f32 %v3927, %v4115
      %v4146 = vsub.f32 %v3930, %v4118
      %v4147 = vsub.f32 %v3979, %v4121
      %v4148 = vsub.f32 %v3982, %v4124
      %v4149 = vsub.f32 %v4031, %v4127
      %v4150 = vsub.f32 %v4034, %v4130
      %v4151 = vsub.f32 %v4083, %v4133
      %v4152 = vsub.f32 %v4086, %v4136
      %v4153 = vmul.f32 %v4137, 1.442695
      %v4154 = vpow.pop %v4153
      %v4155 = vmul.f32 %v4138, 1.442695
      %v4156 = vpow.pop %v4155
      %v4157 = vmul.f32 %v4139, 1.442695
      %v4158 = vpow.pop %v4157
      %v4159 = vmul.f32 %v4140, 1.442695
      %v4160 = vpow.pop %v4159
      %v4161 = vmul.f32 %v4141, 1.442695
      %v4162 = vpow.pop %v4161
      %v4163 = vmul.f32 %v4142, 1.442695
      %v4164 = vpow.pop %v4163
      %v4165 = vmul.f32 %v4143, 1.442695
      %v4166 = vpow.pop %v4165
      %v4167 = vmul.f32 %v4144, 1.442695
      %v4168 = vpow.pop %v4167
      %v4169 = vmul.f32 %v4145, 1.442695
      %v4170 = vpow.pop %v4169
      %v4171 = vmul.f32 %v4146, 1.442695
      %v4172 = vpow.pop %v4171
      %v4173 = vmul.f32 %v4147, 1.442695
      %v4174 = vpow.pop %v4173
      %v4175 = vmul.f32 %v4148, 1.442695
      %v4176 = vpow.pop %v4175
      %v4177 = vmul.f32 %v4149, 1.442695
      %v4178 = vpow.pop %v4177
      %v4179 = vmul.f32 %v4150, 1.442695
      %v4180 = vpow.pop %v4179
      %v4181 = vmul.f32 %v4151, 1.442695
      %v4182 = vpow.pop %v4181
      %v4183 = vmul.f32 %v4152, 1.442695
      %v4184 = vpow.pop %v4183
      %v4185 = vsel %vm901, %v4154, 0.0
      %4186 = vadd.xlane.f32.xlu0 %v4185
      %v4187 = vpop.xlane.xlu0 %4186
      %v4188 = vsel %vm901, %v4156, 0.0
      %4189 = vadd.xlane.f32.xlu0 %v4188
      %v4190 = vpop.xlane.xlu0 %4189
      %v4191 = vsel %vm901, %v4158, 0.0
      %4192 = vadd.xlane.f32.xlu0 %v4191
      %v4193 = vpop.xlane.xlu0 %4192
      %v4194 = vsel %vm901, %v4160, 0.0
      %4195 = vadd.xlane.f32.xlu0 %v4194
      %v4196 = vpop.xlane.xlu0 %4195
      %v4197 = vsel %vm901, %v4162, 0.0
      %4198 = vadd.xlane.f32.xlu0 %v4197
      %v4199 = vpop.xlane.xlu0 %4198
      %v4200 = vsel %vm901, %v4164, 0.0
      %4201 = vadd.xlane.f32.xlu0 %v4200
      %v4202 = vpop.xlane.xlu0 %4201
      %v4203 = vsel %vm901, %v4166, 0.0
      %4204 = vadd.xlane.f32.xlu0 %v4203
      %v4205 = vpop.xlane.xlu0 %4204
      %v4206 = vsel %vm901, %v4168, 0.0
      %4207 = vadd.xlane.f32.xlu0 %v4206
      %v4208 = vpop.xlane.xlu0 %4207
      %v4209 = vsel %vm901, %v4170, 0.0
      %4210 = vadd.xlane.f32.xlu0 %v4209
      %v4211 = vpop.xlane.xlu0 %4210
      %v4212 = vsel %vm901, %v4172, 0.0
      %4213 = vadd.xlane.f32.xlu0 %v4212
      %v4214 = vpop.xlane.xlu0 %4213
      %v4215 = vsel %vm901, %v4174, 0.0
      %4216 = vadd.xlane.f32.xlu0 %v4215
      %v4217 = vpop.xlane.xlu0 %4216
      %v4218 = vsel %vm901, %v4176, 0.0
      %4219 = vadd.xlane.f32.xlu0 %v4218
      %v4220 = vpop.xlane.xlu0 %4219
      %v4221 = vsel %vm901, %v4178, 0.0
      %4222 = vadd.xlane.f32.xlu0 %v4221
      %v4223 = vpop.xlane.xlu0 %4222
      %v4224 = vsel %vm901, %v4180, 0.0
      %4225 = vadd.xlane.f32.xlu0 %v4224
      %v4226 = vpop.xlane.xlu0 %4225
      %v4227 = vsel %vm901, %v4182, 0.0
      %4228 = vadd.xlane.f32.xlu0 %v4227
      %v4229 = vpop.xlane.xlu0 %4228
      %v4230 = vsel %vm901, %v4184, 0.0
      %4231 = vadd.xlane.f32.xlu0 %v4230
      %v4232 = vpop.xlane.xlu0 %4231
      %v4233 = vrcp.pop %v4187
      %v4234 = vrcp.pop %v4190
      %v4235 = vrcp.pop %v4193
      %v4236 = vrcp.pop %v4196
      %v4237 = vrcp.pop %v4199
      %v4238 = vrcp.pop %v4202
      %v4239 = vrcp.pop %v4205
      %v4240 = vrcp.pop %v4208
      %v4241 = vrcp.pop %v4211
      %v4242 = vrcp.pop %v4214
      %v4243 = vrcp.pop %v4217
      %v4244 = vrcp.pop %v4220
      %v4245 = vrcp.pop %v4223
      %v4246 = vrcp.pop %v4226
      %v4247 = vrcp.pop %v4229
      %v4248 = vrcp.pop %v4232
      %v4249 = vmul.f32 %v4154, %v4233
      %v4250 = vmul.f32 %v4156, %v4234
      %v4251 = vmul.f32 %v4158, %v4235
      %v4252 = vmul.f32 %v4160, %v4236
      %v4253 = vmul.f32 %v4162, %v4237
      %v4254 = vmul.f32 %v4164, %v4238
      %v4255 = vmul.f32 %v4166, %v4239
      %v4256 = vmul.f32 %v4168, %v4240
      %v4257 = vmul.f32 %v4170, %v4241
      %v4258 = vmul.f32 %v4172, %v4242
      %v4259 = vmul.f32 %v4174, %v4243
      %v4260 = vmul.f32 %v4176, %v4244
      %v4261 = vmul.f32 %v4178, %v4245
      %v4262 = vmul.f32 %v4180, %v4246
      %v4263 = vmul.f32 %v4182, %v4247
      %v4264 = vmul.f32 %v4184, %v4248
      %v4265 = vpack.c.bf16 %v4250, %v4249
      %v4266 = vpack.c.bf16 %v4252, %v4251
      %v4267 = vpack.c.bf16 %v4254, %v4253
      %v4268 = vpack.c.bf16 %v4256, %v4255
      %v4269 = vpack.c.bf16 %v4258, %v4257
      %v4270 = vpack.c.bf16 %v4260, %v4259
      %v4271 = vpack.c.bf16 %v4262, %v4261
      %v4272 = vpack.c.bf16 %v4264, %v4263
      %4273 = vrot.lane.b32.xlu0 %v3662, 40
      %v4274 = vpop.permute.xlu0 %4273
      %v4277 = vsel %vm901, %v4265, 0
      %4279 = vmatprep.subr.bf16.mxu0 0
      %4280 = vmatpush1.bf16.msra.mxu0 0
      %4281 = vmatprep.subr.bf16.mxu0 0
      %4282 = vmatpush1.bf16.msra.mxu0 0
      %4283 = vmatprep.subr.bf16.mxu0 0
      %4284 = vmatpush1.bf16.msra.mxu0 0
      %4285 = vmatprep.subr.bf16.mxu0 0
      %4286 = vmatpush1.bf16.msra.mxu0 0
      %4287 = vmatprep.subr.bf16.mxu0 0
      %4288 = vmatpush1.bf16.msra.mxu0 0
      %4289 = vmatprep.subr.bf16.mxu0 0
      %4290 = vmatpush1.bf16.msra.mxu0 0
      %4291 = vmatprep.subr.bf16.mxu0 0
      %4292 = vmatpush1.bf16.msra.mxu0 0
      %4293 = vmatprep.subr.bf16.mxu0 0
      %4294 = vmatpush1.bf16.msra.mxu0 %v4274
      %4295 = vmatprep.subr.bf16.mxu0 0
      %4296 = vmatpush2.bf16.msra.mxu0 0
      %4297 = vmatprep.subr.bf16.mxu0 0
      %4298 = vmatpush2.bf16.msra.mxu0 0
      %4299 = vmatprep.subr.bf16.mxu0 0
      %4300 = vmatpush2.bf16.msra.mxu0 0
      %4301 = vmatprep.subr.bf16.mxu0 0
      %4302 = vmatpush2.bf16.msra.mxu0 0
      %4303 = vmatprep.subr.bf16.mxu0 0
      %4304 = vmatpush2.bf16.msra.mxu0 0
      %4305 = vmatprep.subr.bf16.mxu0 0
      %4306 = vmatpush2.bf16.msra.mxu0 0
      %4307 = vmatprep.subr.bf16.mxu0 0
      %4308 = vmatpush2.bf16.msra.mxu0 0
      %4309 = vmatprep.subr.bf16.mxu0 0
      %4310 = vmatpush2.bf16.msra.mxu0 0
      %4311 = vmatprep.mubr.bf16.mxu0 0
      %4312 = vmatmul.mubr.bf16.gmra.mxu0 %v4277
      %v4313 = vpop.f32.mrf.mxu0
      %v4314 = vadd.f32 0.0, %v4313
      %v4315 = vpop.f32.mrf.mxu0
      %v4316 = vpop.f32.mrf.mxu0
      %v4317 = vadd.f32 0.0, %v4316
      %v4318 = vpop.f32.mrf.mxu0
      %4319 = vdwg.mxu0
      %4320 = vrot.lane.b32.xlu0 %v3663, 40
      %v4321 = vpop.permute.xlu0 %4320
      %v4324 = vsel %vm901, %v4266, 0
      %4326 = vmatprep.subr.bf16.mxu0 0
      %4327 = vmatpush1.bf16.msra.mxu0 0
      %4328 = vmatprep.subr.bf16.mxu0 0
      %4329 = vmatpush1.bf16.msra.mxu0 0
      %4330 = vmatprep.subr.bf16.mxu0 0
      %4331 = vmatpush1.bf16.msra.mxu0 0
      %4332 = vmatprep.subr.bf16.mxu0 0
      %4333 = vmatpush1.bf16.msra.mxu0 0
      %4334 = vmatprep.subr.bf16.mxu0 0
      %4335 = vmatpush1.bf16.msra.mxu0 0
      %4336 = vmatprep.subr.bf16.mxu0 0
      %4337 = vmatpush1.bf16.msra.mxu0 0
      %4338 = vmatprep.subr.bf16.mxu0 0
      %4339 = vmatpush1.bf16.msra.mxu0 0
      %4340 = vmatprep.subr.bf16.mxu0 0
      %4341 = vmatpush1.bf16.msra.mxu0 %v4321
      %4342 = vmatprep.subr.bf16.mxu0 0
      %4343 = vmatpush2.bf16.msra.mxu0 0
      %4344 = vmatprep.subr.bf16.mxu0 0
      %4345 = vmatpush2.bf16.msra.mxu0 0
      %4346 = vmatprep.subr.bf16.mxu0 0
      %4347 = vmatpush2.bf16.msra.mxu0 0
      %4348 = vmatprep.subr.bf16.mxu0 0
      %4349 = vmatpush2.bf16.msra.mxu0 0
      %4350 = vmatprep.subr.bf16.mxu0 0
      %4351 = vmatpush2.bf16.msra.mxu0 0
      %4352 = vmatprep.subr.bf16.mxu0 0
      %4353 = vmatpush2.bf16.msra.mxu0 0
      %4354 = vmatprep.subr.bf16.mxu0 0
      %4355 = vmatpush2.bf16.msra.mxu0 0
      %4356 = vmatprep.subr.bf16.mxu0 0
      %4357 = vmatpush2.bf16.msra.mxu0 0
      %4358 = vmatprep.mubr.bf16.mxu0 0
      %4359 = vmatmul.mubr.bf16.gmra.mxu0 %v4324
      %v4360 = vpop.f32.mrf.mxu0
      %v4361 = vadd.f32 0.0, %v4360
      %v4362 = vpop.f32.mrf.mxu0
      %v4363 = vpop.f32.mrf.mxu0
      %v4364 = vadd.f32 0.0, %v4363
      %v4365 = vpop.f32.mrf.mxu0
      %4366 = vdwg.mxu0
      %4367 = vrot.lane.b32.xlu0 %v3664, 40
      %v4368 = vpop.permute.xlu0 %4367
      %v4371 = vsel %vm901, %v4267, 0
      %4373 = vmatprep.subr.bf16.mxu0 0
      %4374 = vmatpush1.bf16.msra.mxu0 0
      %4375 = vmatprep.subr.bf16.mxu0 0
      %4376 = vmatpush1.bf16.msra.mxu0 0
      %4377 = vmatprep.subr.bf16.mxu0 0
      %4378 = vmatpush1.bf16.msra.mxu0 0
      %4379 = vmatprep.subr.bf16.mxu0 0
      %4380 = vmatpush1.bf16.msra.mxu0 0
      %4381 = vmatprep.subr.bf16.mxu0 0
      %4382 = vmatpush1.bf16.msra.mxu0 0
      %4383 = vmatprep.subr.bf16.mxu0 0
      %4384 = vmatpush1.bf16.msra.mxu0 0
      %4385 = vmatprep.subr.bf16.mxu0 0
      %4386 = vmatpush1.bf16.msra.mxu0 0
      %4387 = vmatprep.subr.bf16.mxu0 0
      %4388 = vmatpush1.bf16.msra.mxu0 %v4368
      %4389 = vmatprep.subr.bf16.mxu0 0
      %4390 = vmatpush2.bf16.msra.mxu0 0
      %4391 = vmatprep.subr.bf16.mxu0 0
      %4392 = vmatpush2.bf16.msra.mxu0 0
      %4393 = vmatprep.subr.bf16.mxu0 0
      %4394 = vmatpush2.bf16.msra.mxu0 0
      %4395 = vmatprep.subr.bf16.mxu0 0
      %4396 = vmatpush2.bf16.msra.mxu0 0
      %4397 = vmatprep.subr.bf16.mxu0 0
      %4398 = vmatpush2.bf16.msra.mxu0 0
      %4399 = vmatprep.subr.bf16.mxu0 0
      %4400 = vmatpush2.bf16.msra.mxu0 0
      %4401 = vmatprep.subr.bf16.mxu0 0
      %4402 = vmatpush2.bf16.msra.mxu0 0
      %4403 = vmatprep.subr.bf16.mxu0 0
      %4404 = vmatpush2.bf16.msra.mxu0 0
      %4405 = vmatprep.mubr.bf16.mxu0 0
      %4406 = vmatmul.mubr.bf16.gmra.mxu0 %v4371
      %v4407 = vpop.f32.mrf.mxu0
      %v4408 = vadd.f32 0.0, %v4407
      %v4409 = vpop.f32.mrf.mxu0
      %v4410 = vpop.f32.mrf.mxu0
      %v4411 = vadd.f32 0.0, %v4410
      %v4412 = vpop.f32.mrf.mxu0
      %4413 = vdwg.mxu0
      %4414 = vrot.lane.b32.xlu0 %v3665, 40
      %v4415 = vpop.permute.xlu0 %4414
      %v4418 = vsel %vm901, %v4268, 0
      %4420 = vmatprep.subr.bf16.mxu0 0
      %4421 = vmatpush1.bf16.msra.mxu0 0
      %4422 = vmatprep.subr.bf16.mxu0 0
      %4423 = vmatpush1.bf16.msra.mxu0 0
      %4424 = vmatprep.subr.bf16.mxu0 0
      %4425 = vmatpush1.bf16.msra.mxu0 0
      %4426 = vmatprep.subr.bf16.mxu0 0
      %4427 = vmatpush1.bf16.msra.mxu0 0
      %4428 = vmatprep.subr.bf16.mxu0 0
      %4429 = vmatpush1.bf16.msra.mxu0 0
      %4430 = vmatprep.subr.bf16.mxu0 0
      %4431 = vmatpush1.bf16.msra.mxu0 0
      %4432 = vmatprep.subr.bf16.mxu0 0
      %4433 = vmatpush1.bf16.msra.mxu0 0
      %4434 = vmatprep.subr.bf16.mxu0 0
      %4435 = vmatpush1.bf16.msra.mxu0 %v4415
      %4436 = vmatprep.subr.bf16.mxu0 0
      %4437 = vmatpush2.bf16.msra.mxu0 0
      %4438 = vmatprep.subr.bf16.mxu0 0
      %4439 = vmatpush2.bf16.msra.mxu0 0
      %4440 = vmatprep.subr.bf16.mxu0 0
      %4441 = vmatpush2.bf16.msra.mxu0 0
      %4442 = vmatprep.subr.bf16.mxu0 0
      %4443 = vmatpush2.bf16.msra.mxu0 0
      %4444 = vmatprep.subr.bf16.mxu0 0
      %4445 = vmatpush2.bf16.msra.mxu0 0
      %4446 = vmatprep.subr.bf16.mxu0 0
      %4447 = vmatpush2.bf16.msra.mxu0 0
      %4448 = vmatprep.subr.bf16.mxu0 0
      %4449 = vmatpush2.bf16.msra.mxu0 0
      %4450 = vmatprep.subr.bf16.mxu0 0
      %4451 = vmatpush2.bf16.msra.mxu0 0
      %4452 = vmatprep.mubr.bf16.mxu0 0
      %4453 = vmatmul.mubr.bf16.gmra.mxu0 %v4418
      %v4454 = vpop.f32.mrf.mxu0
      %v4455 = vadd.f32 0.0, %v4454
      %v4456 = vpop.f32.mrf.mxu0
      %v4457 = vpop.f32.mrf.mxu0
      %v4458 = vadd.f32 0.0, %v4457
      %v4459 = vpop.f32.mrf.mxu0
      %4460 = vdwg.mxu0
      %4461 = vrot.lane.b32.xlu0 %v3666, 40
      %v4462 = vpop.permute.xlu0 %4461
      %v4465 = vsel %vm901, %v4269, 0
      %4467 = vmatprep.subr.bf16.mxu0 0
      %4468 = vmatpush1.bf16.msra.mxu0 0
      %4469 = vmatprep.subr.bf16.mxu0 0
      %4470 = vmatpush1.bf16.msra.mxu0 0
      %4471 = vmatprep.subr.bf16.mxu0 0
      %4472 = vmatpush1.bf16.msra.mxu0 0
      %4473 = vmatprep.subr.bf16.mxu0 0
      %4474 = vmatpush1.bf16.msra.mxu0 0
      %4475 = vmatprep.subr.bf16.mxu0 0
      %4476 = vmatpush1.bf16.msra.mxu0 0
      %4477 = vmatprep.subr.bf16.mxu0 0
      %4478 = vmatpush1.bf16.msra.mxu0 0
      %4479 = vmatprep.subr.bf16.mxu0 0
      %4480 = vmatpush1.bf16.msra.mxu0 0
      %4481 = vmatprep.subr.bf16.mxu0 0
      %4482 = vmatpush1.bf16.msra.mxu0 %v4462
      %4483 = vmatprep.subr.bf16.mxu0 0
      %4484 = vmatpush2.bf16.msra.mxu0 0
      %4485 = vmatprep.subr.bf16.mxu0 0
      %4486 = vmatpush2.bf16.msra.mxu0 0
      %4487 = vmatprep.subr.bf16.mxu0 0
      %4488 = vmatpush2.bf16.msra.mxu0 0
      %4489 = vmatprep.subr.bf16.mxu0 0
      %4490 = vmatpush2.bf16.msra.mxu0 0
      %4491 = vmatprep.subr.bf16.mxu0 0
      %4492 = vmatpush2.bf16.msra.mxu0 0
      %4493 = vmatprep.subr.bf16.mxu0 0
      %4494 = vmatpush2.bf16.msra.mxu0 0
      %4495 = vmatprep.subr.bf16.mxu0 0
      %4496 = vmatpush2.bf16.msra.mxu0 0
      %4497 = vmatprep.subr.bf16.mxu0 0
      %4498 = vmatpush2.bf16.msra.mxu0 0
      %4499 = vmatprep.mubr.bf16.mxu0 0
      %4500 = vmatmul.mubr.bf16.gmra.mxu0 %v4465
      %v4501 = vpop.f32.mrf.mxu0
      %v4502 = vadd.f32 0.0, %v4501
      %v4503 = vpop.f32.mrf.mxu0
      %v4504 = vpop.f32.mrf.mxu0
      %v4505 = vadd.f32 0.0, %v4504
      %v4506 = vpop.f32.mrf.mxu0
      %4507 = vdwg.mxu0
      %4508 = vrot.lane.b32.xlu0 %v3667, 40
      %v4509 = vpop.permute.xlu0 %4508
      %v4512 = vsel %vm901, %v4270, 0
      %4514 = vmatprep.subr.bf16.mxu0 0
      %4515 = vmatpush1.bf16.msra.mxu0 0
      %4516 = vmatprep.subr.bf16.mxu0 0
      %4517 = vmatpush1.bf16.msra.mxu0 0
      %4518 = vmatprep.subr.bf16.mxu0 0
      %4519 = vmatpush1.bf16.msra.mxu0 0
      %4520 = vmatprep.subr.bf16.mxu0 0
      %4521 = vmatpush1.bf16.msra.mxu0 0
      %4522 = vmatprep.subr.bf16.mxu0 0
      %4523 = vmatpush1.bf16.msra.mxu0 0
      %4524 = vmatprep.subr.bf16.mxu0 0
      %4525 = vmatpush1.bf16.msra.mxu0 0
      %4526 = vmatprep.subr.bf16.mxu0 0
      %4527 = vmatpush1.bf16.msra.mxu0 0
      %4528 = vmatprep.subr.bf16.mxu0 0
      %4529 = vmatpush1.bf16.msra.mxu0 %v4509
      %4530 = vmatprep.subr.bf16.mxu0 0
      %4531 = vmatpush2.bf16.msra.mxu0 0
      %4532 = vmatprep.subr.bf16.mxu0 0
      %4533 = vmatpush2.bf16.msra.mxu0 0
      %4534 = vmatprep.subr.bf16.mxu0 0
      %4535 = vmatpush2.bf16.msra.mxu0 0
      %4536 = vmatprep.subr.bf16.mxu0 0
      %4537 = vmatpush2.bf16.msra.mxu0 0
      %4538 = vmatprep.subr.bf16.mxu0 0
      %4539 = vmatpush2.bf16.msra.mxu0 0
      %4540 = vmatprep.subr.bf16.mxu0 0
      %4541 = vmatpush2.bf16.msra.mxu0 0
      %4542 = vmatprep.subr.bf16.mxu0 0
      %4543 = vmatpush2.bf16.msra.mxu0 0
      %4544 = vmatprep.subr.bf16.mxu0 0
      %4545 = vmatpush2.bf16.msra.mxu0 0
      %4546 = vmatprep.mubr.bf16.mxu0 0
      %4547 = vmatmul.mubr.bf16.gmra.mxu0 %v4512
      %v4548 = vpop.f32.mrf.mxu0
      %v4549 = vadd.f32 0.0, %v4548
      %v4550 = vpop.f32.mrf.mxu0
      %v4551 = vpop.f32.mrf.mxu0
      %v4552 = vadd.f32 0.0, %v4551
      %v4553 = vpop.f32.mrf.mxu0
      %4554 = vdwg.mxu0
      %4555 = vrot.lane.b32.xlu0 %v3668, 40
      %v4556 = vpop.permute.xlu0 %4555
      %v4559 = vsel %vm901, %v4271, 0
      %4561 = vmatprep.subr.bf16.mxu0 0
      %4562 = vmatpush1.bf16.msra.mxu0 0
      %4563 = vmatprep.subr.bf16.mxu0 0
      %4564 = vmatpush1.bf16.msra.mxu0 0
      %4565 = vmatprep.subr.bf16.mxu0 0
      %4566 = vmatpush1.bf16.msra.mxu0 0
      %4567 = vmatprep.subr.bf16.mxu0 0
      %4568 = vmatpush1.bf16.msra.mxu0 0
      %4569 = vmatprep.subr.bf16.mxu0 0
      %4570 = vmatpush1.bf16.msra.mxu0 0
      %4571 = vmatprep.subr.bf16.mxu0 0
      %4572 = vmatpush1.bf16.msra.mxu0 0
      %4573 = vmatprep.subr.bf16.mxu0 0
      %4574 = vmatpush1.bf16.msra.mxu0 0
      %4575 = vmatprep.subr.bf16.mxu0 0
      %4576 = vmatpush1.bf16.msra.mxu0 %v4556
      %4577 = vmatprep.subr.bf16.mxu0 0
      %4578 = vmatpush2.bf16.msra.mxu0 0
      %4579 = vmatprep.subr.bf16.mxu0 0
      %4580 = vmatpush2.bf16.msra.mxu0 0
      %4581 = vmatprep.subr.bf16.mxu0 0
      %4582 = vmatpush2.bf16.msra.mxu0 0
      %4583 = vmatprep.subr.bf16.mxu0 0
      %4584 = vmatpush2.bf16.msra.mxu0 0
      %4585 = vmatprep.subr.bf16.mxu0 0
      %4586 = vmatpush2.bf16.msra.mxu0 0
      %4587 = vmatprep.subr.bf16.mxu0 0
      %4588 = vmatpush2.bf16.msra.mxu0 0
      %4589 = vmatprep.subr.bf16.mxu0 0
      %4590 = vmatpush2.bf16.msra.mxu0 0
      %4591 = vmatprep.subr.bf16.mxu0 0
      %4592 = vmatpush2.bf16.msra.mxu0 0
      %4593 = vmatprep.mubr.bf16.mxu0 0
      %4594 = vmatmul.mubr.bf16.gmra.mxu0 %v4559
      %v4595 = vpop.f32.mrf.mxu0
      %v4596 = vadd.f32 0.0, %v4595
      %v4597 = vpop.f32.mrf.mxu0
      %v4598 = vpop.f32.mrf.mxu0
      %v4599 = vadd.f32 0.0, %v4598
      %v4600 = vpop.f32.mrf.mxu0
      %4601 = vdwg.mxu0
      %4602 = vrot.lane.b32.xlu0 %v3669, 40
      %v4603 = vpop.permute.xlu0 %4602
      %v4606 = vsel %vm901, %v4272, 0
      %4608 = vmatprep.subr.bf16.mxu0 0
      %4609 = vmatpush1.bf16.msra.mxu0 0
      %4610 = vmatprep.subr.bf16.mxu0 0
      %4611 = vmatpush1.bf16.msra.mxu0 0
      %4612 = vmatprep.subr.bf16.mxu0 0
      %4613 = vmatpush1.bf16.msra.mxu0 0
      %4614 = vmatprep.subr.bf16.mxu0 0
      %4615 = vmatpush1.bf16.msra.mxu0 0
      %4616 = vmatprep.subr.bf16.mxu0 0
      %4617 = vmatpush1.bf16.msra.mxu0 0
      %4618 = vmatprep.subr.bf16.mxu0 0
      %4619 = vmatpush1.bf16.msra.mxu0 0
      %4620 = vmatprep.subr.bf16.mxu0 0
      %4621 = vmatpush1.bf16.msra.mxu0 0
      %4622 = vmatprep.subr.bf16.mxu0 0
      %4623 = vmatpush1.bf16.msra.mxu0 %v4603
      %4624 = vmatprep.subr.bf16.mxu0 0
      %4625 = vmatpush2.bf16.msra.mxu0 0
      %4626 = vmatprep.subr.bf16.mxu0 0
      %4627 = vmatpush2.bf16.msra.mxu0 0
      %4628 = vmatprep.subr.bf16.mxu0 0
      %4629 = vmatpush2.bf16.msra.mxu0 0
      %4630 = vmatprep.subr.bf16.mxu0 0
      %4631 = vmatpush2.bf16.msra.mxu0 0
      %4632 = vmatprep.subr.bf16.mxu0 0
      %4633 = vmatpush2.bf16.msra.mxu0 0
      %4634 = vmatprep.subr.bf16.mxu0 0
      %4635 = vmatpush2.bf16.msra.mxu0 0
      %4636 = vmatprep.subr.bf16.mxu0 0
      %4637 = vmatpush2.bf16.msra.mxu0 0
      %4638 = vmatprep.subr.bf16.mxu0 0
      %4639 = vmatpush2.bf16.msra.mxu0 0
      %4640 = vmatprep.mubr.bf16.mxu0 0
      %4641 = vmatmul.mubr.bf16.gmra.mxu0 %v4606
      %v4642 = vpop.f32.mrf.mxu0
      %v4643 = vadd.f32 0.0, %v4642
      %v4644 = vpop.f32.mrf.mxu0
      %v4645 = vpop.f32.mrf.mxu0
      %v4646 = vadd.f32 0.0, %v4645
      %v4647 = vpop.f32.mrf.mxu0
      %4648 = vdwg.mxu0
      %4665 = vrot.lane.b32.xlu0 %v4314, 24
      %v4666 = vpop.permute.xlu0 %4665
      %4667 = vrot.lane.b32.xlu0 %v4317, 24
      %v4668 = vpop.permute.xlu0 %4667
      %4669 = vrot.lane.b32.xlu0 %v4361, 24
      %v4670 = vpop.permute.xlu0 %4669
      %4671 = vrot.lane.b32.xlu0 %v4364, 24
      %v4672 = vpop.permute.xlu0 %4671
      %4673 = vrot.lane.b32.xlu0 %v4408, 24
      %v4674 = vpop.permute.xlu0 %4673
      %4675 = vrot.lane.b32.xlu0 %v4411, 24
      %v4676 = vpop.permute.xlu0 %4675
      %4677 = vrot.lane.b32.xlu0 %v4455, 24
      %v4678 = vpop.permute.xlu0 %4677
      %4679 = vrot.lane.b32.xlu0 %v4458, 24
      %v4680 = vpop.permute.xlu0 %4679
      %4681 = vrot.lane.b32.xlu0 %v4502, 24
      %v4682 = vpop.permute.xlu0 %4681
      %4683 = vrot.lane.b32.xlu0 %v4505, 24
      %v4684 = vpop.permute.xlu0 %4683
      %4685 = vrot.lane.b32.xlu0 %v4549, 24
      %v4686 = vpop.permute.xlu0 %4685
      %4687 = vrot.lane.b32.xlu0 %v4552, 24
      %v4688 = vpop.permute.xlu0 %4687
      %4689 = vrot.lane.b32.xlu0 %v4596, 24
      %v4690 = vpop.permute.xlu0 %4689
      %4691 = vrot.lane.b32.xlu0 %v4599, 24
      %v4692 = vpop.permute.xlu0 %4691
      %4693 = vrot.lane.b32.xlu0 %v4643, 24
      %v4694 = vpop.permute.xlu0 %4693
      %4695 = vrot.lane.b32.xlu0 %v4646, 24
      %v4696 = vpop.permute.xlu0 %4695
      %vm4713 = vcmask 261312
      %4714 = vst.msk [vmem:[#allocation3] sm:$0xff] %vm4713, %v4666
      %4715 = vst.msk [vmem:[#allocation3 + $0x8] sm:$0xff] %vm4713, %v4668
      %4716 = vst.msk [vmem:[#allocation3 + $0x10] sm:$0xff] %vm4713, %v4670
      %4717 = vst.msk [vmem:[#allocation3 + $0x18] sm:$0xff] %vm4713, %v4672
      %4718 = vst.msk [vmem:[#allocation3 + $0x20] sm:$0xff] %vm4713, %v4674
      %4719 = vst.msk [vmem:[#allocation3 + $0x28] sm:$0xff] %vm4713, %v4676
      %4720 = vst.msk [vmem:[#allocation3 + $0x30] sm:$0xff] %vm4713, %v4678
      %4721 = vst.msk [vmem:[#allocation3 + $0x38] sm:$0xff] %vm4713, %v4680
      %4722 = vst.msk [vmem:[#allocation3 + $0x40] sm:$0xff] %vm4713, %v4682
      %4723 = vst.msk [vmem:[#allocation3 + $0x48] sm:$0xff] %vm4713, %v4684
      %4724 = vst.msk [vmem:[#allocation3 + $0x50] sm:$0xff] %vm4713, %v4686
      %4725 = vst.msk [vmem:[#allocation3 + $0x58] sm:$0xff] %vm4713, %v4688
      %4726 = vst.msk [vmem:[#allocation3 + $0x60] sm:$0xff] %vm4713, %v4690
      %4727 = vst.msk [vmem:[#allocation3 + $0x68] sm:$0xff] %vm4713, %v4692
      %4728 = vst.msk [vmem:[#allocation3 + $0x70] sm:$0xff] %vm4713, %v4694
      %4729 = vst.msk [vmem:[#allocation3 + $0x78] sm:$0xff] %vm4713, %v4696
      %v4730 = vld [vmem:[#allocation3] sm:$0xff]
      %v4731 = vld [vmem:[#allocation3 + $0x8] sm:$0xff]
      %v4732 = vld [vmem:[#allocation3 + $0x10] sm:$0xff]
      %v4733 = vld [vmem:[#allocation3 + $0x18] sm:$0xff]
      %v4734 = vld [vmem:[#allocation3 + $0x20] sm:$0xff]
      %v4735 = vld [vmem:[#allocation3 + $0x28] sm:$0xff]
      %v4736 = vld [vmem:[#allocation3 + $0x30] sm:$0xff]
      %v4737 = vld [vmem:[#allocation3 + $0x38] sm:$0xff]
      %v4738 = vld [vmem:[#allocation3 + $0x40] sm:$0xff]
      %v4739 = vld [vmem:[#allocation3 + $0x48] sm:$0xff]
      %v4740 = vld [vmem:[#allocation3 + $0x50] sm:$0xff]
      %v4741 = vld [vmem:[#allocation3 + $0x58] sm:$0xff]
      %v4742 = vld [vmem:[#allocation3 + $0x60] sm:$0xff]
      %v4743 = vld [vmem:[#allocation3 + $0x68] sm:$0xff]
      %v4744 = vld [vmem:[#allocation3 + $0x70] sm:$0xff]
      %v4745 = vld [vmem:[#allocation3 + $0x78] sm:$0xff]
      %v4746 = vpack.c.bf16 %v4731, %v4730
      %v4747 = vpack.c.bf16 %v4733, %v4732
      %v4748 = vpack.c.bf16 %v4735, %v4734
      %v4749 = vpack.c.bf16 %v4737, %v4736
      %v4750 = vpack.c.bf16 %v4739, %v4738
      %v4751 = vpack.c.bf16 %v4741, %v4740
      %v4752 = vpack.c.bf16 %v4743, %v4742
      %v4753 = vpack.c.bf16 %v4745, %v4744
      %v4754 = vld [vmem:[%s3] sm:$0xf]
      %v4755 = vld [vmem:[%s3 + $0x4] sm:$0xf]
      %v4756 = vld [vmem:[%s3 + $0x8] sm:$0xf]
      %v4757 = vld [vmem:[%s3 + $0xc] sm:$0xf]
      %v4758 = vld [vmem:[%s4] sm:$0x1]
      %v4760 = vlaneseq
      %v4761 = vshrl.u32 %v4760, 7
      %v4762 = vsub.s32 0, %v4761
      %v4763 = vrot.slane %v4758, %v4762
      %v4769 = vunpack.c.l.b16 %v4754
      %v4770 = vunpack.c.l.b16 %v4755
      %v4771 = vunpack.c.l.b16 %v4756
      %v4772 = vunpack.c.l.b16 %v4757
      %v4773 = vpack.c.b16 %v4770, %v4769
      %v4774 = vpack.c.b16 %v4772, %v4771
      %v4778 = vsel %vm335, %v4746, 0
      %v4781 = vsel %vm335, %v4747, 0
      %v4784 = vsel %vm335, %v4748, 0
      %v4787 = vsel %vm335, %v4749, 0
      %v4790 = vsel %vm335, %v4750, 0
      %v4793 = vsel %vm335, %v4751, 0
      %v4796 = vsel %vm335, %v4752, 0
      %v4799 = vsel %vm335, %v4753, 0
      %4801 = vmatprep.subr.bf16.mxu0 0
      %4802 = vmatpush1.bf16.msra.mxu0 0
      %4803 = vmatprep.subr.bf16.mxu0 0
      %4804 = vmatpush1.bf16.msra.mxu0 0
      %4805 = vmatprep.subr.bf16.mxu0 0
      %4806 = vmatpush1.bf16.msra.mxu0 0
      %4807 = vmatprep.subr.bf16.mxu0 0
      %4808 = vmatpush1.bf16.msra.mxu0 0
      %4809 = vmatprep.subr.bf16.mxu0 0
      %4810 = vmatpush1.bf16.msra.mxu0 0
      %4811 = vmatprep.subr.bf16.mxu0 0
      %4812 = vmatpush1.bf16.msra.mxu0 0
      %4813 = vmatprep.subr.bf16.mxu0 0
      %4814 = vmatpush1.bf16.msra.mxu0 %v4774
      %4815 = vmatprep.subr.bf16.mxu0 0
      %4816 = vmatpush1.bf16.msra.mxu0 %v4773
      %4817 = vmatprep.subr.bf16.mxu0 0
      %4818 = vmatpush2.bf16.msra.mxu0 0
      %4819 = vmatprep.subr.bf16.mxu0 0
      %4820 = vmatpush2.bf16.msra.mxu0 0
      %4821 = vmatprep.subr.bf16.mxu0 0
      %4822 = vmatpush2.bf16.msra.mxu0 0
      %4823 = vmatprep.subr.bf16.mxu0 0
      %4824 = vmatpush2.bf16.msra.mxu0 0
      %4825 = vmatprep.subr.bf16.mxu0 0
      %4826 = vmatpush2.bf16.msra.mxu0 0
      %4827 = vmatprep.subr.bf16.mxu0 0
      %4828 = vmatpush2.bf16.msra.mxu0 0
      %4829 = vmatprep.subr.bf16.mxu0 0
      %4830 = vmatpush2.bf16.msra.mxu0 0
      %4831 = vmatprep.subr.bf16.mxu0 0
      %4832 = vmatpush2.bf16.msra.mxu0 0
      %4833 = vmatprep.mubr.bf16.mxu0 0
      %4834 = vmatmul.mubr.bf16.gmra.mxu0 %v4778
      %v4835 = vpop.f32.mrf.mxu0
      %v4836 = vadd.f32 %v4763, %v4835
      %v4837 = vpop.f32.mrf.mxu0
      %v4838 = vpop.f32.mrf.mxu0
      %v4839 = vadd.f32 %v4763, %v4838
      %v4840 = vpop.f32.mrf.mxu0
      %4841 = vmatprep.mubr.bf16.mxu0 0
      %4842 = vmatmul.mubr.bf16.gmra.mxu0 %v4781
      %v4843 = vpop.f32.mrf.mxu0
      %v4844 = vadd.f32 %v4763, %v4843
      %v4845 = vpop.f32.mrf.mxu0
      %v4846 = vpop.f32.mrf.mxu0
      %v4847 = vadd.f32 %v4763, %v4846
      %v4848 = vpop.f32.mrf.mxu0
      %4849 = vmatprep.mubr.bf16.mxu0 0
      %4850 = vmatmul.mubr.bf16.gmra.mxu0 %v4784
      %v4851 = vpop.f32.mrf.mxu0
      %v4852 = vadd.f32 %v4763, %v4851
      %v4853 = vpop.f32.mrf.mxu0
      %v4854 = vpop.f32.mrf.mxu0
      %v4855 = vadd.f32 %v4763, %v4854
      %v4856 = vpop.f32.mrf.mxu0
      %4857 = vmatprep.mubr.bf16.mxu0 0
      %4858 = vmatmul.mubr.bf16.gmra.mxu0 %v4787
      %v4859 = vpop.f32.mrf.mxu0
      %v4860 = vadd.f32 %v4763, %v4859
      %v4861 = vpop.f32.mrf.mxu0
      %v4862 = vpop.f32.mrf.mxu0
      %v4863 = vadd.f32 %v4763, %v4862
      %v4864 = vpop.f32.mrf.mxu0
      %4865 = vmatprep.mubr.bf16.mxu0 0
      %4866 = vmatmul.mubr.bf16.gmra.mxu0 %v4790
      %v4867 = vpop.f32.mrf.mxu0
      %v4868 = vadd.f32 %v4763, %v4867
      %v4869 = vpop.f32.mrf.mxu0
      %v4870 = vpop.f32.mrf.mxu0
      %v4871 = vadd.f32 %v4763, %v4870
      %v4872 = vpop.f32.mrf.mxu0
      %4873 = vmatprep.mubr.bf16.mxu0 0
      %4874 = vmatmul.mubr.bf16.gmra.mxu0 %v4793
      %v4875 = vpop.f32.mrf.mxu0
      %v4876 = vadd.f32 %v4763, %v4875
      %v4877 = vpop.f32.mrf.mxu0
      %v4878 = vpop.f32.mrf.mxu0
      %v4879 = vadd.f32 %v4763, %v4878
      %v4880 = vpop.f32.mrf.mxu0
      %4881 = vmatprep.mubr.bf16.mxu0 0
      %4882 = vmatmul.mubr.bf16.gmra.mxu0 %v4796
      %v4883 = vpop.f32.mrf.mxu0
      %v4884 = vadd.f32 %v4763, %v4883
      %v4885 = vpop.f32.mrf.mxu0
      %v4886 = vpop.f32.mrf.mxu0
      %v4887 = vadd.f32 %v4763, %v4886
      %v4888 = vpop.f32.mrf.mxu0
      %4889 = vmatprep.mubr.bf16.mxu0 0
      %4890 = vmatmul.mubr.bf16.gmra.mxu0 %v4799
      %v4891 = vpop.f32.mrf.mxu0
      %v4892 = vadd.f32 %v4763, %v4891
      %v4893 = vpop.f32.mrf.mxu0
      %v4894 = vpop.f32.mrf.mxu0
      %v4895 = vadd.f32 %v4763, %v4894
      %v4896 = vpop.f32.mrf.mxu0
      %4897 = vdwg.mxu0
      %4898 = vst.msk [vmem:[%s253] sm:$0xff] %vm335, %v4836
      %4899 = vst.msk [vmem:[%s253 + $0x8] sm:$0xff] %vm335, %v4839
      %4900 = vst.msk [vmem:[%s253 + $0x10] sm:$0xff] %vm335, %v4844
      %4901 = vst.msk [vmem:[%s253 + $0x18] sm:$0xff] %vm335, %v4847
      %4902 = vst.msk [vmem:[%s253 + $0x20] sm:$0xff] %vm335, %v4852
      %4903 = vst.msk [vmem:[%s253 + $0x28] sm:$0xff] %vm335, %v4855
      %4904 = vst.msk [vmem:[%s253 + $0x30] sm:$0xff] %vm335, %v4860
      %4905 = vst.msk [vmem:[%s253 + $0x38] sm:$0xff] %vm335, %v4863
      %4906 = vst.msk [vmem:[%s253 + $0x40] sm:$0xff] %vm335, %v4868
      %4907 = vst.msk [vmem:[%s253 + $0x48] sm:$0xff] %vm335, %v4871
      %4908 = vst.msk [vmem:[%s253 + $0x50] sm:$0xff] %vm335, %v4876
      %4909 = vst.msk [vmem:[%s253 + $0x58] sm:$0xff] %vm335, %v4879
      %4910 = vst.msk [vmem:[%s253 + $0x60] sm:$0xff] %vm335, %v4884
      %4911 = vst.msk [vmem:[%s253 + $0x68] sm:$0xff] %vm335, %v4887
      %4912 = vst.msk [vmem:[%s253 + $0x70] sm:$0xff] %vm335, %v4892
      %4913 = vst.msk [vmem:[%s253 + $0x78] sm:$0xff] %vm335, %v4895
      %s4914 = smul.u32 16, %s17
      %p4915 = scmp.lt.s32.totalorder %s4914, 127
      %s4916 = scalar_select %p4915, %s4914, 127
      %s4917 = smul.addr %s4916, 8
      %s4918 = scalar_lea.vmem %s6, %s4917
      // Predicated region
      $region45: #{tpu_custom_call.1} parent=43 // pred_check
        %p4919 = pneg %p166
      $region46: #{tpu_custom_call.1} parent=43 // pred_check_branch
        %4921 = sbr.rel (%p4919) target = $region48
      $region47: #{tpu_custom_call.1} parent=43 // pred_region
        %s4922 = smul.u32 16, %s17
      $region48: #{tpu_custom_call.1} parent=43 // pred_fallthru
        _
    $region44: #{tpu_custom_call.1} parent=5 // pred_fallthru
      _
    %p4923 = scmp.le.s32.totalorder 2, %s12
    // Predicated region
    $region49: #{tpu_custom_call.1} parent=5 // pred_check
      %p4924 = pneg %p4923
    $region50: #{tpu_custom_call.1} parent=5 // pred_check_branch
      %4926 = sbr.rel (%p4924) target = $region52
    $region51: #{tpu_custom_call.1} parent=5 // pred_region
      %s4927 = ssub.s32 %s12, 2
      // Predicated region
      $region53: #{tpu_custom_call.1} parent=51 // pred_check
        %p4928 = pneg %p172
      $region54: #{tpu_custom_call.1} parent=51 // pred_check_branch
        %4930 = sbr.rel (%p4928) target = $region56
      $region55: #{tpu_custom_call.1} parent=51 // pred_region
        %s4931 = smul.u32 16, %s18
        %p4932 = scmp.lt.s32.totalorder %s4931, 127
        %s4933 = scalar_select %p4932, %s4931, 127
        %s4934 = smul.addr %s4933, 8
        %s4935 = scalar_lea.vmem %s6, %s4934
      $region56: #{tpu_custom_call.1} parent=51 // pred_fallthru
        _
    $region52: #{tpu_custom_call.1} parent=5 // pred_fallthru
      _
  $region6: #{tpu_custom_call.1} parent=0 // loop_footer
    %s16 = sadd.s32 1, %s12
  $region7: #{tpu_custom_call.1} parent=0 // loop_footer_branch
    %11 = sbr.rel target = $region3
  $region8: #{tpu_custom_call.1} parent=0 // loop_exit
    _

</llo_original>
